<compile_context>
chip_gen: v7x
topology: tpu7x:2x2x1
jax: 0.10.0
libtpu: 0.0.40
codegen_flags: <defaults>
</compile_context>

<pallas_src>
import jax
import jax.numpy as jnp
from jax.experimental import pallas as pl
from jax.experimental.pallas import tpu as pltpu


# ----------------------------------------------------------------------------
# Fused Pallas kernel
# ----------------------------------------------------------------------------
def _make_snow_mask_block_kernel(H, W, C):
    HW = H * W

    def kernel(x_ref, w_ref, p_ref, o_ref, pad_ref, col_ref):
        # x_ref  : (1, H, W, C)   f32  input tile (one batch element, NHWC)
        # w_ref  : (3, 9*C, C)    bf16 stacked conv weights [mb_w1, mb_w2, snb_w]
        # p_ref  : (5, C)         f32  [mb_b1, mb_b2, snb_b, ln_gamma, ln_beta]
        # o_ref  : (1, H*W, C)    f32  output tile (accumulator written directly)
        # pad_ref: (H+2, W+2, C)  f32  VMEM halo scratch shared by all 3 convs
        # col_ref: (H*W, 9*C)     bf16 VMEM im2col staging buffer

        # Zero the halo scratch once; every stage rewrites only the interior,
        # so the 1-pixel zero border gives 'same' padding for all three convs.
        @pl.when(pl.program_id(0) == 0)
        def _():
            pad_ref[...] = jnp.zeros_like(pad_ref)

        def stage(act_hwc_f32):
            # write the current activation into the interior of the halo buffer
            pad_ref[1:H + 1, 1:W + 1, :] = act_hwc_f32

        def conv3x3(widx):
            # im2col: 9 shifted windows concatenated on the contraction axis,
            # then a single MXU matmul with K = 9*C and f32 accumulation.
            for idx in range(9):
                dy, dx = idx // 3, idx % 3
                col_ref[:, idx * C:(idx + 1) * C] = (
                    pad_ref[dy:dy + H, dx:dx + W, :]
                    .reshape(HW, C).astype(col_ref.dtype))
            return jnp.dot(col_ref[...], w_ref[widx],
                           preferred_element_type=jnp.float32)

        x_hwc = x_ref[0].astype(jnp.float32)          # (H, W, C)
        x0 = x_hwc.reshape(HW, C)                     # shortcut / residual

        # ---- MaskBlock ----
        # TODO(synk): common.MaskBlock source was not provided; approximated as
        # conv3x3 -> ReLU -> conv3x3 with a residual connection.
        stage(x_hwc)
        h = jnp.maximum(conv3x3(0) + p_ref[0], 0.0)
        stage(h.reshape(H, W, C))
        h = conv3x3(1) + p_ref[1] + x0

        # ---- LayerNorm over channel dim (eps = 1e-5), fused epilogue ----
        mean = jnp.mean(h, axis=-1, keepdims=True)
        hc = h - mean
        var = jnp.mean(hc * hc, axis=-1, keepdims=True)
        h = hc * jax.lax.rsqrt(var + 1e-5) * p_ref[3] + p_ref[4]

        # ---- conv3 + shortcut ----
        stage(h.reshape(H, W, C))
        out = conv3x3(2) + p_ref[2] + x0
        o_ref[0] = out.astype(o_ref.dtype)

    return kernel


def snow_mask_block_pallas(x_nhwc, w_stacked, p_stacked):
    """x_nhwc: (B, H, W, C) f32; w_stacked: (3, 9*C, C) bf16; p_stacked: (5, C) f32."""
    B, H, W, C = x_nhwc.shape
    kernel = _make_snow_mask_block_kernel(H, W, C)
    return pl.pallas_call(
        kernel,
        out_shape=jax.ShapeDtypeStruct((B, H * W, C), x_nhwc.dtype),
        grid=(B,),
        in_specs=[
            pl.BlockSpec((1, H, W, C), lambda b: (b, 0, 0, 0)),
            pl.BlockSpec((3, 9 * C, C), lambda b: (0, 0, 0)),   # constant block: fetched once
            pl.BlockSpec((5, C), lambda b: (0, 0)),             # constant block: fetched once
        ],
        out_specs=pl.BlockSpec((1, H * W, C), lambda b: (b, 0, 0)),
        scratch_shapes=[
            pltpu.VMEM((H + 2, W + 2, C), jnp.float32),   # halo buffer
            pltpu.VMEM((H * W, 9 * C), jnp.bfloat16),     # im2col buffer
        ],
        compiler_params=pltpu.CompilerParams(
            dimension_semantics=("parallel",),
            vmem_limit_bytes=32 * 1024 * 1024,
        ),
    )(x_nhwc, w_stacked, p_stacked)


# ----------------------------------------------------------------------------
# Parameters and forward wrapper
# ----------------------------------------------------------------------------
def init_params(embed_dim, key):
    """Deterministic synthetic parameters (HWIO conv weights, LN affine)."""
    D = embed_dim
    ks = jax.random.split(key, 6)
    s = 0.05

    def w(k):
        return (s * jax.random.normal(k, (3, 3, D, D))).astype(jnp.float32)

    def b(k):
        return (s * jax.random.normal(k, (D,))).astype(jnp.float32)

    return {
        "mb_w1": w(ks[0]), "mb_b1": b(ks[1]),
        "mb_w2": w(ks[2]), "mb_b2": b(ks[3]),
        "snb_w": w(ks[4]), "snb_b": b(ks[5]),
        "ln_g": jnp.ones((D,), jnp.float32),
        "ln_b": jnp.zeros((D,), jnp.float32),
    }


@jax.jit
def snow_mask_block_forward(x_nchw, params):
    """x_nchw: (B, embed_dim, H, W) f32 -> (B, embed_dim, H, W) f32."""
    B, C, H, W = x_nchw.shape
    x = jnp.transpose(x_nchw, (0, 2, 3, 1))           # single NCHW -> NHWC transpose

    # HWIO (3,3,C,C) -> (9*C, C): rows ordered (ky, kx, cin), matching the
    # im2col column order in the kernel. bf16 for the MXU fast path.
    w = jnp.stack([params["mb_w1"].reshape(9 * C, C),
                   params["mb_w2"].reshape(9 * C, C),
                   params["snb_w"].reshape(9 * C, C)], axis=0).astype(jnp.bfloat16)
    p = jnp.stack([params["mb_b1"], params["mb_b2"], params["snb_b"],
                   params["ln_g"], params["ln_b"]], axis=0).astype(jnp.float32)

    y = snow_mask_block_pallas(x, w, p)               # (B, H*W, C)
    return jnp.transpose(y.reshape(B, H, W, C), (0, 3, 1, 2))


# ----------------------------------------------------------------------------
# Pure-JAX f32 reference (mirrors the kernel's math) for a correctness check
# ----------------------------------------------------------------------------
def _forward_reference(x_nchw, params):
    x = jnp.transpose(x_nchw, (0, 2, 3, 1)).astype(jnp.float32)
    B, H, W, C = x.shape

    def conv(h, w, b):
        hp = jnp.pad(h, ((0, 0), (1, 1), (1, 1), (0, 0)))
        acc = jnp.zeros((B, H, W, w.shape[-1]), jnp.float32)
        for dy in range(3):
            for dx in range(3):
                acc = acc + jnp.einsum("bhwc,cd->bhwd",
                                       hp[:, dy:dy + H, dx:dx + W, :], w[dy, dx])
        return acc + b

    shortcut = x
    m = jnp.maximum(conv(x, params["mb_w1"], params["mb_b1"]), 0.0)
    m = conv(m, params["mb_w2"], params["mb_b2"]) + x
    mu = jnp.mean(m, axis=-1, keepdims=True)
    mc = m - mu
    var = jnp.mean(mc * mc, axis=-1, keepdims=True)
    m = mc * jax.lax.rsqrt(var + 1e-5) * params["ln_g"] + params["ln_b"]
    out = conv(m, params["snb_w"], params["snb_b"]) + shortcut
    return jnp.transpose(out, (0, 3, 1, 2))


if __name__ == "__main__":
    B, embed_dim, H, W = 2, 32, 16, 16

    key = jax.random.PRNGKey(0)
    k_x, k_p = jax.random.split(key)
    x = jax.random.normal(k_x, (B, embed_dim, H, W), dtype=jnp.float32)
    params = init_params(embed_dim, k_p)

    out = snow_mask_block_forward(x, params)
    jax.block_until_ready(out)
    assert out.shape == (B, embed_dim, H, W), out.shape

    # Loose tolerance: MXU operands are bf16 (f32 accumulation), reference is f32.
    ref = _forward_reference(x, params)
    max_err = float(jnp.max(jnp.abs(out - ref)))
    assert max_err < 1e-1, f"max |err| vs f32 reference = {max_err}"

    print("KERNEL_OK")
</pallas_src>

<mosaic_0001>
module attributes {stable_mosaic.version = 11 : i64} {
  func.func @kernel(%arg0: i32, %arg1: memref<1x16x16x32xf32, #tpu.memory_space<vmem>>, %arg2: memref<3x288x32xbf16, #tpu.memory_space<vmem>>, %arg3: memref<5x32xf32, #tpu.memory_space<vmem>>, %arg4: memref<1x256x32xf32, #tpu.memory_space<vmem>>, %arg5: memref<18x18x32xf32, #tpu.memory_space<vmem>>, %arg6: memref<256x288xbf16, #tpu.memory_space<vmem>>) attributes {dimension_semantics = [#tpu.dimension_semantics<parallel>], iteration_bounds = array<i64: 2>, scalar_prefetch = 0 : i64, scratch_operands = 2 : i64, tpu.core_type = #tpu.core_type<tc>, window_params = [{transform_indices = @transform_0, window_bounds = array<i64: 1, 16, 16, 32>}, {pipeline_mode = #tpu.pipeline_mode<synchronous>, transform_indices = @transform_1, window_bounds = array<i64: 3, 288, 32>}, {pipeline_mode = #tpu.pipeline_mode<synchronous>, transform_indices = @transform_2, window_bounds = array<i64: 5, 32>}, {transform_indices = @transform_3, window_bounds = array<i64: 1, 256, 32>}]} {
    %c0_i32 = arith.constant 0 : i32
    %0 = arith.cmpi eq, %arg0, %c0_i32 : i32
    %1 = arith.extui %0 : i1 to i32
    %c0_i32_0 = arith.constant 0 : i32
    %2 = arith.cmpi ne, %1, %c0_i32_0 : i32
    scf.if %2 {
      %cst_172 = arith.constant 0.000000e+00 : f32
      %179 = vector.broadcast %cst_172 : f32 to vector<18x18x32xf32>
      %c0_173 = arith.constant 0 : index
      %c0_174 = arith.constant 0 : index
      %c0_175 = arith.constant 0 : index
      %180 = vector.load %arg5[%c0_173, %c0_174, %c0_175] : memref<18x18x32xf32, #tpu.memory_space<vmem>>, vector<18x18x32xf32>
      tpu.vector_store %arg5[%c0_173, %c0_174, %c0_175], %179 {strides = array<i32>} : memref<18x18x32xf32, #tpu.memory_space<vmem>>, vector<18x18x32xf32>,
    } else {
    }
    %c0 = arith.constant 0 : index
    %c0_1 = arith.constant 0 : index
    %c0_2 = arith.constant 0 : index
    %c0_3 = arith.constant 0 : index
    %3 = vector.load %arg1[%c0, %c0_1, %c0_2, %c0_3] : memref<1x16x16x32xf32, #tpu.memory_space<vmem>>, vector<1x16x16x32xf32>
    %4 = vector.shape_cast %3 : vector<1x16x16x32xf32> to vector<16x16x32xf32>
    %5 = vector.shape_cast %4 : vector<16x16x32xf32> to vector<256x32xf32>
    %c1 = arith.constant 1 : index
    %c1_4 = arith.constant 1 : index
    %c0_5 = arith.constant 0 : index
    %6 = vector.load %arg5[%c1, %c1_4, %c0_5] : memref<18x18x32xf32, #tpu.memory_space<vmem>>, vector<16x16x32xf32>
    tpu.vector_store %arg5[%c1, %c1_4, %c0_5], %4 {strides = array<i32>} : memref<18x18x32xf32, #tpu.memory_space<vmem>>, vector<16x16x32xf32>,
    %c0_6 = arith.constant 0 : index
    %c0_7 = arith.constant 0 : index
    %c0_8 = arith.constant 0 : index
    %7 = vector.load %arg5[%c0_6, %c0_7, %c0_8] : memref<18x18x32xf32, #tpu.memory_space<vmem>>, vector<16x16x32xf32>
    %8 = vector.shape_cast %7 : vector<16x16x32xf32> to vector<256x32xf32>
    %9 = arith.truncf %8 : vector<256x32xf32> to vector<256x32xbf16>
    %c0_9 = arith.constant 0 : index
    %c0_10 = arith.constant 0 : index
    %10 = vector.load %arg6[%c0_9, %c0_10] : memref<256x288xbf16, #tpu.memory_space<vmem>>, vector<256x32xbf16>
    tpu.vector_store %arg6[%c0_9, %c0_10], %9 {strides = array<i32>} : memref<256x288xbf16, #tpu.memory_space<vmem>>, vector<256x32xbf16>,
    %c0_11 = arith.constant 0 : index
    %c1_12 = arith.constant 1 : index
    %c0_13 = arith.constant 0 : index
    %11 = vector.load %arg5[%c0_11, %c1_12, %c0_13] : memref<18x18x32xf32, #tpu.memory_space<vmem>>, vector<16x16x32xf32>
    %12 = vector.shape_cast %11 : vector<16x16x32xf32> to vector<256x32xf32>
    %13 = arith.truncf %12 : vector<256x32xf32> to vector<256x32xbf16>
    %c0_14 = arith.constant 0 : index
    %c32 = arith.constant 32 : index
    %14 = vector.load %arg6[%c0_14, %c32] : memref<256x288xbf16, #tpu.memory_space<vmem>>, vector<256x32xbf16>
    tpu.vector_store %arg6[%c0_14, %c32], %13 {strides = array<i32>} : memref<256x288xbf16, #tpu.memory_space<vmem>>, vector<256x32xbf16>,
    %c0_15 = arith.constant 0 : index
    %c2 = arith.constant 2 : index
    %c0_16 = arith.constant 0 : index
    %15 = vector.load %arg5[%c0_15, %c2, %c0_16] : memref<18x18x32xf32, #tpu.memory_space<vmem>>, vector<16x16x32xf32>
    %16 = vector.shape_cast %15 : vector<16x16x32xf32> to vector<256x32xf32>
    %17 = arith.truncf %16 : vector<256x32xf32> to vector<256x32xbf16>
    %c0_17 = arith.constant 0 : index
    %c64 = arith.constant 64 : index
    %18 = vector.load %arg6[%c0_17, %c64] : memref<256x288xbf16, #tpu.memory_space<vmem>>, vector<256x32xbf16>
    tpu.vector_store %arg6[%c0_17, %c64], %17 {strides = array<i32>} : memref<256x288xbf16, #tpu.memory_space<vmem>>, vector<256x32xbf16>,
    %c1_18 = arith.constant 1 : index
    %c0_19 = arith.constant 0 : index
    %c0_20 = arith.constant 0 : index
    %19 = vector.load %arg5[%c1_18, %c0_19, %c0_20] : memref<18x18x32xf32, #tpu.memory_space<vmem>>, vector<16x16x32xf32>
    %20 = vector.shape_cast %19 : vector<16x16x32xf32> to vector<256x32xf32>
    %21 = arith.truncf %20 : vector<256x32xf32> to vector<256x32xbf16>
    %c0_21 = arith.constant 0 : index
    %c96 = arith.constant 96 : index
    %22 = vector.load %arg6[%c0_21, %c96] : memref<256x288xbf16, #tpu.memory_space<vmem>>, vector<256x32xbf16>
    tpu.vector_store %arg6[%c0_21, %c96], %21 {strides = array<i32>} : memref<256x288xbf16, #tpu.memory_space<vmem>>, vector<256x32xbf16>,
    %c1_22 = arith.constant 1 : index
    %c1_23 = arith.constant 1 : index
    %c0_24 = arith.constant 0 : index
    %23 = vector.load %arg5[%c1_22, %c1_23, %c0_24] : memref<18x18x32xf32, #tpu.memory_space<vmem>>, vector<16x16x32xf32>
    %24 = vector.shape_cast %23 : vector<16x16x32xf32> to vector<256x32xf32>
    %25 = arith.truncf %24 : vector<256x32xf32> to vector<256x32xbf16>
    %c0_25 = arith.constant 0 : index
    %c128 = arith.constant 128 : index
    %26 = vector.load %arg6[%c0_25, %c128] : memref<256x288xbf16, #tpu.memory_space<vmem>>, vector<256x32xbf16>
    tpu.vector_store %arg6[%c0_25, %c128], %25 {strides = array<i32>} : memref<256x288xbf16, #tpu.memory_space<vmem>>, vector<256x32xbf16>,
    %c1_26 = arith.constant 1 : index
    %c2_27 = arith.constant 2 : index
    %c0_28 = arith.constant 0 : index
    %27 = vector.load %arg5[%c1_26, %c2_27, %c0_28] : memref<18x18x32xf32, #tpu.memory_space<vmem>>, vector<16x16x32xf32>
    %28 = vector.shape_cast %27 : vector<16x16x32xf32> to vector<256x32xf32>
    %29 = arith.truncf %28 : vector<256x32xf32> to vector<256x32xbf16>
    %c0_29 = arith.constant 0 : index
    %c160 = arith.constant 160 : index
    %30 = vector.load %arg6[%c0_29, %c160] : memref<256x288xbf16, #tpu.memory_space<vmem>>, vector<256x32xbf16>
    tpu.vector_store %arg6[%c0_29, %c160], %29 {strides = array<i32>} : memref<256x288xbf16, #tpu.memory_space<vmem>>, vector<256x32xbf16>,
    %c2_30 = arith.constant 2 : index
    %c0_31 = arith.constant 0 : index
    %c0_32 = arith.constant 0 : index
    %31 = vector.load %arg5[%c2_30, %c0_31, %c0_32] : memref<18x18x32xf32, #tpu.memory_space<vmem>>, vector<16x16x32xf32>
    %32 = vector.shape_cast %31 : vector<16x16x32xf32> to vector<256x32xf32>
    %33 = arith.truncf %32 : vector<256x32xf32> to vector<256x32xbf16>
    %c0_33 = arith.constant 0 : index
    %c192 = arith.constant 192 : index
    %34 = vector.load %arg6[%c0_33, %c192] : memref<256x288xbf16, #tpu.memory_space<vmem>>, vector<256x32xbf16>
    tpu.vector_store %arg6[%c0_33, %c192], %33 {strides = array<i32>} : memref<256x288xbf16, #tpu.memory_space<vmem>>, vector<256x32xbf16>,
    %c2_34 = arith.constant 2 : index
    %c1_35 = arith.constant 1 : index
    %c0_36 = arith.constant 0 : index
    %35 = vector.load %arg5[%c2_34, %c1_35, %c0_36] : memref<18x18x32xf32, #tpu.memory_space<vmem>>, vector<16x16x32xf32>
    %36 = vector.shape_cast %35 : vector<16x16x32xf32> to vector<256x32xf32>
    %37 = arith.truncf %36 : vector<256x32xf32> to vector<256x32xbf16>
    %c0_37 = arith.constant 0 : index
    %c224 = arith.constant 224 : index
    %38 = vector.load %arg6[%c0_37, %c224] : memref<256x288xbf16, #tpu.memory_space<vmem>>, vector<256x32xbf16>
    tpu.vector_store %arg6[%c0_37, %c224], %37 {strides = array<i32>} : memref<256x288xbf16, #tpu.memory_space<vmem>>, vector<256x32xbf16>,
    %c2_38 = arith.constant 2 : index
    %c2_39 = arith.constant 2 : index
    %c0_40 = arith.constant 0 : index
    %39 = vector.load %arg5[%c2_38, %c2_39, %c0_40] : memref<18x18x32xf32, #tpu.memory_space<vmem>>, vector<16x16x32xf32>
    %40 = vector.shape_cast %39 : vector<16x16x32xf32> to vector<256x32xf32>
    %41 = arith.truncf %40 : vector<256x32xf32> to vector<256x32xbf16>
    %c0_41 = arith.constant 0 : index
    %c256 = arith.constant 256 : index
    %42 = vector.load %arg6[%c0_41, %c256] : memref<256x288xbf16, #tpu.memory_space<vmem>>, vector<256x32xbf16>
    tpu.vector_store %arg6[%c0_41, %c256], %41 {strides = array<i32>} : memref<256x288xbf16, #tpu.memory_space<vmem>>, vector<256x32xbf16>,
    %c0_42 = arith.constant 0 : index
    %c0_43 = arith.constant 0 : index
    %43 = vector.load %arg6[%c0_42, %c0_43] : memref<256x288xbf16, #tpu.memory_space<vmem>>, vector<256x288xbf16>
    %c0_44 = arith.constant 0 : index
    %c0_45 = arith.constant 0 : index
    %c0_46 = arith.constant 0 : index
    %44 = vector.load %arg2[%c0_44, %c0_45, %c0_46] : memref<3x288x32xbf16, #tpu.memory_space<vmem>>, vector<1x288x32xbf16>
    %45 = vector.shape_cast %44 : vector<1x288x32xbf16> to vector<288x32xbf16>
    %cst = arith.constant dense<0.000000e+00> : vector<256x32xf32>
    %46 = tpu.matmul %43, %45, %cst {dimension_numbers = #tpu.dot_dimension_numbers<[1], [0], [0], [1], [0, 0, 1, 1], [], []>} : vector<256x288xbf16>, vector<288x32xbf16>, vector<256x32xf32> -> vector<256x32xf32>
    %c0_47 = arith.constant 0 : index
    %c0_48 = arith.constant 0 : index
    %47 = vector.load %arg3[%c0_47, %c0_48] : memref<5x32xf32, #tpu.memory_space<vmem>>, vector<1x32xf32>
    %48 = vector.shape_cast %47 : vector<1x32xf32> to vector<32xf32>
    %49 = vector.shape_cast %48 : vector<32xf32> to vector<1x32xf32>
    %50 = vector.broadcast %49 : vector<1x32xf32> to vector<256x32xf32>
    %51 = arith.addf %46, %50 : vector<256x32xf32>
    %cst_49 = arith.constant 0.000000e+00 : f32
    %52 = vector.broadcast %cst_49 : f32 to vector<256x32xf32>
    %53 = arith.maximumf %51, %52 : vector<256x32xf32>
    %54 = vector.shape_cast %53 : vector<256x32xf32> to vector<16x16x32xf32>
    %c1_50 = arith.constant 1 : index
    %c1_51 = arith.constant 1 : index
    %c0_52 = arith.constant 0 : index
    %55 = vector.load %arg5[%c1_50, %c1_51, %c0_52] : memref<18x18x32xf32, #tpu.memory_space<vmem>>, vector<16x16x32xf32>
    tpu.vector_store %arg5[%c1_50, %c1_51, %c0_52], %54 {strides = array<i32>} : memref<18x18x32xf32, #tpu.memory_space<vmem>>, vector<16x16x32xf32>,
    %c0_53 = arith.constant 0 : index
    %c0_54 = arith.constant 0 : index
    %c0_55 = arith.constant 0 : index
    %56 = vector.load %arg5[%c0_53, %c0_54, %c0_55] : memref<18x18x32xf32, #tpu.memory_space<vmem>>, vector<16x16x32xf32>
    %57 = vector.shape_cast %56 : vector<16x16x32xf32> to vector<256x32xf32>
    %58 = arith.truncf %57 : vector<256x32xf32> to vector<256x32xbf16>
    %c0_56 = arith.constant 0 : index
    %c0_57 = arith.constant 0 : index
    %59 = vector.load %arg6[%c0_56, %c0_57] : memref<256x288xbf16, #tpu.memory_space<vmem>>, vector<256x32xbf16>
    tpu.vector_store %arg6[%c0_56, %c0_57], %58 {strides = array<i32>} : memref<256x288xbf16, #tpu.memory_space<vmem>>, vector<256x32xbf16>,
    %c0_58 = arith.constant 0 : index
    %c1_59 = arith.constant 1 : index
    %c0_60 = arith.constant 0 : index
    %60 = vector.load %arg5[%c0_58, %c1_59, %c0_60] : memref<18x18x32xf32, #tpu.memory_space<vmem>>, vector<16x16x32xf32>
    %61 = vector.shape_cast %60 : vector<16x16x32xf32> to vector<256x32xf32>
    %62 = arith.truncf %61 : vector<256x32xf32> to vector<256x32xbf16>
    %c0_61 = arith.constant 0 : index
    %c32_62 = arith.constant 32 : index
    %63 = vector.load %arg6[%c0_61, %c32_62] : memref<256x288xbf16, #tpu.memory_space<vmem>>, vector<256x32xbf16>
    tpu.vector_store %arg6[%c0_61, %c32_62], %62 {strides = array<i32>} : memref<256x288xbf16, #tpu.memory_space<vmem>>, vector<256x32xbf16>,
    %c0_63 = arith.constant 0 : index
    %c2_64 = arith.constant 2 : index
    %c0_65 = arith.constant 0 : index
    %64 = vector.load %arg5[%c0_63, %c2_64, %c0_65] : memref<18x18x32xf32, #tpu.memory_space<vmem>>, vector<16x16x32xf32>
    %65 = vector.shape_cast %64 : vector<16x16x32xf32> to vector<256x32xf32>
    %66 = arith.truncf %65 : vector<256x32xf32> to vector<256x32xbf16>
    %c0_66 = arith.constant 0 : index
    %c64_67 = arith.constant 64 : index
    %67 = vector.load %arg6[%c0_66, %c64_67] : memref<256x288xbf16, #tpu.memory_space<vmem>>, vector<256x32xbf16>
    tpu.vector_store %arg6[%c0_66, %c64_67], %66 {strides = array<i32>} : memref<256x288xbf16, #tpu.memory_space<vmem>>, vector<256x32xbf16>,
    %c1_68 = arith.constant 1 : index
    %c0_69 = arith.constant 0 : index
    %c0_70 = arith.constant 0 : index
    %68 = vector.load %arg5[%c1_68, %c0_69, %c0_70] : memref<18x18x32xf32, #tpu.memory_space<vmem>>, vector<16x16x32xf32>
    %69 = vector.shape_cast %68 : vector<16x16x32xf32> to vector<256x32xf32>
    %70 = arith.truncf %69 : vector<256x32xf32> to vector<256x32xbf16>
    %c0_71 = arith.constant 0 : index
    %c96_72 = arith.constant 96 : index
    %71 = vector.load %arg6[%c0_71, %c96_72] : memref<256x288xbf16, #tpu.memory_space<vmem>>, vector<256x32xbf16>
    tpu.vector_store %arg6[%c0_71, %c96_72], %70 {strides = array<i32>} : memref<256x288xbf16, #tpu.memory_space<vmem>>, vector<256x32xbf16>,
    %c1_73 = arith.constant 1 : index
    %c1_74 = arith.constant 1 : index
    %c0_75 = arith.constant 0 : index
    %72 = vector.load %arg5[%c1_73, %c1_74, %c0_75] : memref<18x18x32xf32, #tpu.memory_space<vmem>>, vector<16x16x32xf32>
    %73 = vector.shape_cast %72 : vector<16x16x32xf32> to vector<256x32xf32>
    %74 = arith.truncf %73 : vector<256x32xf32> to vector<256x32xbf16>
    %c0_76 = arith.constant 0 : index
    %c128_77 = arith.constant 128 : index
    %75 = vector.load %arg6[%c0_76, %c128_77] : memref<256x288xbf16, #tpu.memory_space<vmem>>, vector<256x32xbf16>
    tpu.vector_store %arg6[%c0_76, %c128_77], %74 {strides = array<i32>} : memref<256x288xbf16, #tpu.memory_space<vmem>>, vector<256x32xbf16>,
    %c1_78 = arith.constant 1 : index
    %c2_79 = arith.constant 2 : index
    %c0_80 = arith.constant 0 : index
    %76 = vector.load %arg5[%c1_78, %c2_79, %c0_80] : memref<18x18x32xf32, #tpu.memory_space<vmem>>, vector<16x16x32xf32>
    %77 = vector.shape_cast %76 : vector<16x16x32xf32> to vector<256x32xf32>
    %78 = arith.truncf %77 : vector<256x32xf32> to vector<256x32xbf16>
    %c0_81 = arith.constant 0 : index
    %c160_82 = arith.constant 160 : index
    %79 = vector.load %arg6[%c0_81, %c160_82] : memref<256x288xbf16, #tpu.memory_space<vmem>>, vector<256x32xbf16>
    tpu.vector_store %arg6[%c0_81, %c160_82], %78 {strides = array<i32>} : memref<256x288xbf16, #tpu.memory_space<vmem>>, vector<256x32xbf16>,
    %c2_83 = arith.constant 2 : index
    %c0_84 = arith.constant 0 : index
    %c0_85 = arith.constant 0 : index
    %80 = vector.load %arg5[%c2_83, %c0_84, %c0_85] : memref<18x18x32xf32, #tpu.memory_space<vmem>>, vector<16x16x32xf32>
    %81 = vector.shape_cast %80 : vector<16x16x32xf32> to vector<256x32xf32>
    %82 = arith.truncf %81 : vector<256x32xf32> to vector<256x32xbf16>
    %c0_86 = arith.constant 0 : index
    %c192_87 = arith.constant 192 : index
    %83 = vector.load %arg6[%c0_86, %c192_87] : memref<256x288xbf16, #tpu.memory_space<vmem>>, vector<256x32xbf16>
    tpu.vector_store %arg6[%c0_86, %c192_87], %82 {strides = array<i32>} : memref<256x288xbf16, #tpu.memory_space<vmem>>, vector<256x32xbf16>,
    %c2_88 = arith.constant 2 : index
    %c1_89 = arith.constant 1 : index
    %c0_90 = arith.constant 0 : index
    %84 = vector.load %arg5[%c2_88, %c1_89, %c0_90] : memref<18x18x32xf32, #tpu.memory_space<vmem>>, vector<16x16x32xf32>
    %85 = vector.shape_cast %84 : vector<16x16x32xf32> to vector<256x32xf32>
    %86 = arith.truncf %85 : vector<256x32xf32> to vector<256x32xbf16>
    %c0_91 = arith.constant 0 : index
    %c224_92 = arith.constant 224 : index
    %87 = vector.load %arg6[%c0_91, %c224_92] : memref<256x288xbf16, #tpu.memory_space<vmem>>, vector<256x32xbf16>
    tpu.vector_store %arg6[%c0_91, %c224_92], %86 {strides = array<i32>} : memref<256x288xbf16, #tpu.memory_space<vmem>>, vector<256x32xbf16>,
    %c2_93 = arith.constant 2 : index
    %c2_94 = arith.constant 2 : index
    %c0_95 = arith.constant 0 : index
    %88 = vector.load %arg5[%c2_93, %c2_94, %c0_95] : memref<18x18x32xf32, #tpu.memory_space<vmem>>, vector<16x16x32xf32>
    %89 = vector.shape_cast %88 : vector<16x16x32xf32> to vector<256x32xf32>
    %90 = arith.truncf %89 : vector<256x32xf32> to vector<256x32xbf16>
    %c0_96 = arith.constant 0 : index
    %c256_97 = arith.constant 256 : index
    %91 = vector.load %arg6[%c0_96, %c256_97] : memref<256x288xbf16, #tpu.memory_space<vmem>>, vector<256x32xbf16>
    tpu.vector_store %arg6[%c0_96, %c256_97], %90 {strides = array<i32>} : memref<256x288xbf16, #tpu.memory_space<vmem>>, vector<256x32xbf16>,
    %c0_98 = arith.constant 0 : index
    %c0_99 = arith.constant 0 : index
    %92 = vector.load %arg6[%c0_98, %c0_99] : memref<256x288xbf16, #tpu.memory_space<vmem>>, vector<256x288xbf16>
    %c1_100 = arith.constant 1 : index
    %c0_101 = arith.constant 0 : index
    %c0_102 = arith.constant 0 : index
    %93 = vector.load %arg2[%c1_100, %c0_101, %c0_102] : memref<3x288x32xbf16, #tpu.memory_space<vmem>>, vector<1x288x32xbf16>
    %94 = vector.shape_cast %93 : vector<1x288x32xbf16> to vector<288x32xbf16>
    %cst_103 = arith.constant dense<0.000000e+00> : vector<256x32xf32>
    %95 = tpu.matmul %92, %94, %cst_103 {dimension_numbers = #tpu.dot_dimension_numbers<[1], [0], [0], [1], [0, 0, 1, 1], [], []>} : vector<256x288xbf16>, vector<288x32xbf16>, vector<256x32xf32> -> vector<256x32xf32>
    %c1_104 = arith.constant 1 : index
    %c0_105 = arith.constant 0 : index
    %96 = vector.load %arg3[%c1_104, %c0_105] : memref<5x32xf32, #tpu.memory_space<vmem>>, vector<1x32xf32>
    %97 = vector.shape_cast %96 : vector<1x32xf32> to vector<32xf32>
    %98 = vector.shape_cast %97 : vector<32xf32> to vector<1x32xf32>
    %99 = vector.broadcast %98 : vector<1x32xf32> to vector<256x32xf32>
    %100 = arith.addf %95, %99 : vector<256x32xf32>
    %101 = arith.addf %100, %5 : vector<256x32xf32>
    %cst_106 = arith.constant dense<0.000000e+00> : vector<256xf32>
    %102 = vector.multi_reduction <add>, %101, %cst_106 [1] : vector<256x32xf32> to vector<256xf32>
    %103 = vector.shape_cast %102 : vector<256xf32> to vector<256x1xf32>
    %cst_107 = arith.constant 3.200000e+01 : f32
    %104 = vector.broadcast %cst_107 : f32 to vector<256x1xf32>
    %105 = arith.divf %103, %104 : vector<256x1xf32>
    %106 = vector.broadcast %105 : vector<256x1xf32> to vector<256x32xf32>
    %107 = arith.subf %101, %106 : vector<256x32xf32>
    %108 = arith.mulf %107, %107 : vector<256x32xf32>
    %cst_108 = arith.constant dense<0.000000e+00> : vector<256xf32>
    %109 = vector.multi_reduction <add>, %108, %cst_108 [1] : vector<256x32xf32> to vector<256xf32>
    %110 = vector.shape_cast %109 : vector<256xf32> to vector<256x1xf32>
    %cst_109 = arith.constant 3.200000e+01 : f32
    %111 = vector.broadcast %cst_109 : f32 to vector<256x1xf32>
    %112 = arith.divf %110, %111 : vector<256x1xf32>
    %cst_110 = arith.constant 9.99999974E-6 : f32
    %113 = vector.broadcast %cst_110 : f32 to vector<256x1xf32>
    %114 = arith.addf %112, %113 : vector<256x1xf32>
    %115 = math.rsqrt %114 : vector<256x1xf32>
    %116 = vector.broadcast %115 : vector<256x1xf32> to vector<256x32xf32>
    %117 = arith.mulf %107, %116 : vector<256x32xf32>
    %c3 = arith.constant 3 : index
    %c0_111 = arith.constant 0 : index
    %118 = vector.load %arg3[%c3, %c0_111] : memref<5x32xf32, #tpu.memory_space<vmem>>, vector<1x32xf32>
    %119 = vector.shape_cast %118 : vector<1x32xf32> to vector<32xf32>
    %120 = vector.shape_cast %119 : vector<32xf32> to vector<1x32xf32>
    %121 = vector.broadcast %120 : vector<1x32xf32> to vector<256x32xf32>
    %122 = arith.mulf %117, %121 : vector<256x32xf32>
    %c4 = arith.constant 4 : index
    %c0_112 = arith.constant 0 : index
    %123 = vector.load %arg3[%c4, %c0_112] : memref<5x32xf32, #tpu.memory_space<vmem>>, vector<1x32xf32>
    %124 = vector.shape_cast %123 : vector<1x32xf32> to vector<32xf32>
    %125 = vector.shape_cast %124 : vector<32xf32> to vector<1x32xf32>
    %126 = vector.broadcast %125 : vector<1x32xf32> to vector<256x32xf32>
    %127 = arith.addf %122, %126 : vector<256x32xf32>
    %128 = vector.shape_cast %127 : vector<256x32xf32> to vector<16x16x32xf32>
    %c1_113 = arith.constant 1 : index
    %c1_114 = arith.constant 1 : index
    %c0_115 = arith.constant 0 : index
    %129 = vector.load %arg5[%c1_113, %c1_114, %c0_115] : memref<18x18x32xf32, #tpu.memory_space<vmem>>, vector<16x16x32xf32>
    tpu.vector_store %arg5[%c1_113, %c1_114, %c0_115], %128 {strides = array<i32>} : memref<18x18x32xf32, #tpu.memory_space<vmem>>, vector<16x16x32xf32>,
    %c0_116 = arith.constant 0 : index
    %c0_117 = arith.constant 0 : index
    %c0_118 = arith.constant 0 : index
    %130 = vector.load %arg5[%c0_116, %c0_117, %c0_118] : memref<18x18x32xf32, #tpu.memory_space<vmem>>, vector<16x16x32xf32>
    %131 = vector.shape_cast %130 : vector<16x16x32xf32> to vector<256x32xf32>
    %132 = arith.truncf %131 : vector<256x32xf32> to vector<256x32xbf16>
    %c0_119 = arith.constant 0 : index
    %c0_120 = arith.constant 0 : index
    %133 = vector.load %arg6[%c0_119, %c0_120] : memref<256x288xbf16, #tpu.memory_space<vmem>>, vector<256x32xbf16>
    tpu.vector_store %arg6[%c0_119, %c0_120], %132 {strides = array<i32>} : memref<256x288xbf16, #tpu.memory_space<vmem>>, vector<256x32xbf16>,
    %c0_121 = arith.constant 0 : index
    %c1_122 = arith.constant 1 : index
    %c0_123 = arith.constant 0 : index
    %134 = vector.load %arg5[%c0_121, %c1_122, %c0_123] : memref<18x18x32xf32, #tpu.memory_space<vmem>>, vector<16x16x32xf32>
    %135 = vector.shape_cast %134 : vector<16x16x32xf32> to vector<256x32xf32>
    %136 = arith.truncf %135 : vector<256x32xf32> to vector<256x32xbf16>
    %c0_124 = arith.constant 0 : index
    %c32_125 = arith.constant 32 : index
    %137 = vector.load %arg6[%c0_124, %c32_125] : memref<256x288xbf16, #tpu.memory_space<vmem>>, vector<256x32xbf16>
    tpu.vector_store %arg6[%c0_124, %c32_125], %136 {strides = array<i32>} : memref<256x288xbf16, #tpu.memory_space<vmem>>, vector<256x32xbf16>,
    %c0_126 = arith.constant 0 : index
    %c2_127 = arith.constant 2 : index
    %c0_128 = arith.constant 0 : index
    %138 = vector.load %arg5[%c0_126, %c2_127, %c0_128] : memref<18x18x32xf32, #tpu.memory_space<vmem>>, vector<16x16x32xf32>
    %139 = vector.shape_cast %138 : vector<16x16x32xf32> to vector<256x32xf32>
    %140 = arith.truncf %139 : vector<256x32xf32> to vector<256x32xbf16>
    %c0_129 = arith.constant 0 : index
    %c64_130 = arith.constant 64 : index
    %141 = vector.load %arg6[%c0_129, %c64_130] : memref<256x288xbf16, #tpu.memory_space<vmem>>, vector<256x32xbf16>
    tpu.vector_store %arg6[%c0_129, %c64_130], %140 {strides = array<i32>} : memref<256x288xbf16, #tpu.memory_space<vmem>>, vector<256x32xbf16>,
    %c1_131 = arith.constant 1 : index
    %c0_132 = arith.constant 0 : index
    %c0_133 = arith.constant 0 : index
    %142 = vector.load %arg5[%c1_131, %c0_132, %c0_133] : memref<18x18x32xf32, #tpu.memory_space<vmem>>, vector<16x16x32xf32>
    %143 = vector.shape_cast %142 : vector<16x16x32xf32> to vector<256x32xf32>
    %144 = arith.truncf %143 : vector<256x32xf32> to vector<256x32xbf16>
    %c0_134 = arith.constant 0 : index
    %c96_135 = arith.constant 96 : index
    %145 = vector.load %arg6[%c0_134, %c96_135] : memref<256x288xbf16, #tpu.memory_space<vmem>>, vector<256x32xbf16>
    tpu.vector_store %arg6[%c0_134, %c96_135], %144 {strides = array<i32>} : memref<256x288xbf16, #tpu.memory_space<vmem>>, vector<256x32xbf16>,
    %c1_136 = arith.constant 1 : index
    %c1_137 = arith.constant 1 : index
    %c0_138 = arith.constant 0 : index
    %146 = vector.load %arg5[%c1_136, %c1_137, %c0_138] : memref<18x18x32xf32, #tpu.memory_space<vmem>>, vector<16x16x32xf32>
    %147 = vector.shape_cast %146 : vector<16x16x32xf32> to vector<256x32xf32>
    %148 = arith.truncf %147 : vector<256x32xf32> to vector<256x32xbf16>
    %c0_139 = arith.constant 0 : index
    %c128_140 = arith.constant 128 : index
    %149 = vector.load %arg6[%c0_139, %c128_140] : memref<256x288xbf16, #tpu.memory_space<vmem>>, vector<256x32xbf16>
    tpu.vector_store %arg6[%c0_139, %c128_140], %148 {strides = array<i32>} : memref<256x288xbf16, #tpu.memory_space<vmem>>, vector<256x32xbf16>,
    %c1_141 = arith.constant 1 : index
    %c2_142 = arith.constant 2 : index
    %c0_143 = arith.constant 0 : index
    %150 = vector.load %arg5[%c1_141, %c2_142, %c0_143] : memref<18x18x32xf32, #tpu.memory_space<vmem>>, vector<16x16x32xf32>
    %151 = vector.shape_cast %150 : vector<16x16x32xf32> to vector<256x32xf32>
    %152 = arith.truncf %151 : vector<256x32xf32> to vector<256x32xbf16>
    %c0_144 = arith.constant 0 : index
    %c160_145 = arith.constant 160 : index
    %153 = vector.load %arg6[%c0_144, %c160_145] : memref<256x288xbf16, #tpu.memory_space<vmem>>, vector<256x32xbf16>
    tpu.vector_store %arg6[%c0_144, %c160_145], %152 {strides = array<i32>} : memref<256x288xbf16, #tpu.memory_space<vmem>>, vector<256x32xbf16>,
    %c2_146 = arith.constant 2 : index
    %c0_147 = arith.constant 0 : index
    %c0_148 = arith.constant 0 : index
    %154 = vector.load %arg5[%c2_146, %c0_147, %c0_148] : memref<18x18x32xf32, #tpu.memory_space<vmem>>, vector<16x16x32xf32>
    %155 = vector.shape_cast %154 : vector<16x16x32xf32> to vector<256x32xf32>
    %156 = arith.truncf %155 : vector<256x32xf32> to vector<256x32xbf16>
    %c0_149 = arith.constant 0 : index
    %c192_150 = arith.constant 192 : index
    %157 = vector.load %arg6[%c0_149, %c192_150] : memref<256x288xbf16, #tpu.memory_space<vmem>>, vector<256x32xbf16>
    tpu.vector_store %arg6[%c0_149, %c192_150], %156 {strides = array<i32>} : memref<256x288xbf16, #tpu.memory_space<vmem>>, vector<256x32xbf16>,
    %c2_151 = arith.constant 2 : index
    %c1_152 = arith.constant 1 : index
    %c0_153 = arith.constant 0 : index
    %158 = vector.load %arg5[%c2_151, %c1_152, %c0_153] : memref<18x18x32xf32, #tpu.memory_space<vmem>>, vector<16x16x32xf32>
    %159 = vector.shape_cast %158 : vector<16x16x32xf32> to vector<256x32xf32>
    %160 = arith.truncf %159 : vector<256x32xf32> to vector<256x32xbf16>
    %c0_154 = arith.constant 0 : index
    %c224_155 = arith.constant 224 : index
    %161 = vector.load %arg6[%c0_154, %c224_155] : memref<256x288xbf16, #tpu.memory_space<vmem>>, vector<256x32xbf16>
    tpu.vector_store %arg6[%c0_154, %c224_155], %160 {strides = array<i32>} : memref<256x288xbf16, #tpu.memory_space<vmem>>, vector<256x32xbf16>,
    %c2_156 = arith.constant 2 : index
    %c2_157 = arith.constant 2 : index
    %c0_158 = arith.constant 0 : index
    %162 = vector.load %arg5[%c2_156, %c2_157, %c0_158] : memref<18x18x32xf32, #tpu.memory_space<vmem>>, vector<16x16x32xf32>
    %163 = vector.shape_cast %162 : vector<16x16x32xf32> to vector<256x32xf32>
    %164 = arith.truncf %163 : vector<256x32xf32> to vector<256x32xbf16>
    %c0_159 = arith.constant 0 : index
    %c256_160 = arith.constant 256 : index
    %165 = vector.load %arg6[%c0_159, %c256_160] : memref<256x288xbf16, #tpu.memory_space<vmem>>, vector<256x32xbf16>
    tpu.vector_store %arg6[%c0_159, %c256_160], %164 {strides = array<i32>} : memref<256x288xbf16, #tpu.memory_space<vmem>>, vector<256x32xbf16>,
    %c0_161 = arith.constant 0 : index
    %c0_162 = arith.constant 0 : index
    %166 = vector.load %arg6[%c0_161, %c0_162] : memref<256x288xbf16, #tpu.memory_space<vmem>>, vector<256x288xbf16>
    %c2_163 = arith.constant 2 : index
    %c0_164 = arith.constant 0 : index
    %c0_165 = arith.constant 0 : index
    %167 = vector.load %arg2[%c2_163, %c0_164, %c0_165] : memref<3x288x32xbf16, #tpu.memory_space<vmem>>, vector<1x288x32xbf16>
    %168 = vector.shape_cast %167 : vector<1x288x32xbf16> to vector<288x32xbf16>
    %cst_166 = arith.constant dense<0.000000e+00> : vector<256x32xf32>
    %169 = tpu.matmul %166, %168, %cst_166 {dimension_numbers = #tpu.dot_dimension_numbers<[1], [0], [0], [1], [0, 0, 1, 1], [], []>} : vector<256x288xbf16>, vector<288x32xbf16>, vector<256x32xf32> -> vector<256x32xf32>
    %c2_167 = arith.constant 2 : index
    %c0_168 = arith.constant 0 : index
    %170 = vector.load %arg3[%c2_167, %c0_168] : memref<5x32xf32, #tpu.memory_space<vmem>>, vector<1x32xf32>
    %171 = vector.shape_cast %170 : vector<1x32xf32> to vector<32xf32>
    %172 = vector.shape_cast %171 : vector<32xf32> to vector<1x32xf32>
    %173 = vector.broadcast %172 : vector<1x32xf32> to vector<256x32xf32>
    %174 = arith.addf %169, %173 : vector<256x32xf32>
    %175 = arith.addf %174, %5 : vector<256x32xf32>
    %c0_169 = arith.constant 0 : index
    %c0_170 = arith.constant 0 : index
    %c0_171 = arith.constant 0 : index
    %176 = vector.load %arg4[%c0_169, %c0_170, %c0_171] : memref<1x256x32xf32, #tpu.memory_space<vmem>>, vector<1x256x32xf32>
    %177 = vector.shape_cast %176 : vector<1x256x32xf32> to vector<256x32xf32>
    %178 = vector.shape_cast %175 : vector<256x32xf32> to vector<1x256x32xf32>
    tpu.vector_store %arg4[%c0_169, %c0_170, %c0_171], %178 {strides = array<i32>} : memref<1x256x32xf32, #tpu.memory_space<vmem>>, vector<1x256x32xf32>,
    return
  }
  func.func @transform_0(%arg0: i32) -> (i32, i32, i32, i32) {
    %c0_i32 = arith.constant 0 : i32
    %c0_i32_0 = arith.constant 0 : i32
    %c0_i32_1 = arith.constant 0 : i32
    %c0_i32_2 = arith.constant 0 : i32
    return %arg0, %c0_i32, %c0_i32_0, %c0_i32_1 : i32, i32, i32, i32
  }
  func.func @transform_1(%arg0: i32) -> (i32, i32, i32) {
    %c0_i32 = arith.constant 0 : i32
    %c0_i32_0 = arith.constant 0 : i32
    %c0_i32_1 = arith.constant 0 : i32
    %c0_i32_2 = arith.constant 0 : i32
    return %c0_i32, %c0_i32_0, %c0_i32_1 : i32, i32, i32
  }
  func.func @transform_2(%arg0: i32) -> (i32, i32) {
    %c0_i32 = arith.constant 0 : i32
    %c0_i32_0 = arith.constant 0 : i32
    %c0_i32_1 = arith.constant 0 : i32
    return %c0_i32, %c0_i32_0 : i32, i32
  }
  func.func @transform_3(%arg0: i32) -> (i32, i32, i32) {
    %c0_i32 = arith.constant 0 : i32
    %c0_i32_0 = arith.constant 0 : i32
    %c0_i32_1 = arith.constant 0 : i32
    return %arg0, %c0_i32, %c0_i32_0 : i32, i32, i32
  }
}

</mosaic_0001>

<llo_original>
// kernel: snow_mask_block_forward.1
$region0: #{snow_mask_block_forward.1}
  #allocation0 [shape = 'u32[]', space=smem, size = 0x4, offset = 0x4, fixed_abs, tag = 'smem constant byte address 0x4 - core index']
  #allocation1 [shape = 'u32[144,128]{1,0:T(1,128)}', space=vmem, size = 0x12000, scoped, tag = 'internal scratch']
  #allocation2 [shape = 'f32[18,18,32]{2,1,0:T(8,128)}', space=vmem, size = 0x36000, scoped, tag = 'scratch operand']
  #allocation3 [shape = 'bf16[256,288]{1,0:T(16,128)(2,1)}', space=vmem, size = 0x30000, scoped, tag = 'scratch operand']
  %s0 = inlined_call_operand.vmem [shape: f32[2,16,16,32], index: 0, kind: input, shape index: {}]
  %s1 = inlined_call_operand.vmem [shape: bf16[3,288,32], index: 1, kind: input, shape index: {}]
  %s2 = inlined_call_operand.vmem [shape: f32[5,32], index: 2, kind: input, shape index: {}]
  %s3 = inlined_call_operand.hbm [shape: f32[2,256,32], index: 3, kind: output, shape index: {}]
  %s4 = sld [smem:[#allocation0]]
  $region49: #{snow_mask_block_forward.1} parent=0
    _
  %s6 = ssub.s32 1, %s4
  %s7 = scalar_select 0, %s6, %s4
  $region1: #{snow_mask_block_forward.1} parent=0
    #allocation4 [shape = 'u8[262144]{0}', space=vmem, size = 0x40000, scoped, tag = 'output window, operand 0']
    #allocation5 [shape = 's32[2]{0}', space=sflag, size = 0x8, scoped, tag = 'scoped memory for snow_mask_block_forward.1']
    %8 = vsyncpa [#allocation5], 0
    %s9 = scalar_lea.sflag [#allocation5], 1
    %10 = vsyncpa %s9, 0
    loop: start=0, step=1, limit=4
    $region2: #{snow_mask_block_forward.1} parent=1 // loop_pre_header
      _
    $region3: #{snow_mask_block_forward.1} parent=1 // loop_header
      %s12 = sphi 0, %s16
      %p13 = scmp.ge.s32.totalorder %s12, 4
      %s22 = sphi 0, %s24
      %s25 = sphi 0, %s22
      %s26 = sphi 0, %s25
      %s42 = sphi 0, %s26
      %s46 = sphi 0, %s46
      %s48 = sphi 0, %s46
      %s49 = sphi 0, %s48
      %s63 = sphi 0, %s49
      %s67 = sphi 0, %s67
      %s69 = sphi 0, %s67
      %s70 = sphi 0, %s69
      %s84 = sphi 0, %s70
      %s90 = sphi 0, %s92
      %s93 = sphi 0, %s90
      %s94 = sphi 0, %s93
      %s110 = sphi 0, %s94
    $region4: #{snow_mask_block_forward.1} parent=1 // loop_header_branch
      %15 = sbr.rel (%p13) target = $region8
    $region5: #{snow_mask_block_forward.1} parent=1 // loop_body
      %s17 = ssub.s32 %s12, 1
      %s18 = ssub.s32 %s12, 2
      %s19 = sadd.s32 %s12, 1
      %s20 = ssub.s32 %s12, %s19
      %p21 = scmp.eq.s32.totalorder %s20, 0
      %s23 = sadd.s32 %s22, 1
      %s24 = scalar_select %p21, %s22, %s23
      %p27 = pneg %p21
      %p28 = scmp.eq.s32.totalorder %s12, 1
      %p29 = por %p27, %p28
      %p30 = scmp.ne.s32.totalorder %s22, %s25
      %p31 = scmp.eq.s32.totalorder %s12, 0
      %p32 = por %p30, %p31
      %p33 = scmp.ne.s32.totalorder %s22, %s25
      %p34 = scmp.eq.s32.totalorder %s17, 1
      %p35 = por %p33, %p34
      %p36 = scmp.ne.s32.totalorder %s25, %s26
      %p37 = scmp.eq.s32.totalorder %s17, 0
      %p38 = por %p36, %p37
      %p39 = scmp.ne.s32.totalorder %s25, %s26
      %p40 = scmp.eq.s32.totalorder %s18, 1
      %p41 = por %p39, %p40
      %p43 = scmp.ne.s32.totalorder %s26, %s42
      %p44 = scmp.eq.s32.totalorder %s18, 0
      %p45 = por %p43, %p44
      %s47 = sadd.s32 %s46, 1
      %p50 = scmp.eq.s32.totalorder %s12, 1
      %p51 = scmp.ne.s32.totalorder %s46, %s48
      %p52 = scmp.eq.s32.totalorder %s12, 0
      %p53 = por %p51, %p52
      %p54 = scmp.ne.s32.totalorder %s46, %s48
      %p55 = scmp.eq.s32.totalorder %s17, 1
      %p56 = por %p54, %p55
      %p57 = scmp.ne.s32.totalorder %s48, %s49
      %p58 = scmp.eq.s32.totalorder %s17, 0
      %p59 = por %p57, %p58
      %p60 = scmp.ne.s32.totalorder %s48, %s49
      %p61 = scmp.eq.s32.totalorder %s18, 1
      %p62 = por %p60, %p61
      %p64 = scmp.ne.s32.totalorder %s49, %s63
      %p65 = scmp.eq.s32.totalorder %s18, 0
      %p66 = por %p64, %p65
      %s68 = sadd.s32 %s67, 1
      %p71 = scmp.eq.s32.totalorder %s12, 1
      %p72 = scmp.ne.s32.totalorder %s67, %s69
      %p73 = scmp.eq.s32.totalorder %s12, 0
      %p74 = por %p72, %p73
      %p75 = scmp.ne.s32.totalorder %s67, %s69
      %p76 = scmp.eq.s32.totalorder %s17, 1
      %p77 = por %p75, %p76
      %p78 = scmp.ne.s32.totalorder %s69, %s70
      %p79 = scmp.eq.s32.totalorder %s17, 0
      %p80 = por %p78, %p79
      %p81 = scmp.ne.s32.totalorder %s69, %s70
      %p82 = scmp.eq.s32.totalorder %s18, 1
      %p83 = por %p81, %p82
      %p85 = scmp.ne.s32.totalorder %s70, %s84
      %p86 = scmp.eq.s32.totalorder %s18, 0
      %p87 = por %p85, %p86
      %s88 = ssub.s32 %s12, %s19
      %p89 = scmp.eq.s32.totalorder %s88, 0
      %s91 = sadd.s32 %s90, 1
      %s92 = scalar_select %p89, %s90, %s91
      %p95 = pneg %p89
      %p96 = scmp.eq.s32.totalorder %s12, 1
      %p97 = por %p95, %p96
      %p98 = scmp.ne.s32.totalorder %s90, %s93
      %p99 = scmp.eq.s32.totalorder %s12, 0
      %p100 = por %p98, %p99
      %p101 = scmp.ne.s32.totalorder %s90, %s93
      %p102 = scmp.eq.s32.totalorder %s17, 1
      %p103 = por %p101, %p102
      %p104 = scmp.ne.s32.totalorder %s93, %s94
      %p105 = scmp.eq.s32.totalorder %s17, 0
      %p106 = por %p104, %p105
      %p107 = scmp.ne.s32.totalorder %s93, %s94
      %p108 = scmp.eq.s32.totalorder %s18, 1
      %p109 = por %p107, %p108
      %p111 = scmp.ne.s32.totalorder %s94, %s110
      %p112 = scmp.eq.s32.totalorder %s18, 0
      %p113 = por %p111, %p112
      %p114 = scmp.le.s32.totalorder 1, %s12
      %p115 = scmp.lt.s32.totalorder %s12, 3
      %p116 = pnand %p114, %p115
      %p117 = pneg %p116
      // Predicated region
      $region9: #{snow_mask_block_forward.1} parent=5 // pred_check
        _
      $region10: #{snow_mask_block_forward.1} parent=5 // pred_check_branch
        %119 = sbr.rel (%p116) target = $region12
      $region11: #{snow_mask_block_forward.1} parent=5 // pred_region
        %s120 = ssub.s32 %s12, 1
        // Predicated region
        $region13: #{snow_mask_block_forward.1} parent=11 // pred_check
          %p121 = pneg %p59
        $region14: #{snow_mask_block_forward.1} parent=11 // pred_check_branch
          %123 = sbr.rel (%p121) target = $region16
        $region15: #{snow_mask_block_forward.1} parent=11 // pred_region
          _
        $region16: #{snow_mask_block_forward.1} parent=11 // pred_fallthru
          _
        // Predicated region
        $region17: #{snow_mask_block_forward.1} parent=11 // pred_check
          %p124 = pneg %p80
        $region18: #{snow_mask_block_forward.1} parent=11 // pred_check_branch
          %126 = sbr.rel (%p124) target = $region20
        $region19: #{snow_mask_block_forward.1} parent=11 // pred_region
          _
        $region20: #{snow_mask_block_forward.1} parent=11 // pred_fallthru
          _
      $region12: #{snow_mask_block_forward.1} parent=5 // pred_fallthru
        _
      %p127 = scmp.lt.s32.totalorder %s12, 2
      // Predicated region
      $region21: #{snow_mask_block_forward.1} parent=5 // pred_check
        %p128 = pneg %p127
      $region22: #{snow_mask_block_forward.1} parent=5 // pred_check_branch
        %130 = sbr.rel (%p128) target = $region24
      $region23: #{snow_mask_block_forward.1} parent=5 // pred_region
        // Predicated region
        $region25: #{snow_mask_block_forward.1} parent=23 // pred_check
          %p131 = pneg %p32
        $region26: #{snow_mask_block_forward.1} parent=23 // pred_check_branch
          %133 = sbr.rel (%p131) target = $region28
        $region27: #{snow_mask_block_forward.1} parent=23 // pred_region
          %p134 = scmp.lt.s32.totalorder %s12, 1
          %s135 = scalar_select %p134, %s12, 1
          %s136 = smul.addr %s135, 32
          %s137 = smul.addr %s136, 8
          %s138 = scalar_lea.vmem %s0, %s137
        $region28: #{snow_mask_block_forward.1} parent=23 // pred_fallthru
          _
      $region24: #{snow_mask_block_forward.1} parent=5 // pred_fallthru
        _
      %p139 = scmp.le.s32.totalorder 1, %s12
      %p140 = scmp.lt.s32.totalorder %s12, 3
      %p141 = pnand %p139, %p140
      %p142 = pneg %p141
      // Predicated region
      $region29: #{snow_mask_block_forward.1} parent=5 // pred_check
        _
      $region30: #{snow_mask_block_forward.1} parent=5 // pred_check_branch
        %144 = sbr.rel (%p141) target = $region32
      $region31: #{snow_mask_block_forward.1} parent=5 // pred_region
        %s145 = ssub.s32 %s12, 1
        %p146 = scmp.lt.s32.totalorder %s17, 1
        %s147 = scalar_select %p146, %s17, 1
        %s148 = smul.addr %s147, 32
        %s149 = smul.addr %s148, 8
        %s150 = scalar_lea.vmem %s0, %s149
        %p151 = pneg %p38
        %p152 = pneg %p35
        %p153 = pneg %p59
        %p154 = pneg %p56
        %p155 = pneg %p80
        %p156 = pneg %p77
        %p157 = pneg %p106
        %p158 = pneg %p103
        %s159 = sand.u32 %s93, 1
        %s160 = scalar_lea.sflag [#allocation5], %s159
        %s161 = sand.u32 %s93, 1
        %s162 = smul.addr %s161, 256
        %s163 = scalar_lea.vmem [#allocation4], %s162
        %p164 = scmp.lt.s32.totalorder %s17, 1
        %s165 = scalar_select %p164, %s17, 1
        %s166 = smul.addr %s165, 32
        %s167 = smul.addr %s166, 8
        %s168 = scalar_lea.vmem %s0, %s167
        %p170 = scmp.eq.s32.totalorder %s17, 0
        // Predicated region
        $region33: #{snow_mask_block_forward.1} parent=31 // pred_check
          %p171 = pneg %p170
        $region34: #{snow_mask_block_forward.1} parent=31 // pred_check_branch
          %173 = sbr.rel (%p171) target = $region36
        $region35: #{snow_mask_block_forward.1} parent=31 // pred_region
          %vm174 = vcmask 261120
          %175 = vst.msk [vmem:[#allocation2] sm:$0xff] %vm174, 0.0
          %176 = vst.msk [vmem:[#allocation2 + $0x8] sm:$0xff] %vm174, 0.0
          %vm177 = vcmask 254976
          %178 = vst.msk [vmem:[#allocation2 + $0x10] sm:$0x3] %vm177, 0.0
          %179 = vst.msk [vmem:[#allocation2 + $0x18] sm:$0xff] %vm174, 0.0
          %180 = vst.msk [vmem:[#allocation2 + $0x20] sm:$0xff] %vm174, 0.0
          %181 = vst.msk [vmem:[#allocation2 + $0x28] sm:$0x3] %vm177, 0.0
          %182 = vst.msk [vmem:[#allocation2 + $0x30] sm:$0xff] %vm174, 0.0
          %183 = vst.msk [vmem:[#allocation2 + $0x38] sm:$0xff] %vm174, 0.0
          %184 = vst.msk [vmem:[#allocation2 + $0x40] sm:$0x3] %vm177, 0.0
          %185 = vst.msk [vmem:[#allocation2 + $0x48] sm:$0xff] %vm174, 0.0
          %186 = vst.msk [vmem:[#allocation2 + $0x50] sm:$0xff] %vm174, 0.0
          %187 = vst.msk [vmem:[#allocation2 + $0x58] sm:$0x3] %vm177, 0.0
          %188 = vst.msk [vmem:[#allocation2 + $0x60] sm:$0xff] %vm174, 0.0
          %189 = vst.msk [vmem:[#allocation2 + $0x68] sm:$0xff] %vm174, 0.0
          %190 = vst.msk [vmem:[#allocation2 + $0x70] sm:$0x3] %vm177, 0.0
          %191 = vst.msk [vmem:[#allocation2 + $0x78] sm:$0xff] %vm174, 0.0
          %192 = vst.msk [vmem:[#allocation2 + $0x80] sm:$0xff] %vm174, 0.0
          %193 = vst.msk [vmem:[#allocation2 + $0x88] sm:$0x3] %vm177, 0.0
          %194 = vst.msk [vmem:[#allocation2 + $0x90] sm:$0xff] %vm174, 0.0
          %195 = vst.msk [vmem:[#allocation2 + $0x98] sm:$0xff] %vm174, 0.0
          %196 = vst.msk [vmem:[#allocation2 + $0xa0] sm:$0x3] %vm177, 0.0
          %197 = vst.msk [vmem:[#allocation2 + $0xa8] sm:$0xff] %vm174, 0.0
          %198 = vst.msk [vmem:[#allocation2 + $0xb0] sm:$0xff] %vm174, 0.0
          %199 = vst.msk [vmem:[#allocation2 + $0xb8] sm:$0x3] %vm177, 0.0
          %200 = vst.msk [vmem:[#allocation2 + $0xc0] sm:$0xff] %vm174, 0.0
          %201 = vst.msk [vmem:[#allocation2 + $0xc8] sm:$0xff] %vm174, 0.0
          %202 = vst.msk [vmem:[#allocation2 + $0xd0] sm:$0x3] %vm177, 0.0
          %203 = vst.msk [vmem:[#allocation2 + $0xd8] sm:$0xff] %vm174, 0.0
          %204 = vst.msk [vmem:[#allocation2 + $0xe0] sm:$0xff] %vm174, 0.0
          %205 = vst.msk [vmem:[#allocation2 + $0xe8] sm:$0x3] %vm177, 0.0
          %206 = vst.msk [vmem:[#allocation2 + $0xf0] sm:$0xff] %vm174, 0.0
          %207 = vst.msk [vmem:[#allocation2 + $0xf8] sm:$0xff] %vm174, 0.0
          %208 = vst.msk [vmem:[#allocation2 + $0x100] sm:$0x3] %vm177, 0.0
          %209 = vst.msk [vmem:[#allocation2 + $0x108] sm:$0xff] %vm174, 0.0
          %210 = vst.msk [vmem:[#allocation2 + $0x110] sm:$0xff] %vm174, 0.0
          %211 = vst.msk [vmem:[#allocation2 + $0x118] sm:$0x3] %vm177, 0.0
          %212 = vst.msk [vmem:[#allocation2 + $0x120] sm:$0xff] %vm174, 0.0
          %213 = vst.msk [vmem:[#allocation2 + $0x128] sm:$0xff] %vm174, 0.0
          %214 = vst.msk [vmem:[#allocation2 + $0x130] sm:$0x3] %vm177, 0.0
          %215 = vst.msk [vmem:[#allocation2 + $0x138] sm:$0xff] %vm174, 0.0
          %216 = vst.msk [vmem:[#allocation2 + $0x140] sm:$0xff] %vm174, 0.0
          %217 = vst.msk [vmem:[#allocation2 + $0x148] sm:$0x3] %vm177, 0.0
          %218 = vst.msk [vmem:[#allocation2 + $0x150] sm:$0xff] %vm174, 0.0
          %219 = vst.msk [vmem:[#allocation2 + $0x158] sm:$0xff] %vm174, 0.0
          %220 = vst.msk [vmem:[#allocation2 + $0x160] sm:$0x3] %vm177, 0.0
          %221 = vst.msk [vmem:[#allocation2 + $0x168] sm:$0xff] %vm174, 0.0
          %222 = vst.msk [vmem:[#allocation2 + $0x170] sm:$0xff] %vm174, 0.0
          %223 = vst.msk [vmem:[#allocation2 + $0x178] sm:$0x3] %vm177, 0.0
          %224 = vst.msk [vmem:[#allocation2 + $0x180] sm:$0xff] %vm174, 0.0
          %225 = vst.msk [vmem:[#allocation2 + $0x188] sm:$0xff] %vm174, 0.0
          %226 = vst.msk [vmem:[#allocation2 + $0x190] sm:$0x3] %vm177, 0.0
          %227 = vst.msk [vmem:[#allocation2 + $0x198] sm:$0xff] %vm174, 0.0
          %228 = vst.msk [vmem:[#allocation2 + $0x1a0] sm:$0xff] %vm174, 0.0
          %229 = vst.msk [vmem:[#allocation2 + $0x1a8] sm:$0x3] %vm177, 0.0
        $region36: #{snow_mask_block_forward.1} parent=31 // pred_fallthru
          _
        %v230 = vld [vmem:[%s168] sm:$0xff]
        %v231 = vld [vmem:[%s168 + $0x8] sm:$0xff]
        %v232 = vld [vmem:[%s168 + $0x10] sm:$0xff]
        %v233 = vld [vmem:[%s168 + $0x18] sm:$0xff]
        %v234 = vld [vmem:[%s168 + $0x20] sm:$0xff]
        %v235 = vld [vmem:[%s168 + $0x28] sm:$0xff]
        %v236 = vld [vmem:[%s168 + $0x30] sm:$0xff]
        %v237 = vld [vmem:[%s168 + $0x38] sm:$0xff]
        %v238 = vld [vmem:[%s168 + $0x40] sm:$0xff]
        %v239 = vld [vmem:[%s168 + $0x48] sm:$0xff]
        %v240 = vld [vmem:[%s168 + $0x50] sm:$0xff]
        %v241 = vld [vmem:[%s168 + $0x58] sm:$0xff]
        %v242 = vld [vmem:[%s168 + $0x60] sm:$0xff]
        %v243 = vld [vmem:[%s168 + $0x68] sm:$0xff]
        %v244 = vld [vmem:[%s168 + $0x70] sm:$0xff]
        %v245 = vld [vmem:[%s168 + $0x78] sm:$0xff]
        %v246 = vld [vmem:[%s168 + $0x80] sm:$0xff]
        %v247 = vld [vmem:[%s168 + $0x88] sm:$0xff]
        %v248 = vld [vmem:[%s168 + $0x90] sm:$0xff]
        %v249 = vld [vmem:[%s168 + $0x98] sm:$0xff]
        %v250 = vld [vmem:[%s168 + $0xa0] sm:$0xff]
        %v251 = vld [vmem:[%s168 + $0xa8] sm:$0xff]
        %v252 = vld [vmem:[%s168 + $0xb0] sm:$0xff]
        %v253 = vld [vmem:[%s168 + $0xb8] sm:$0xff]
        %v254 = vld [vmem:[%s168 + $0xc0] sm:$0xff]
        %v255 = vld [vmem:[%s168 + $0xc8] sm:$0xff]
        %v256 = vld [vmem:[%s168 + $0xd0] sm:$0xff]
        %v257 = vld [vmem:[%s168 + $0xd8] sm:$0xff]
        %v258 = vld [vmem:[%s168 + $0xe0] sm:$0xff]
        %v259 = vld [vmem:[%s168 + $0xe8] sm:$0xff]
        %v260 = vld [vmem:[%s168 + $0xf0] sm:$0xff]
        %v261 = vld [vmem:[%s168 + $0xf8] sm:$0xff]
        %s262 = scalar_lea.vmem [#allocation2], 24
        %vm263 = vcmask 261120
        %264 = vst.msk [vmem:[%s262 + $0x1] sm:$0xff] %vm263, %v230
        %265 = vst.msk [vmem:[%s262 + $0x9] sm:$0xff] %vm263, %v231
        %266 = vst.msk [vmem:[%s262 + $0x19] sm:$0xff] %vm263, %v232
        %267 = vst.msk [vmem:[%s262 + $0x21] sm:$0xff] %vm263, %v233
        %268 = vst.msk [vmem:[%s262 + $0x31] sm:$0xff] %vm263, %v234
        %269 = vst.msk [vmem:[%s262 + $0x39] sm:$0xff] %vm263, %v235
        %270 = vst.msk [vmem:[%s262 + $0x49] sm:$0xff] %vm263, %v236
        %271 = vst.msk [vmem:[%s262 + $0x51] sm:$0xff] %vm263, %v237
        %272 = vst.msk [vmem:[%s262 + $0x61] sm:$0xff] %vm263, %v238
        %273 = vst.msk [vmem:[%s262 + $0x69] sm:$0xff] %vm263, %v239
        %274 = vst.msk [vmem:[%s262 + $0x79] sm:$0xff] %vm263, %v240
        %275 = vst.msk [vmem:[%s262 + $0x81] sm:$0xff] %vm263, %v241
        %276 = vst.msk [vmem:[%s262 + $0x91] sm:$0xff] %vm263, %v242
        %277 = vst.msk [vmem:[%s262 + $0x99] sm:$0xff] %vm263, %v243
        %278 = vst.msk [vmem:[%s262 + $0xa9] sm:$0xff] %vm263, %v244
        %279 = vst.msk [vmem:[%s262 + $0xb1] sm:$0xff] %vm263, %v245
        %280 = vst.msk [vmem:[%s262 + $0xc1] sm:$0xff] %vm263, %v246
        %281 = vst.msk [vmem:[%s262 + $0xc9] sm:$0xff] %vm263, %v247
        %282 = vst.msk [vmem:[%s262 + $0xd9] sm:$0xff] %vm263, %v248
        %283 = vst.msk [vmem:[%s262 + $0xe1] sm:$0xff] %vm263, %v249
        %284 = vst.msk [vmem:[%s262 + $0xf1] sm:$0xff] %vm263, %v250
        %285 = vst.msk [vmem:[%s262 + $0xf9] sm:$0xff] %vm263, %v251
        %286 = vst.msk [vmem:[%s262 + $0x109] sm:$0xff] %vm263, %v252
        %287 = vst.msk [vmem:[%s262 + $0x111] sm:$0xff] %vm263, %v253
        %288 = vst.msk [vmem:[%s262 + $0x121] sm:$0xff] %vm263, %v254
        %289 = vst.msk [vmem:[%s262 + $0x129] sm:$0xff] %vm263, %v255
        %290 = vst.msk [vmem:[%s262 + $0x139] sm:$0xff] %vm263, %v256
        %291 = vst.msk [vmem:[%s262 + $0x141] sm:$0xff] %vm263, %v257
        %292 = vst.msk [vmem:[%s262 + $0x151] sm:$0xff] %vm263, %v258
        %293 = vst.msk [vmem:[%s262 + $0x159] sm:$0xff] %vm263, %v259
        %294 = vst.msk [vmem:[%s262 + $0x169] sm:$0xff] %vm263, %v260
        %295 = vst.msk [vmem:[%s262 + $0x171] sm:$0xff] %vm263, %v261
        %v296 = vld [vmem:[#allocation2] sm:$0xff]
        %v297 = vld [vmem:[#allocation2 + $0x8] sm:$0xff]
        %v298 = vld [vmem:[#allocation2 + $0x18] sm:$0xff]
        %v299 = vld [vmem:[#allocation2 + $0x20] sm:$0xff]
        %v300 = vld [vmem:[#allocation2 + $0x30] sm:$0xff]
        %v301 = vld [vmem:[#allocation2 + $0x38] sm:$0xff]
        %v302 = vld [vmem:[#allocation2 + $0x48] sm:$0xff]
        %v303 = vld [vmem:[#allocation2 + $0x50] sm:$0xff]
        %v304 = vld [vmem:[#allocation2 + $0x60] sm:$0xff]
        %v305 = vld [vmem:[#allocation2 + $0x68] sm:$0xff]
        %v306 = vld [vmem:[#allocation2 + $0x78] sm:$0xff]
        %v307 = vld [vmem:[#allocation2 + $0x80] sm:$0xff]
        %v308 = vld [vmem:[#allocation2 + $0x90] sm:$0xff]
        %v309 = vld [vmem:[#allocation2 + $0x98] sm:$0xff]
        %v310 = vld [vmem:[#allocation2 + $0xa8] sm:$0xff]
        %v311 = vld [vmem:[#allocation2 + $0xb0] sm:$0xff]
        %v312 = vld [vmem:[#allocation2 + $0xc0] sm:$0xff]
        %v313 = vld [vmem:[#allocation2 + $0xc8] sm:$0xff]
        %v314 = vld [vmem:[#allocation2 + $0xd8] sm:$0xff]
        %v315 = vld [vmem:[#allocation2 + $0xe0] sm:$0xff]
        %v316 = vld [vmem:[#allocation2 + $0xf0] sm:$0xff]
        %v317 = vld [vmem:[#allocation2 + $0xf8] sm:$0xff]
        %v318 = vld [vmem:[#allocation2 + $0x108] sm:$0xff]
        %v319 = vld [vmem:[#allocation2 + $0x110] sm:$0xff]
        %v320 = vld [vmem:[#allocation2 + $0x120] sm:$0xff]
        %v321 = vld [vmem:[#allocation2 + $0x128] sm:$0xff]
        %v322 = vld [vmem:[#allocation2 + $0x138] sm:$0xff]
        %v323 = vld [vmem:[#allocation2 + $0x140] sm:$0xff]
        %v324 = vld [vmem:[#allocation2 + $0x150] sm:$0xff]
        %v325 = vld [vmem:[#allocation2 + $0x158] sm:$0xff]
        %v326 = vld [vmem:[#allocation2 + $0x168] sm:$0xff]
        %v327 = vld [vmem:[#allocation2 + $0x170] sm:$0xff]
        %v328 = vpack.c.bf16 %v297, %v296
        %v329 = vpack.c.bf16 %v299, %v298
        %v330 = vpack.c.bf16 %v301, %v300
        %v331 = vpack.c.bf16 %v303, %v302
        %v332 = vpack.c.bf16 %v305, %v304
        %v333 = vpack.c.bf16 %v307, %v306
        %v334 = vpack.c.bf16 %v309, %v308
        %v335 = vpack.c.bf16 %v311, %v310
        %v336 = vpack.c.bf16 %v313, %v312
        %v337 = vpack.c.bf16 %v315, %v314
        %v338 = vpack.c.bf16 %v317, %v316
        %v339 = vpack.c.bf16 %v319, %v318
        %v340 = vpack.c.bf16 %v321, %v320
        %v341 = vpack.c.bf16 %v323, %v322
        %v342 = vpack.c.bf16 %v325, %v324
        %v343 = vpack.c.bf16 %v327, %v326
        %344 = vst.msk [vmem:[#allocation3] sm:$0xff] %vm263, %v328
        %345 = vst.msk [vmem:[#allocation3 + $0x18] sm:$0xff] %vm263, %v329
        %346 = vst.msk [vmem:[#allocation3 + $0x30] sm:$0xff] %vm263, %v330
        %347 = vst.msk [vmem:[#allocation3 + $0x48] sm:$0xff] %vm263, %v331
        %348 = vst.msk [vmem:[#allocation3 + $0x60] sm:$0xff] %vm263, %v332
        %349 = vst.msk [vmem:[#allocation3 + $0x78] sm:$0xff] %vm263, %v333
        %350 = vst.msk [vmem:[#allocation3 + $0x90] sm:$0xff] %vm263, %v334
        %351 = vst.msk [vmem:[#allocation3 + $0xa8] sm:$0xff] %vm263, %v335
        %352 = vst.msk [vmem:[#allocation3 + $0xc0] sm:$0xff] %vm263, %v336
        %353 = vst.msk [vmem:[#allocation3 + $0xd8] sm:$0xff] %vm263, %v337
        %354 = vst.msk [vmem:[#allocation3 + $0xf0] sm:$0xff] %vm263, %v338
        %355 = vst.msk [vmem:[#allocation3 + $0x108] sm:$0xff] %vm263, %v339
        %356 = vst.msk [vmem:[#allocation3 + $0x120] sm:$0xff] %vm263, %v340
        %357 = vst.msk [vmem:[#allocation3 + $0x138] sm:$0xff] %vm263, %v341
        %358 = vst.msk [vmem:[#allocation3 + $0x150] sm:$0xff] %vm263, %v342
        %359 = vst.msk [vmem:[#allocation3 + $0x168] sm:$0xff] %vm263, %v343
        %v360 = vld [vmem:[#allocation2 + $0x1] sm:$0xff]
        %v361 = vld [vmem:[#allocation2 + $0x9] sm:$0xff]
        %v362 = vld [vmem:[#allocation2 + $0x19] sm:$0xff]
        %v363 = vld [vmem:[#allocation2 + $0x21] sm:$0xff]
        %v364 = vld [vmem:[#allocation2 + $0x31] sm:$0xff]
        %v365 = vld [vmem:[#allocation2 + $0x39] sm:$0xff]
        %v366 = vld [vmem:[#allocation2 + $0x49] sm:$0xff]
        %v367 = vld [vmem:[#allocation2 + $0x51] sm:$0xff]
        %v368 = vld [vmem:[#allocation2 + $0x61] sm:$0xff]
        %v369 = vld [vmem:[#allocation2 + $0x69] sm:$0xff]
        %v370 = vld [vmem:[#allocation2 + $0x79] sm:$0xff]
        %v371 = vld [vmem:[#allocation2 + $0x81] sm:$0xff]
        %v372 = vld [vmem:[#allocation2 + $0x91] sm:$0xff]
        %v373 = vld [vmem:[#allocation2 + $0x99] sm:$0xff]
        %v374 = vld [vmem:[#allocation2 + $0xa9] sm:$0xff]
        %v375 = vld [vmem:[#allocation2 + $0xb1] sm:$0xff]
        %v376 = vld [vmem:[#allocation2 + $0xc1] sm:$0xff]
        %v377 = vld [vmem:[#allocation2 + $0xc9] sm:$0xff]
        %v378 = vld [vmem:[#allocation2 + $0xd9] sm:$0xff]
        %v379 = vld [vmem:[#allocation2 + $0xe1] sm:$0xff]
        %v380 = vld [vmem:[#allocation2 + $0xf1] sm:$0xff]
        %v381 = vld [vmem:[#allocation2 + $0xf9] sm:$0xff]
        %v382 = vld [vmem:[#allocation2 + $0x109] sm:$0xff]
        %v383 = vld [vmem:[#allocation2 + $0x111] sm:$0xff]
        %v384 = vld [vmem:[#allocation2 + $0x121] sm:$0xff]
        %v385 = vld [vmem:[#allocation2 + $0x129] sm:$0xff]
        %v386 = vld [vmem:[#allocation2 + $0x139] sm:$0xff]
        %v387 = vld [vmem:[#allocation2 + $0x141] sm:$0xff]
        %v388 = vld [vmem:[#allocation2 + $0x151] sm:$0xff]
        %v389 = vld [vmem:[#allocation2 + $0x159] sm:$0xff]
        %v390 = vld [vmem:[#allocation2 + $0x169] sm:$0xff]
        %v391 = vld [vmem:[#allocation2 + $0x171] sm:$0xff]
        %v392 = vpack.c.bf16 %v361, %v360
        %v393 = vpack.c.bf16 %v363, %v362
        %v394 = vpack.c.bf16 %v365, %v364
        %v395 = vpack.c.bf16 %v367, %v366
        %v396 = vpack.c.bf16 %v369, %v368
        %v397 = vpack.c.bf16 %v371, %v370
        %v398 = vpack.c.bf16 %v373, %v372
        %v399 = vpack.c.bf16 %v375, %v374
        %v400 = vpack.c.bf16 %v377, %v376
        %v401 = vpack.c.bf16 %v379, %v378
        %v402 = vpack.c.bf16 %v381, %v380
        %v403 = vpack.c.bf16 %v383, %v382
        %v404 = vpack.c.bf16 %v385, %v384
        %v405 = vpack.c.bf16 %v387, %v386
        %v406 = vpack.c.bf16 %v389, %v388
        %v407 = vpack.c.bf16 %v391, %v390
        %424 = vrot.lane.b32.xlu0 %v392, 32
        %v425 = vpop.permute.xlu0 %424
        %426 = vrot.lane.b32.xlu0 %v393, 32
        %v427 = vpop.permute.xlu0 %426
        %428 = vrot.lane.b32.xlu0 %v394, 32
        %v429 = vpop.permute.xlu0 %428
        %430 = vrot.lane.b32.xlu0 %v395, 32
        %v431 = vpop.permute.xlu0 %430
        %432 = vrot.lane.b32.xlu0 %v396, 32
        %v433 = vpop.permute.xlu0 %432
        %434 = vrot.lane.b32.xlu0 %v397, 32
        %v435 = vpop.permute.xlu0 %434
        %436 = vrot.lane.b32.xlu0 %v398, 32
        %v437 = vpop.permute.xlu0 %436
        %438 = vrot.lane.b32.xlu0 %v399, 32
        %v439 = vpop.permute.xlu0 %438
        %440 = vrot.lane.b32.xlu0 %v400, 32
        %v441 = vpop.permute.xlu0 %440
        %442 = vrot.lane.b32.xlu0 %v401, 32
        %v443 = vpop.permute.xlu0 %442
        %444 = vrot.lane.b32.xlu0 %v402, 32
        %v445 = vpop.permute.xlu0 %444
        %446 = vrot.lane.b32.xlu0 %v403, 32
        %v447 = vpop.permute.xlu0 %446
        %448 = vrot.lane.b32.xlu0 %v404, 32
        %v449 = vpop.permute.xlu0 %448
        %450 = vrot.lane.b32.xlu0 %v405, 32
        %v451 = vpop.permute.xlu0 %450
        %452 = vrot.lane.b32.xlu0 %v406, 32
        %v453 = vpop.permute.xlu0 %452
        %454 = vrot.lane.b32.xlu0 %v407, 32
        %v455 = vpop.permute.xlu0 %454
        %vm472 = vcmask 523520
        %473 = vst.msk [vmem:[#allocation3] sm:$0xff] %vm472, %v425
        %474 = vst.msk [vmem:[#allocation3 + $0x18] sm:$0xff] %vm472, %v427
        %475 = vst.msk [vmem:[#allocation3 + $0x30] sm:$0xff] %vm472, %v429
        %476 = vst.msk [vmem:[#allocation3 + $0x48] sm:$0xff] %vm472, %v431
        %477 = vst.msk [vmem:[#allocation3 + $0x60] sm:$0xff] %vm472, %v433
        %478 = vst.msk [vmem:[#allocation3 + $0x78] sm:$0xff] %vm472, %v435
        %479 = vst.msk [vmem:[#allocation3 + $0x90] sm:$0xff] %vm472, %v437
        %480 = vst.msk [vmem:[#allocation3 + $0xa8] sm:$0xff] %vm472, %v439
        %481 = vst.msk [vmem:[#allocation3 + $0xc0] sm:$0xff] %vm472, %v441
        %482 = vst.msk [vmem:[#allocation3 + $0xd8] sm:$0xff] %vm472, %v443
        %483 = vst.msk [vmem:[#allocation3 + $0xf0] sm:$0xff] %vm472, %v445
        %484 = vst.msk [vmem:[#allocation3 + $0x108] sm:$0xff] %vm472, %v447
        %485 = vst.msk [vmem:[#allocation3 + $0x120] sm:$0xff] %vm472, %v449
        %486 = vst.msk [vmem:[#allocation3 + $0x138] sm:$0xff] %vm472, %v451
        %487 = vst.msk [vmem:[#allocation3 + $0x150] sm:$0xff] %vm472, %v453
        %488 = vst.msk [vmem:[#allocation3 + $0x168] sm:$0xff] %vm472, %v455
        %v489 = vld [vmem:[#allocation2 + $0x2] sm:$0xff]
        %v490 = vld [vmem:[#allocation2 + $0xa] sm:$0xff]
        %v491 = vld [vmem:[#allocation2 + $0x1a] sm:$0xff]
        %v492 = vld [vmem:[#allocation2 + $0x22] sm:$0xff]
        %v493 = vld [vmem:[#allocation2 + $0x32] sm:$0xff]
        %v494 = vld [vmem:[#allocation2 + $0x3a] sm:$0xff]
        %v495 = vld [vmem:[#allocation2 + $0x4a] sm:$0xff]
        %v496 = vld [vmem:[#allocation2 + $0x52] sm:$0xff]
        %v497 = vld [vmem:[#allocation2 + $0x62] sm:$0xff]
        %v498 = vld [vmem:[#allocation2 + $0x6a] sm:$0xff]
        %v499 = vld [vmem:[#allocation2 + $0x7a] sm:$0xff]
        %v500 = vld [vmem:[#allocation2 + $0x82] sm:$0xff]
        %v501 = vld [vmem:[#allocation2 + $0x92] sm:$0xff]
        %v502 = vld [vmem:[#allocation2 + $0x9a] sm:$0xff]
        %v503 = vld [vmem:[#allocation2 + $0xaa] sm:$0xff]
        %v504 = vld [vmem:[#allocation2 + $0xb2] sm:$0xff]
        %v505 = vld [vmem:[#allocation2 + $0xc2] sm:$0xff]
        %v506 = vld [vmem:[#allocation2 + $0xca] sm:$0xff]
        %v507 = vld [vmem:[#allocation2 + $0xda] sm:$0xff]
        %v508 = vld [vmem:[#allocation2 + $0xe2] sm:$0xff]
        %v509 = vld [vmem:[#allocation2 + $0xf2] sm:$0xff]
        %v510 = vld [vmem:[#allocation2 + $0xfa] sm:$0xff]
        %v511 = vld [vmem:[#allocation2 + $0x10a] sm:$0xff]
        %v512 = vld [vmem:[#allocation2 + $0x112] sm:$0xff]
        %v513 = vld [vmem:[#allocation2 + $0x122] sm:$0xff]
        %v514 = vld [vmem:[#allocation2 + $0x12a] sm:$0xff]
        %v515 = vld [vmem:[#allocation2 + $0x13a] sm:$0xff]
        %v516 = vld [vmem:[#allocation2 + $0x142] sm:$0xff]
        %v517 = vld [vmem:[#allocation2 + $0x152] sm:$0xff]
        %v518 = vld [vmem:[#allocation2 + $0x15a] sm:$0xff]
        %v519 = vld [vmem:[#allocation2 + $0x16a] sm:$0xff]
        %v520 = vld [vmem:[#allocation2 + $0x172] sm:$0xff]
        %v521 = vpack.c.bf16 %v490, %v489
        %v522 = vpack.c.bf16 %v492, %v491
        %v523 = vpack.c.bf16 %v494, %v493
        %v524 = vpack.c.bf16 %v496, %v495
        %v525 = vpack.c.bf16 %v498, %v497
        %v526 = vpack.c.bf16 %v500, %v499
        %v527 = vpack.c.bf16 %v502, %v501
        %v528 = vpack.c.bf16 %v504, %v503
        %v529 = vpack.c.bf16 %v506, %v505
        %v530 = vpack.c.bf16 %v508, %v507
        %v531 = vpack.c.bf16 %v510, %v509
        %v532 = vpack.c.bf16 %v512, %v511
        %v533 = vpack.c.bf16 %v514, %v513
        %v534 = vpack.c.bf16 %v516, %v515
        %v535 = vpack.c.bf16 %v518, %v517
        %v536 = vpack.c.bf16 %v520, %v519
        %553 = vrot.lane.b32.xlu0 %v521, 64
        %v554 = vpop.permute.xlu0 %553
        %555 = vrot.lane.b32.xlu0 %v522, 64
        %v556 = vpop.permute.xlu0 %555
        %557 = vrot.lane.b32.xlu0 %v523, 64
        %v558 = vpop.permute.xlu0 %557
        %559 = vrot.lane.b32.xlu0 %v524, 64
        %v560 = vpop.permute.xlu0 %559
        %561 = vrot.lane.b32.xlu0 %v525, 64
        %v562 = vpop.permute.xlu0 %561
        %563 = vrot.lane.b32.xlu0 %v526, 64
        %v564 = vpop.permute.xlu0 %563
        %565 = vrot.lane.b32.xlu0 %v527, 64
        %v566 = vpop.permute.xlu0 %565
        %567 = vrot.lane.b32.xlu0 %v528, 64
        %v568 = vpop.permute.xlu0 %567
        %569 = vrot.lane.b32.xlu0 %v529, 64
        %v570 = vpop.permute.xlu0 %569
        %571 = vrot.lane.b32.xlu0 %v530, 64
        %v572 = vpop.permute.xlu0 %571
        %573 = vrot.lane.b32.xlu0 %v531, 64
        %v574 = vpop.permute.xlu0 %573
        %575 = vrot.lane.b32.xlu0 %v532, 64
        %v576 = vpop.permute.xlu0 %575
        %577 = vrot.lane.b32.xlu0 %v533, 64
        %v578 = vpop.permute.xlu0 %577
        %579 = vrot.lane.b32.xlu0 %v534, 64
        %v580 = vpop.permute.xlu0 %579
        %581 = vrot.lane.b32.xlu0 %v535, 64
        %v582 = vpop.permute.xlu0 %581
        %583 = vrot.lane.b32.xlu0 %v536, 64
        %v584 = vpop.permute.xlu0 %583
        %vm601 = vcmask 785920
        %602 = vst.msk [vmem:[#allocation3] sm:$0xff] %vm601, %v554
        %603 = vst.msk [vmem:[#allocation3 + $0x18] sm:$0xff] %vm601, %v556
        %604 = vst.msk [vmem:[#allocation3 + $0x30] sm:$0xff] %vm601, %v558
        %605 = vst.msk [vmem:[#allocation3 + $0x48] sm:$0xff] %vm601, %v560
        %606 = vst.msk [vmem:[#allocation3 + $0x60] sm:$0xff] %vm601, %v562
        %607 = vst.msk [vmem:[#allocation3 + $0x78] sm:$0xff] %vm601, %v564
        %608 = vst.msk [vmem:[#allocation3 + $0x90] sm:$0xff] %vm601, %v566
        %609 = vst.msk [vmem:[#allocation3 + $0xa8] sm:$0xff] %vm601, %v568
        %610 = vst.msk [vmem:[#allocation3 + $0xc0] sm:$0xff] %vm601, %v570
        %611 = vst.msk [vmem:[#allocation3 + $0xd8] sm:$0xff] %vm601, %v572
        %612 = vst.msk [vmem:[#allocation3 + $0xf0] sm:$0xff] %vm601, %v574
        %613 = vst.msk [vmem:[#allocation3 + $0x108] sm:$0xff] %vm601, %v576
        %614 = vst.msk [vmem:[#allocation3 + $0x120] sm:$0xff] %vm601, %v578
        %615 = vst.msk [vmem:[#allocation3 + $0x138] sm:$0xff] %vm601, %v580
        %616 = vst.msk [vmem:[#allocation3 + $0x150] sm:$0xff] %vm601, %v582
        %617 = vst.msk [vmem:[#allocation3 + $0x168] sm:$0xff] %vm601, %v584
        %v618 = vld [vmem:[%s262] sm:$0xff]
        %v619 = vld [vmem:[%s262 + $0x8] sm:$0xff]
        %v620 = vld [vmem:[%s262 + $0x18] sm:$0xff]
        %v621 = vld [vmem:[%s262 + $0x20] sm:$0xff]
        %v622 = vld [vmem:[%s262 + $0x30] sm:$0xff]
        %v623 = vld [vmem:[%s262 + $0x38] sm:$0xff]
        %v624 = vld [vmem:[%s262 + $0x48] sm:$0xff]
        %v625 = vld [vmem:[%s262 + $0x50] sm:$0xff]
        %v626 = vld [vmem:[%s262 + $0x60] sm:$0xff]
        %v627 = vld [vmem:[%s262 + $0x68] sm:$0xff]
        %v628 = vld [vmem:[%s262 + $0x78] sm:$0xff]
        %v629 = vld [vmem:[%s262 + $0x80] sm:$0xff]
        %v630 = vld [vmem:[%s262 + $0x90] sm:$0xff]
        %v631 = vld [vmem:[%s262 + $0x98] sm:$0xff]
        %v632 = vld [vmem:[%s262 + $0xa8] sm:$0xff]
        %v633 = vld [vmem:[%s262 + $0xb0] sm:$0xff]
        %v634 = vld [vmem:[%s262 + $0xc0] sm:$0xff]
        %v635 = vld [vmem:[%s262 + $0xc8] sm:$0xff]
        %v636 = vld [vmem:[%s262 + $0xd8] sm:$0xff]
        %v637 = vld [vmem:[%s262 + $0xe0] sm:$0xff]
        %v638 = vld [vmem:[%s262 + $0xf0] sm:$0xff]
        %v639 = vld [vmem:[%s262 + $0xf8] sm:$0xff]
        %v640 = vld [vmem:[%s262 + $0x108] sm:$0xff]
        %v641 = vld [vmem:[%s262 + $0x110] sm:$0xff]
        %v642 = vld [vmem:[%s262 + $0x120] sm:$0xff]
        %v643 = vld [vmem:[%s262 + $0x128] sm:$0xff]
        %v644 = vld [vmem:[%s262 + $0x138] sm:$0xff]
        %v645 = vld [vmem:[%s262 + $0x140] sm:$0xff]
        %v646 = vld [vmem:[%s262 + $0x150] sm:$0xff]
        %v647 = vld [vmem:[%s262 + $0x158] sm:$0xff]
        %v648 = vld [vmem:[%s262 + $0x168] sm:$0xff]
        %v649 = vld [vmem:[%s262 + $0x170] sm:$0xff]
        %v650 = vpack.c.bf16 %v619, %v618
        %v651 = vpack.c.bf16 %v621, %v620
        %v652 = vpack.c.bf16 %v623, %v622
        %v653 = vpack.c.bf16 %v625, %v624
        %v654 = vpack.c.bf16 %v627, %v626
        %v655 = vpack.c.bf16 %v629, %v628
        %v656 = vpack.c.bf16 %v631, %v630
        %v657 = vpack.c.bf16 %v633, %v632
        %v658 = vpack.c.bf16 %v635, %v634
        %v659 = vpack.c.bf16 %v637, %v636
        %v660 = vpack.c.bf16 %v639, %v638
        %v661 = vpack.c.bf16 %v641, %v640
        %v662 = vpack.c.bf16 %v643, %v642
        %v663 = vpack.c.bf16 %v645, %v644
        %v664 = vpack.c.bf16 %v647, %v646
        %v665 = vpack.c.bf16 %v649, %v648
        %682 = vrot.lane.b32.xlu0 %v650, 96
        %v683 = vpop.permute.xlu0 %682
        %684 = vrot.lane.b32.xlu0 %v651, 96
        %v685 = vpop.permute.xlu0 %684
        %686 = vrot.lane.b32.xlu0 %v652, 96
        %v687 = vpop.permute.xlu0 %686
        %688 = vrot.lane.b32.xlu0 %v653, 96
        %v689 = vpop.permute.xlu0 %688
        %690 = vrot.lane.b32.xlu0 %v654, 96
        %v691 = vpop.permute.xlu0 %690
        %692 = vrot.lane.b32.xlu0 %v655, 96
        %v693 = vpop.permute.xlu0 %692
        %694 = vrot.lane.b32.xlu0 %v656, 96
        %v695 = vpop.permute.xlu0 %694
        %696 = vrot.lane.b32.xlu0 %v657, 96
        %v697 = vpop.permute.xlu0 %696
        %698 = vrot.lane.b32.xlu0 %v658, 96
        %v699 = vpop.permute.xlu0 %698
        %700 = vrot.lane.b32.xlu0 %v659, 96
        %v701 = vpop.permute.xlu0 %700
        %702 = vrot.lane.b32.xlu0 %v660, 96
        %v703 = vpop.permute.xlu0 %702
        %704 = vrot.lane.b32.xlu0 %v661, 96
        %v705 = vpop.permute.xlu0 %704
        %706 = vrot.lane.b32.xlu0 %v662, 96
        %v707 = vpop.permute.xlu0 %706
        %708 = vrot.lane.b32.xlu0 %v663, 96
        %v709 = vpop.permute.xlu0 %708
        %710 = vrot.lane.b32.xlu0 %v664, 96
        %v711 = vpop.permute.xlu0 %710
        %712 = vrot.lane.b32.xlu0 %v665, 96
        %v713 = vpop.permute.xlu0 %712
        %vm730 = vcmask 1048320
        %731 = vst.msk [vmem:[#allocation3] sm:$0xff] %vm730, %v683
        %732 = vst.msk [vmem:[#allocation3 + $0x18] sm:$0xff] %vm730, %v685
        %733 = vst.msk [vmem:[#allocation3 + $0x30] sm:$0xff] %vm730, %v687
        %734 = vst.msk [vmem:[#allocation3 + $0x48] sm:$0xff] %vm730, %v689
        %735 = vst.msk [vmem:[#allocation3 + $0x60] sm:$0xff] %vm730, %v691
        %736 = vst.msk [vmem:[#allocation3 + $0x78] sm:$0xff] %vm730, %v693
        %737 = vst.msk [vmem:[#allocation3 + $0x90] sm:$0xff] %vm730, %v695
        %738 = vst.msk [vmem:[#allocation3 + $0xa8] sm:$0xff] %vm730, %v697
        %739 = vst.msk [vmem:[#allocation3 + $0xc0] sm:$0xff] %vm730, %v699
        %740 = vst.msk [vmem:[#allocation3 + $0xd8] sm:$0xff] %vm730, %v701
        %741 = vst.msk [vmem:[#allocation3 + $0xf0] sm:$0xff] %vm730, %v703
        %742 = vst.msk [vmem:[#allocation3 + $0x108] sm:$0xff] %vm730, %v705
        %743 = vst.msk [vmem:[#allocation3 + $0x120] sm:$0xff] %vm730, %v707
        %744 = vst.msk [vmem:[#allocation3 + $0x138] sm:$0xff] %vm730, %v709
        %745 = vst.msk [vmem:[#allocation3 + $0x150] sm:$0xff] %vm730, %v711
        %746 = vst.msk [vmem:[#allocation3 + $0x168] sm:$0xff] %vm730, %v713
        %v747 = vld [vmem:[%s262 + $0x1] sm:$0xff]
        %v748 = vld [vmem:[%s262 + $0x9] sm:$0xff]
        %v749 = vld [vmem:[%s262 + $0x19] sm:$0xff]
        %v750 = vld [vmem:[%s262 + $0x21] sm:$0xff]
        %v751 = vld [vmem:[%s262 + $0x31] sm:$0xff]
        %v752 = vld [vmem:[%s262 + $0x39] sm:$0xff]
        %v753 = vld [vmem:[%s262 + $0x49] sm:$0xff]
        %v754 = vld [vmem:[%s262 + $0x51] sm:$0xff]
        %v755 = vld [vmem:[%s262 + $0x61] sm:$0xff]
        %v756 = vld [vmem:[%s262 + $0x69] sm:$0xff]
        %v757 = vld [vmem:[%s262 + $0x79] sm:$0xff]
        %v758 = vld [vmem:[%s262 + $0x81] sm:$0xff]
        %v759 = vld [vmem:[%s262 + $0x91] sm:$0xff]
        %v760 = vld [vmem:[%s262 + $0x99] sm:$0xff]
        %v761 = vld [vmem:[%s262 + $0xa9] sm:$0xff]
        %v762 = vld [vmem:[%s262 + $0xb1] sm:$0xff]
        %v763 = vld [vmem:[%s262 + $0xc1] sm:$0xff]
        %v764 = vld [vmem:[%s262 + $0xc9] sm:$0xff]
        %v765 = vld [vmem:[%s262 + $0xd9] sm:$0xff]
        %v766 = vld [vmem:[%s262 + $0xe1] sm:$0xff]
        %v767 = vld [vmem:[%s262 + $0xf1] sm:$0xff]
        %v768 = vld [vmem:[%s262 + $0xf9] sm:$0xff]
        %v769 = vld [vmem:[%s262 + $0x109] sm:$0xff]
        %v770 = vld [vmem:[%s262 + $0x111] sm:$0xff]
        %v771 = vld [vmem:[%s262 + $0x121] sm:$0xff]
        %v772 = vld [vmem:[%s262 + $0x129] sm:$0xff]
        %v773 = vld [vmem:[%s262 + $0x139] sm:$0xff]
        %v774 = vld [vmem:[%s262 + $0x141] sm:$0xff]
        %v775 = vld [vmem:[%s262 + $0x151] sm:$0xff]
        %v776 = vld [vmem:[%s262 + $0x159] sm:$0xff]
        %v777 = vld [vmem:[%s262 + $0x169] sm:$0xff]
        %v778 = vld [vmem:[%s262 + $0x171] sm:$0xff]
        %v779 = vpack.c.bf16 %v748, %v747
        %v780 = vpack.c.bf16 %v750, %v749
        %v781 = vpack.c.bf16 %v752, %v751
        %v782 = vpack.c.bf16 %v754, %v753
        %v783 = vpack.c.bf16 %v756, %v755
        %v784 = vpack.c.bf16 %v758, %v757
        %v785 = vpack.c.bf16 %v760, %v759
        %v786 = vpack.c.bf16 %v762, %v761
        %v787 = vpack.c.bf16 %v764, %v763
        %v788 = vpack.c.bf16 %v766, %v765
        %v789 = vpack.c.bf16 %v768, %v767
        %v790 = vpack.c.bf16 %v770, %v769
        %v791 = vpack.c.bf16 %v772, %v771
        %v792 = vpack.c.bf16 %v774, %v773
        %v793 = vpack.c.bf16 %v776, %v775
        %v794 = vpack.c.bf16 %v778, %v777
        %795 = vst.msk [vmem:[#allocation3 + $0x8] sm:$0xff] %vm263, %v779
        %796 = vst.msk [vmem:[#allocation3 + $0x20] sm:$0xff] %vm263, %v780
        %797 = vst.msk [vmem:[#allocation3 + $0x38] sm:$0xff] %vm263, %v781
        %798 = vst.msk [vmem:[#allocation3 + $0x50] sm:$0xff] %vm263, %v782
        %799 = vst.msk [vmem:[#allocation3 + $0x68] sm:$0xff] %vm263, %v783
        %800 = vst.msk [vmem:[#allocation3 + $0x80] sm:$0xff] %vm263, %v784
        %801 = vst.msk [vmem:[#allocation3 + $0x98] sm:$0xff] %vm263, %v785
        %802 = vst.msk [vmem:[#allocation3 + $0xb0] sm:$0xff] %vm263, %v786
        %803 = vst.msk [vmem:[#allocation3 + $0xc8] sm:$0xff] %vm263, %v787
        %804 = vst.msk [vmem:[#allocation3 + $0xe0] sm:$0xff] %vm263, %v788
        %805 = vst.msk [vmem:[#allocation3 + $0xf8] sm:$0xff] %vm263, %v789
        %806 = vst.msk [vmem:[#allocation3 + $0x110] sm:$0xff] %vm263, %v790
        %807 = vst.msk [vmem:[#allocation3 + $0x128] sm:$0xff] %vm263, %v791
        %808 = vst.msk [vmem:[#allocation3 + $0x140] sm:$0xff] %vm263, %v792
        %809 = vst.msk [vmem:[#allocation3 + $0x158] sm:$0xff] %vm263, %v793
        %810 = vst.msk [vmem:[#allocation3 + $0x170] sm:$0xff] %vm263, %v794
        %v811 = vld [vmem:[%s262 + $0x2] sm:$0xff]
        %v812 = vld [vmem:[%s262 + $0xa] sm:$0xff]
        %v813 = vld [vmem:[%s262 + $0x1a] sm:$0xff]
        %v814 = vld [vmem:[%s262 + $0x22] sm:$0xff]
        %v815 = vld [vmem:[%s262 + $0x32] sm:$0xff]
        %v816 = vld [vmem:[%s262 + $0x3a] sm:$0xff]
        %v817 = vld [vmem:[%s262 + $0x4a] sm:$0xff]
        %v818 = vld [vmem:[%s262 + $0x52] sm:$0xff]
        %v819 = vld [vmem:[%s262 + $0x62] sm:$0xff]
        %v820 = vld [vmem:[%s262 + $0x6a] sm:$0xff]
        %v821 = vld [vmem:[%s262 + $0x7a] sm:$0xff]
        %v822 = vld [vmem:[%s262 + $0x82] sm:$0xff]
        %v823 = vld [vmem:[%s262 + $0x92] sm:$0xff]
        %v824 = vld [vmem:[%s262 + $0x9a] sm:$0xff]
        %v825 = vld [vmem:[%s262 + $0xaa] sm:$0xff]
        %v826 = vld [vmem:[%s262 + $0xb2] sm:$0xff]
        %v827 = vld [vmem:[%s262 + $0xc2] sm:$0xff]
        %v828 = vld [vmem:[%s262 + $0xca] sm:$0xff]
        %v829 = vld [vmem:[%s262 + $0xda] sm:$0xff]
        %v830 = vld [vmem:[%s262 + $0xe2] sm:$0xff]
        %v831 = vld [vmem:[%s262 + $0xf2] sm:$0xff]
        %v832 = vld [vmem:[%s262 + $0xfa] sm:$0xff]
        %v833 = vld [vmem:[%s262 + $0x10a] sm:$0xff]
        %v834 = vld [vmem:[%s262 + $0x112] sm:$0xff]
        %v835 = vld [vmem:[%s262 + $0x122] sm:$0xff]
        %v836 = vld [vmem:[%s262 + $0x12a] sm:$0xff]
        %v837 = vld [vmem:[%s262 + $0x13a] sm:$0xff]
        %v838 = vld [vmem:[%s262 + $0x142] sm:$0xff]
        %v839 = vld [vmem:[%s262 + $0x152] sm:$0xff]
        %v840 = vld [vmem:[%s262 + $0x15a] sm:$0xff]
        %v841 = vld [vmem:[%s262 + $0x16a] sm:$0xff]
        %v842 = vld [vmem:[%s262 + $0x172] sm:$0xff]
        %v843 = vpack.c.bf16 %v812, %v811
        %v844 = vpack.c.bf16 %v814, %v813
        %v845 = vpack.c.bf16 %v816, %v815
        %v846 = vpack.c.bf16 %v818, %v817
        %v847 = vpack.c.bf16 %v820, %v819
        %v848 = vpack.c.bf16 %v822, %v821
        %v849 = vpack.c.bf16 %v824, %v823
        %v850 = vpack.c.bf16 %v826, %v825
        %v851 = vpack.c.bf16 %v828, %v827
        %v852 = vpack.c.bf16 %v830, %v829
        %v853 = vpack.c.bf16 %v832, %v831
        %v854 = vpack.c.bf16 %v834, %v833
        %v855 = vpack.c.bf16 %v836, %v835
        %v856 = vpack.c.bf16 %v838, %v837
        %v857 = vpack.c.bf16 %v840, %v839
        %v858 = vpack.c.bf16 %v842, %v841
        %875 = vrot.lane.b32.xlu0 %v843, 32
        %v876 = vpop.permute.xlu0 %875
        %877 = vrot.lane.b32.xlu0 %v844, 32
        %v878 = vpop.permute.xlu0 %877
        %879 = vrot.lane.b32.xlu0 %v845, 32
        %v880 = vpop.permute.xlu0 %879
        %881 = vrot.lane.b32.xlu0 %v846, 32
        %v882 = vpop.permute.xlu0 %881
        %883 = vrot.lane.b32.xlu0 %v847, 32
        %v884 = vpop.permute.xlu0 %883
        %885 = vrot.lane.b32.xlu0 %v848, 32
        %v886 = vpop.permute.xlu0 %885
        %887 = vrot.lane.b32.xlu0 %v849, 32
        %v888 = vpop.permute.xlu0 %887
        %889 = vrot.lane.b32.xlu0 %v850, 32
        %v890 = vpop.permute.xlu0 %889
        %891 = vrot.lane.b32.xlu0 %v851, 32
        %v892 = vpop.permute.xlu0 %891
        %893 = vrot.lane.b32.xlu0 %v852, 32
        %v894 = vpop.permute.xlu0 %893
        %895 = vrot.lane.b32.xlu0 %v853, 32
        %v896 = vpop.permute.xlu0 %895
        %897 = vrot.lane.b32.xlu0 %v854, 32
        %v898 = vpop.permute.xlu0 %897
        %899 = vrot.lane.b32.xlu0 %v855, 32
        %v900 = vpop.permute.xlu0 %899
        %901 = vrot.lane.b32.xlu0 %v856, 32
        %v902 = vpop.permute.xlu0 %901
        %903 = vrot.lane.b32.xlu0 %v857, 32
        %v904 = vpop.permute.xlu0 %903
        %905 = vrot.lane.b32.xlu0 %v858, 32
        %v906 = vpop.permute.xlu0 %905
        %923 = vst.msk [vmem:[#allocation3 + $0x8] sm:$0xff] %vm472, %v876
        %924 = vst.msk [vmem:[#allocation3 + $0x20] sm:$0xff] %vm472, %v878
        %925 = vst.msk [vmem:[#allocation3 + $0x38] sm:$0xff] %vm472, %v880
        %926 = vst.msk [vmem:[#allocation3 + $0x50] sm:$0xff] %vm472, %v882
        %927 = vst.msk [vmem:[#allocation3 + $0x68] sm:$0xff] %vm472, %v884
        %928 = vst.msk [vmem:[#allocation3 + $0x80] sm:$0xff] %vm472, %v886
        %929 = vst.msk [vmem:[#allocation3 + $0x98] sm:$0xff] %vm472, %v888
        %930 = vst.msk [vmem:[#allocation3 + $0xb0] sm:$0xff] %vm472, %v890
        %931 = vst.msk [vmem:[#allocation3 + $0xc8] sm:$0xff] %vm472, %v892
        %932 = vst.msk [vmem:[#allocation3 + $0xe0] sm:$0xff] %vm472, %v894
        %933 = vst.msk [vmem:[#allocation3 + $0xf8] sm:$0xff] %vm472, %v896
        %934 = vst.msk [vmem:[#allocation3 + $0x110] sm:$0xff] %vm472, %v898
        %935 = vst.msk [vmem:[#allocation3 + $0x128] sm:$0xff] %vm472, %v900
        %936 = vst.msk [vmem:[#allocation3 + $0x140] sm:$0xff] %vm472, %v902
        %937 = vst.msk [vmem:[#allocation3 + $0x158] sm:$0xff] %vm472, %v904
        %938 = vst.msk [vmem:[#allocation3 + $0x170] sm:$0xff] %vm472, %v906
        %s939 = scalar_lea.vmem [#allocation2], 48
        %v940 = vld [vmem:[%s939] sm:$0xff]
        %v941 = vld [vmem:[%s939 + $0x8] sm:$0xff]
        %v942 = vld [vmem:[%s939 + $0x18] sm:$0xff]
        %v943 = vld [vmem:[%s939 + $0x20] sm:$0xff]
        %v944 = vld [vmem:[%s939 + $0x30] sm:$0xff]
        %v945 = vld [vmem:[%s939 + $0x38] sm:$0xff]
        %v946 = vld [vmem:[%s939 + $0x48] sm:$0xff]
        %v947 = vld [vmem:[%s939 + $0x50] sm:$0xff]
        %v948 = vld [vmem:[%s939 + $0x60] sm:$0xff]
        %v949 = vld [vmem:[%s939 + $0x68] sm:$0xff]
        %v950 = vld [vmem:[%s939 + $0x78] sm:$0xff]
        %v951 = vld [vmem:[%s939 + $0x80] sm:$0xff]
        %v952 = vld [vmem:[%s939 + $0x90] sm:$0xff]
        %v953 = vld [vmem:[%s939 + $0x98] sm:$0xff]
        %v954 = vld [vmem:[%s939 + $0xa8] sm:$0xff]
        %v955 = vld [vmem:[%s939 + $0xb0] sm:$0xff]
        %v956 = vld [vmem:[%s939 + $0xc0] sm:$0xff]
        %v957 = vld [vmem:[%s939 + $0xc8] sm:$0xff]
        %v958 = vld [vmem:[%s939 + $0xd8] sm:$0xff]
        %v959 = vld [vmem:[%s939 + $0xe0] sm:$0xff]
        %v960 = vld [vmem:[%s939 + $0xf0] sm:$0xff]
        %v961 = vld [vmem:[%s939 + $0xf8] sm:$0xff]
        %v962 = vld [vmem:[%s939 + $0x108] sm:$0xff]
        %v963 = vld [vmem:[%s939 + $0x110] sm:$0xff]
        %v964 = vld [vmem:[%s939 + $0x120] sm:$0xff]
        %v965 = vld [vmem:[%s939 + $0x128] sm:$0xff]
        %v966 = vld [vmem:[%s939 + $0x138] sm:$0xff]
        %v967 = vld [vmem:[%s939 + $0x140] sm:$0xff]
        %v968 = vld [vmem:[%s939 + $0x150] sm:$0xff]
        %v969 = vld [vmem:[%s939 + $0x158] sm:$0xff]
        %v970 = vld [vmem:[%s939 + $0x168] sm:$0xff]
        %v971 = vld [vmem:[%s939 + $0x170] sm:$0xff]
        %v972 = vpack.c.bf16 %v941, %v940
        %v973 = vpack.c.bf16 %v943, %v942
        %v974 = vpack.c.bf16 %v945, %v944
        %v975 = vpack.c.bf16 %v947, %v946
        %v976 = vpack.c.bf16 %v949, %v948
        %v977 = vpack.c.bf16 %v951, %v950
        %v978 = vpack.c.bf16 %v953, %v952
        %v979 = vpack.c.bf16 %v955, %v954
        %v980 = vpack.c.bf16 %v957, %v956
        %v981 = vpack.c.bf16 %v959, %v958
        %v982 = vpack.c.bf16 %v961, %v960
        %v983 = vpack.c.bf16 %v963, %v962
        %v984 = vpack.c.bf16 %v965, %v964
        %v985 = vpack.c.bf16 %v967, %v966
        %v986 = vpack.c.bf16 %v969, %v968
        %v987 = vpack.c.bf16 %v971, %v970
        %1004 = vrot.lane.b32.xlu0 %v972, 64
        %v1005 = vpop.permute.xlu0 %1004
        %1006 = vrot.lane.b32.xlu0 %v973, 64
        %v1007 = vpop.permute.xlu0 %1006
        %1008 = vrot.lane.b32.xlu0 %v974, 64
        %v1009 = vpop.permute.xlu0 %1008
        %1010 = vrot.lane.b32.xlu0 %v975, 64
        %v1011 = vpop.permute.xlu0 %1010
        %1012 = vrot.lane.b32.xlu0 %v976, 64
        %v1013 = vpop.permute.xlu0 %1012
        %1014 = vrot.lane.b32.xlu0 %v977, 64
        %v1015 = vpop.permute.xlu0 %1014
        %1016 = vrot.lane.b32.xlu0 %v978, 64
        %v1017 = vpop.permute.xlu0 %1016
        %1018 = vrot.lane.b32.xlu0 %v979, 64
        %v1019 = vpop.permute.xlu0 %1018
        %1020 = vrot.lane.b32.xlu0 %v980, 64
        %v1021 = vpop.permute.xlu0 %1020
        %1022 = vrot.lane.b32.xlu0 %v981, 64
        %v1023 = vpop.permute.xlu0 %1022
        %1024 = vrot.lane.b32.xlu0 %v982, 64
        %v1025 = vpop.permute.xlu0 %1024
        %1026 = vrot.lane.b32.xlu0 %v983, 64
        %v1027 = vpop.permute.xlu0 %1026
        %1028 = vrot.lane.b32.xlu0 %v984, 64
        %v1029 = vpop.permute.xlu0 %1028
        %1030 = vrot.lane.b32.xlu0 %v985, 64
        %v1031 = vpop.permute.xlu0 %1030
        %1032 = vrot.lane.b32.xlu0 %v986, 64
        %v1033 = vpop.permute.xlu0 %1032
        %1034 = vrot.lane.b32.xlu0 %v987, 64
        %v1035 = vpop.permute.xlu0 %1034
        %1052 = vst.msk [vmem:[#allocation3 + $0x8] sm:$0xff] %vm601, %v1005
        %1053 = vst.msk [vmem:[#allocation3 + $0x20] sm:$0xff] %vm601, %v1007
        %1054 = vst.msk [vmem:[#allocation3 + $0x38] sm:$0xff] %vm601, %v1009
        %1055 = vst.msk [vmem:[#allocation3 + $0x50] sm:$0xff] %vm601, %v1011
        %1056 = vst.msk [vmem:[#allocation3 + $0x68] sm:$0xff] %vm601, %v1013
        %1057 = vst.msk [vmem:[#allocation3 + $0x80] sm:$0xff] %vm601, %v1015
        %1058 = vst.msk [vmem:[#allocation3 + $0x98] sm:$0xff] %vm601, %v1017
        %1059 = vst.msk [vmem:[#allocation3 + $0xb0] sm:$0xff] %vm601, %v1019
        %1060 = vst.msk [vmem:[#allocation3 + $0xc8] sm:$0xff] %vm601, %v1021
        %1061 = vst.msk [vmem:[#allocation3 + $0xe0] sm:$0xff] %vm601, %v1023
        %1062 = vst.msk [vmem:[#allocation3 + $0xf8] sm:$0xff] %vm601, %v1025
        %1063 = vst.msk [vmem:[#allocation3 + $0x110] sm:$0xff] %vm601, %v1027
        %1064 = vst.msk [vmem:[#allocation3 + $0x128] sm:$0xff] %vm601, %v1029
        %1065 = vst.msk [vmem:[#allocation3 + $0x140] sm:$0xff] %vm601, %v1031
        %1066 = vst.msk [vmem:[#allocation3 + $0x158] sm:$0xff] %vm601, %v1033
        %1067 = vst.msk [vmem:[#allocation3 + $0x170] sm:$0xff] %vm601, %v1035
        %v1068 = vld [vmem:[%s939 + $0x1] sm:$0xff]
        %v1069 = vld [vmem:[%s939 + $0x9] sm:$0xff]
        %v1070 = vld [vmem:[%s939 + $0x19] sm:$0xff]
        %v1071 = vld [vmem:[%s939 + $0x21] sm:$0xff]
        %v1072 = vld [vmem:[%s939 + $0x31] sm:$0xff]
        %v1073 = vld [vmem:[%s939 + $0x39] sm:$0xff]
        %v1074 = vld [vmem:[%s939 + $0x49] sm:$0xff]
        %v1075 = vld [vmem:[%s939 + $0x51] sm:$0xff]
        %v1076 = vld [vmem:[%s939 + $0x61] sm:$0xff]
        %v1077 = vld [vmem:[%s939 + $0x69] sm:$0xff]
        %v1078 = vld [vmem:[%s939 + $0x79] sm:$0xff]
        %v1079 = vld [vmem:[%s939 + $0x81] sm:$0xff]
        %v1080 = vld [vmem:[%s939 + $0x91] sm:$0xff]
        %v1081 = vld [vmem:[%s939 + $0x99] sm:$0xff]
        %v1082 = vld [vmem:[%s939 + $0xa9] sm:$0xff]
        %v1083 = vld [vmem:[%s939 + $0xb1] sm:$0xff]
        %v1084 = vld [vmem:[%s939 + $0xc1] sm:$0xff]
        %v1085 = vld [vmem:[%s939 + $0xc9] sm:$0xff]
        %v1086 = vld [vmem:[%s939 + $0xd9] sm:$0xff]
        %v1087 = vld [vmem:[%s939 + $0xe1] sm:$0xff]
        %v1088 = vld [vmem:[%s939 + $0xf1] sm:$0xff]
        %v1089 = vld [vmem:[%s939 + $0xf9] sm:$0xff]
        %v1090 = vld [vmem:[%s939 + $0x109] sm:$0xff]
        %v1091 = vld [vmem:[%s939 + $0x111] sm:$0xff]
        %v1092 = vld [vmem:[%s939 + $0x121] sm:$0xff]
        %v1093 = vld [vmem:[%s939 + $0x129] sm:$0xff]
        %v1094 = vld [vmem:[%s939 + $0x139] sm:$0xff]
        %v1095 = vld [vmem:[%s939 + $0x141] sm:$0xff]
        %v1096 = vld [vmem:[%s939 + $0x151] sm:$0xff]
        %v1097 = vld [vmem:[%s939 + $0x159] sm:$0xff]
        %v1098 = vld [vmem:[%s939 + $0x169] sm:$0xff]
        %v1099 = vld [vmem:[%s939 + $0x171] sm:$0xff]
        %v1100 = vpack.c.bf16 %v1069, %v1068
        %v1101 = vpack.c.bf16 %v1071, %v1070
        %v1102 = vpack.c.bf16 %v1073, %v1072
        %v1103 = vpack.c.bf16 %v1075, %v1074
        %v1104 = vpack.c.bf16 %v1077, %v1076
        %v1105 = vpack.c.bf16 %v1079, %v1078
        %v1106 = vpack.c.bf16 %v1081, %v1080
        %v1107 = vpack.c.bf16 %v1083, %v1082
        %v1108 = vpack.c.bf16 %v1085, %v1084
        %v1109 = vpack.c.bf16 %v1087, %v1086
        %v1110 = vpack.c.bf16 %v1089, %v1088
        %v1111 = vpack.c.bf16 %v1091, %v1090
        %v1112 = vpack.c.bf16 %v1093, %v1092
        %v1113 = vpack.c.bf16 %v1095, %v1094
        %v1114 = vpack.c.bf16 %v1097, %v1096
        %v1115 = vpack.c.bf16 %v1099, %v1098
        %1132 = vrot.lane.b32.xlu0 %v1100, 96
        %v1133 = vpop.permute.xlu0 %1132
        %1134 = vrot.lane.b32.xlu0 %v1101, 96
        %v1135 = vpop.permute.xlu0 %1134
        %1136 = vrot.lane.b32.xlu0 %v1102, 96
        %v1137 = vpop.permute.xlu0 %1136
        %1138 = vrot.lane.b32.xlu0 %v1103, 96
        %v1139 = vpop.permute.xlu0 %1138
        %1140 = vrot.lane.b32.xlu0 %v1104, 96
        %v1141 = vpop.permute.xlu0 %1140
        %1142 = vrot.lane.b32.xlu0 %v1105, 96
        %v1143 = vpop.permute.xlu0 %1142
        %1144 = vrot.lane.b32.xlu0 %v1106, 96
        %v1145 = vpop.permute.xlu0 %1144
        %1146 = vrot.lane.b32.xlu0 %v1107, 96
        %v1147 = vpop.permute.xlu0 %1146
        %1148 = vrot.lane.b32.xlu0 %v1108, 96
        %v1149 = vpop.permute.xlu0 %1148
        %1150 = vrot.lane.b32.xlu0 %v1109, 96
        %v1151 = vpop.permute.xlu0 %1150
        %1152 = vrot.lane.b32.xlu0 %v1110, 96
        %v1153 = vpop.permute.xlu0 %1152
        %1154 = vrot.lane.b32.xlu0 %v1111, 96
        %v1155 = vpop.permute.xlu0 %1154
        %1156 = vrot.lane.b32.xlu0 %v1112, 96
        %v1157 = vpop.permute.xlu0 %1156
        %1158 = vrot.lane.b32.xlu0 %v1113, 96
        %v1159 = vpop.permute.xlu0 %1158
        %1160 = vrot.lane.b32.xlu0 %v1114, 96
        %v1161 = vpop.permute.xlu0 %1160
        %1162 = vrot.lane.b32.xlu0 %v1115, 96
        %v1163 = vpop.permute.xlu0 %1162
        %1180 = vst.msk [vmem:[#allocation3 + $0x8] sm:$0xff] %vm730, %v1133
        %1181 = vst.msk [vmem:[#allocation3 + $0x20] sm:$0xff] %vm730, %v1135
        %1182 = vst.msk [vmem:[#allocation3 + $0x38] sm:$0xff] %vm730, %v1137
        %1183 = vst.msk [vmem:[#allocation3 + $0x50] sm:$0xff] %vm730, %v1139
        %1184 = vst.msk [vmem:[#allocation3 + $0x68] sm:$0xff] %vm730, %v1141
        %1185 = vst.msk [vmem:[#allocation3 + $0x80] sm:$0xff] %vm730, %v1143
        %1186 = vst.msk [vmem:[#allocation3 + $0x98] sm:$0xff] %vm730, %v1145
        %1187 = vst.msk [vmem:[#allocation3 + $0xb0] sm:$0xff] %vm730, %v1147
        %1188 = vst.msk [vmem:[#allocation3 + $0xc8] sm:$0xff] %vm730, %v1149
        %1189 = vst.msk [vmem:[#allocation3 + $0xe0] sm:$0xff] %vm730, %v1151
        %1190 = vst.msk [vmem:[#allocation3 + $0xf8] sm:$0xff] %vm730, %v1153
        %1191 = vst.msk [vmem:[#allocation3 + $0x110] sm:$0xff] %vm730, %v1155
        %1192 = vst.msk [vmem:[#allocation3 + $0x128] sm:$0xff] %vm730, %v1157
        %1193 = vst.msk [vmem:[#allocation3 + $0x140] sm:$0xff] %vm730, %v1159
        %1194 = vst.msk [vmem:[#allocation3 + $0x158] sm:$0xff] %vm730, %v1161
        %1195 = vst.msk [vmem:[#allocation3 + $0x170] sm:$0xff] %vm730, %v1163
        %v1196 = vld [vmem:[%s939 + $0x2] sm:$0xff]
        %v1197 = vld [vmem:[%s939 + $0xa] sm:$0xff]
        %v1198 = vld [vmem:[%s939 + $0x1a] sm:$0xff]
        %v1199 = vld [vmem:[%s939 + $0x22] sm:$0xff]
        %v1200 = vld [vmem:[%s939 + $0x32] sm:$0xff]
        %v1201 = vld [vmem:[%s939 + $0x3a] sm:$0xff]
        %v1202 = vld [vmem:[%s939 + $0x4a] sm:$0xff]
        %v1203 = vld [vmem:[%s939 + $0x52] sm:$0xff]
        %v1204 = vld [vmem:[%s939 + $0x62] sm:$0xff]
        %v1205 = vld [vmem:[%s939 + $0x6a] sm:$0xff]
        %v1206 = vld [vmem:[%s939 + $0x7a] sm:$0xff]
        %v1207 = vld [vmem:[%s939 + $0x82] sm:$0xff]
        %v1208 = vld [vmem:[%s939 + $0x92] sm:$0xff]
        %v1209 = vld [vmem:[%s939 + $0x9a] sm:$0xff]
        %v1210 = vld [vmem:[%s939 + $0xaa] sm:$0xff]
        %v1211 = vld [vmem:[%s939 + $0xb2] sm:$0xff]
        %v1212 = vld [vmem:[%s939 + $0xc2] sm:$0xff]
        %v1213 = vld [vmem:[%s939 + $0xca] sm:$0xff]
        %v1214 = vld [vmem:[%s939 + $0xda] sm:$0xff]
        %v1215 = vld [vmem:[%s939 + $0xe2] sm:$0xff]
        %v1216 = vld [vmem:[%s939 + $0xf2] sm:$0xff]
        %v1217 = vld [vmem:[%s939 + $0xfa] sm:$0xff]
        %v1218 = vld [vmem:[%s939 + $0x10a] sm:$0xff]
        %v1219 = vld [vmem:[%s939 + $0x112] sm:$0xff]
        %v1220 = vld [vmem:[%s939 + $0x122] sm:$0xff]
        %v1221 = vld [vmem:[%s939 + $0x12a] sm:$0xff]
        %v1222 = vld [vmem:[%s939 + $0x13a] sm:$0xff]
        %v1223 = vld [vmem:[%s939 + $0x142] sm:$0xff]
        %v1224 = vld [vmem:[%s939 + $0x152] sm:$0xff]
        %v1225 = vld [vmem:[%s939 + $0x15a] sm:$0xff]
        %v1226 = vld [vmem:[%s939 + $0x16a] sm:$0xff]
        %v1227 = vld [vmem:[%s939 + $0x172] sm:$0xff]
        %v1228 = vpack.c.bf16 %v1197, %v1196
        %v1229 = vpack.c.bf16 %v1199, %v1198
        %v1230 = vpack.c.bf16 %v1201, %v1200
        %v1231 = vpack.c.bf16 %v1203, %v1202
        %v1232 = vpack.c.bf16 %v1205, %v1204
        %v1233 = vpack.c.bf16 %v1207, %v1206
        %v1234 = vpack.c.bf16 %v1209, %v1208
        %v1235 = vpack.c.bf16 %v1211, %v1210
        %v1236 = vpack.c.bf16 %v1213, %v1212
        %v1237 = vpack.c.bf16 %v1215, %v1214
        %v1238 = vpack.c.bf16 %v1217, %v1216
        %v1239 = vpack.c.bf16 %v1219, %v1218
        %v1240 = vpack.c.bf16 %v1221, %v1220
        %v1241 = vpack.c.bf16 %v1223, %v1222
        %v1242 = vpack.c.bf16 %v1225, %v1224
        %v1243 = vpack.c.bf16 %v1227, %v1226
        %1244 = vst.msk [vmem:[#allocation3 + $0x10] sm:$0xff] %vm263, %v1228
        %1245 = vst.msk [vmem:[#allocation3 + $0x28] sm:$0xff] %vm263, %v1229
        %1246 = vst.msk [vmem:[#allocation3 + $0x40] sm:$0xff] %vm263, %v1230
        %1247 = vst.msk [vmem:[#allocation3 + $0x58] sm:$0xff] %vm263, %v1231
        %1248 = vst.msk [vmem:[#allocation3 + $0x70] sm:$0xff] %vm263, %v1232
        %1249 = vst.msk [vmem:[#allocation3 + $0x88] sm:$0xff] %vm263, %v1233
        %1250 = vst.msk [vmem:[#allocation3 + $0xa0] sm:$0xff] %vm263, %v1234
        %1251 = vst.msk [vmem:[#allocation3 + $0xb8] sm:$0xff] %vm263, %v1235
        %1252 = vst.msk [vmem:[#allocation3 + $0xd0] sm:$0xff] %vm263, %v1236
        %1253 = vst.msk [vmem:[#allocation3 + $0xe8] sm:$0xff] %vm263, %v1237
        %1254 = vst.msk [vmem:[#allocation3 + $0x100] sm:$0xff] %vm263, %v1238
        %1255 = vst.msk [vmem:[#allocation3 + $0x118] sm:$0xff] %vm263, %v1239
        %1256 = vst.msk [vmem:[#allocation3 + $0x130] sm:$0xff] %vm263, %v1240
        %1257 = vst.msk [vmem:[#allocation3 + $0x148] sm:$0xff] %vm263, %v1241
        %1258 = vst.msk [vmem:[#allocation3 + $0x160] sm:$0xff] %vm263, %v1242
        %1259 = vst.msk [vmem:[#allocation3 + $0x178] sm:$0xff] %vm263, %v1243
        %v1260 = vld [vmem:[#allocation3] sm:$0xff]
        %v1261 = vld [vmem:[#allocation3 + $0x8] sm:$0xff]
        %v1262 = vld [vmem:[#allocation3 + $0x10] sm:$0xff]
        %v1263 = vld [vmem:[#allocation3 + $0x18] sm:$0xff]
        %v1264 = vld [vmem:[#allocation3 + $0x20] sm:$0xff]
        %v1265 = vld [vmem:[#allocation3 + $0x28] sm:$0xff]
        %v1266 = vld [vmem:[#allocation3 + $0x30] sm:$0xff]
        %v1267 = vld [vmem:[#allocation3 + $0x38] sm:$0xff]
        %v1268 = vld [vmem:[#allocation3 + $0x40] sm:$0xff]
        %v1269 = vld [vmem:[#allocation3 + $0x48] sm:$0xff]
        %v1270 = vld [vmem:[#allocation3 + $0x50] sm:$0xff]
        %v1271 = vld [vmem:[#allocation3 + $0x58] sm:$0xff]
        %v1272 = vld [vmem:[#allocation3 + $0x60] sm:$0xff]
        %v1273 = vld [vmem:[#allocation3 + $0x68] sm:$0xff]
        %v1274 = vld [vmem:[#allocation3 + $0x70] sm:$0xff]
        %v1275 = vld [vmem:[#allocation3 + $0x78] sm:$0xff]
        %v1276 = vld [vmem:[#allocation3 + $0x80] sm:$0xff]
        %v1277 = vld [vmem:[#allocation3 + $0x88] sm:$0xff]
        %v1278 = vld [vmem:[#allocation3 + $0x90] sm:$0xff]
        %v1279 = vld [vmem:[#allocation3 + $0x98] sm:$0xff]
        %v1280 = vld [vmem:[#allocation3 + $0xa0] sm:$0xff]
        %v1281 = vld [vmem:[#allocation3 + $0xa8] sm:$0xff]
        %v1282 = vld [vmem:[#allocation3 + $0xb0] sm:$0xff]
        %v1283 = vld [vmem:[#allocation3 + $0xb8] sm:$0xff]
        %v1284 = vld [vmem:[#allocation3 + $0xc0] sm:$0xff]
        %v1285 = vld [vmem:[#allocation3 + $0xc8] sm:$0xff]
        %v1286 = vld [vmem:[#allocation3 + $0xd0] sm:$0xff]
        %v1287 = vld [vmem:[#allocation3 + $0xd8] sm:$0xff]
        %v1288 = vld [vmem:[#allocation3 + $0xe0] sm:$0xff]
        %v1289 = vld [vmem:[#allocation3 + $0xe8] sm:$0xff]
        %v1290 = vld [vmem:[#allocation3 + $0xf0] sm:$0xff]
        %v1291 = vld [vmem:[#allocation3 + $0xf8] sm:$0xff]
        %v1292 = vld [vmem:[#allocation3 + $0x100] sm:$0xff]
        %v1293 = vld [vmem:[#allocation3 + $0x108] sm:$0xff]
        %v1294 = vld [vmem:[#allocation3 + $0x110] sm:$0xff]
        %v1295 = vld [vmem:[#allocation3 + $0x118] sm:$0xff]
        %v1296 = vld [vmem:[#allocation3 + $0x120] sm:$0xff]
        %v1297 = vld [vmem:[#allocation3 + $0x128] sm:$0xff]
        %v1298 = vld [vmem:[#allocation3 + $0x130] sm:$0xff]
        %v1299 = vld [vmem:[#allocation3 + $0x138] sm:$0xff]
        %v1300 = vld [vmem:[#allocation3 + $0x140] sm:$0xff]
        %v1301 = vld [vmem:[#allocation3 + $0x148] sm:$0xff]
        %v1302 = vld [vmem:[#allocation3 + $0x150] sm:$0xff]
        %v1303 = vld [vmem:[#allocation3 + $0x158] sm:$0xff]
        %v1304 = vld [vmem:[#allocation3 + $0x160] sm:$0xff]
        %v1305 = vld [vmem:[#allocation3 + $0x168] sm:$0xff]
        %v1306 = vld [vmem:[#allocation3 + $0x170] sm:$0xff]
        %v1307 = vld [vmem:[#allocation3 + $0x178] sm:$0xff]
        %v1308 = vld [vmem:[%s1] sm:$0xf]
        %v1309 = vld [vmem:[%s1 + $0x4] sm:$0xf]
        %v1310 = vld [vmem:[%s1 + $0x8] sm:$0xf]
        %v1311 = vld [vmem:[%s1 + $0xc] sm:$0xf]
        %v1312 = vld [vmem:[%s1 + $0x10] sm:$0xf]
        %v1313 = vld [vmem:[%s1 + $0x14] sm:$0xf]
        %v1314 = vld [vmem:[%s1 + $0x18] sm:$0xf]
        %v1315 = vld [vmem:[%s1 + $0x1c] sm:$0xf]
        %v1316 = vld [vmem:[%s1 + $0x20] sm:$0xf]
        %v1317 = vld [vmem:[%s1 + $0x24] sm:$0xf]
        %v1318 = vld [vmem:[%s1 + $0x28] sm:$0xf]
        %v1319 = vld [vmem:[%s1 + $0x2c] sm:$0xf]
        %v1320 = vld [vmem:[%s1 + $0x30] sm:$0xf]
        %v1321 = vld [vmem:[%s1 + $0x34] sm:$0xf]
        %v1322 = vld [vmem:[%s1 + $0x38] sm:$0xf]
        %v1323 = vld [vmem:[%s1 + $0x3c] sm:$0xf]
        %v1324 = vld [vmem:[%s1 + $0x40] sm:$0xf]
        %v1325 = vld [vmem:[%s1 + $0x44] sm:$0xf]
        %v1326 = vld [vmem:[%s1 + $0x48] sm:$0xf]
        %v1327 = vld [vmem:[%s1 + $0x4c] sm:$0xf]
        %v1328 = vld [vmem:[%s1 + $0x50] sm:$0xf]
        %v1329 = vld [vmem:[%s1 + $0x54] sm:$0xf]
        %v1330 = vld [vmem:[%s1 + $0x58] sm:$0xf]
        %v1331 = vld [vmem:[%s1 + $0x5c] sm:$0xf]
        %v1332 = vld [vmem:[%s1 + $0x60] sm:$0xf]
        %v1333 = vld [vmem:[%s1 + $0x64] sm:$0xf]
        %v1334 = vld [vmem:[%s1 + $0x68] sm:$0xf]
        %v1335 = vld [vmem:[%s1 + $0x6c] sm:$0xf]
        %v1336 = vld [vmem:[%s1 + $0x70] sm:$0xf]
        %v1337 = vld [vmem:[%s1 + $0x74] sm:$0xf]
        %v1338 = vld [vmem:[%s1 + $0x78] sm:$0xf]
        %v1339 = vld [vmem:[%s1 + $0x7c] sm:$0xf]
        %v1340 = vld [vmem:[%s1 + $0x80] sm:$0xf]
        %v1341 = vld [vmem:[%s1 + $0x84] sm:$0xf]
        %v1342 = vld [vmem:[%s1 + $0x88] sm:$0xf]
        %v1343 = vld [vmem:[%s1 + $0x8c] sm:$0xf]
        %v1344 = vld [vmem:[%s2] sm:$0x1]
        %v1345 = vlaneseq
        %v1346 = vshrl.u32 %v1345, 7
        %v1347 = vsub.s32 0, %v1346
        %v1348 = vrot.slane %v1344, %v1347
        %v1385 = vunpack.c.l.b16 %v1308
        %v1386 = vunpack.c.l.b16 %v1309
        %v1387 = vunpack.c.l.b16 %v1310
        %v1388 = vunpack.c.l.b16 %v1311
        %v1389 = vunpack.c.l.b16 %v1312
        %v1390 = vunpack.c.l.b16 %v1313
        %v1391 = vunpack.c.l.b16 %v1314
        %v1392 = vunpack.c.l.b16 %v1315
        %v1393 = vunpack.c.l.b16 %v1316
        %v1394 = vunpack.c.l.b16 %v1317
        %v1395 = vunpack.c.l.b16 %v1318
        %v1396 = vunpack.c.l.b16 %v1319
        %v1397 = vunpack.c.l.b16 %v1320
        %v1398 = vunpack.c.l.b16 %v1321
        %v1399 = vunpack.c.l.b16 %v1322
        %v1400 = vunpack.c.l.b16 %v1323
        %v1401 = vunpack.c.l.b16 %v1324
        %v1402 = vunpack.c.l.b16 %v1325
        %v1403 = vunpack.c.l.b16 %v1326
        %v1404 = vunpack.c.l.b16 %v1327
        %v1405 = vunpack.c.l.b16 %v1328
        %v1406 = vunpack.c.l.b16 %v1329
        %v1407 = vunpack.c.l.b16 %v1330
        %v1408 = vunpack.c.l.b16 %v1331
        %v1409 = vunpack.c.l.b16 %v1332
        %v1410 = vunpack.c.l.b16 %v1333
        %v1411 = vunpack.c.l.b16 %v1334
        %v1412 = vunpack.c.l.b16 %v1335
        %v1413 = vunpack.c.l.b16 %v1336
        %v1414 = vunpack.c.l.b16 %v1337
        %v1415 = vunpack.c.l.b16 %v1338
        %v1416 = vunpack.c.l.b16 %v1339
        %v1417 = vunpack.c.l.b16 %v1340
        %v1418 = vunpack.c.l.b16 %v1341
        %v1419 = vunpack.c.l.b16 %v1342
        %v1420 = vunpack.c.l.b16 %v1343
        %v1421 = vpack.c.b16 %v1386, %v1385
        %v1422 = vpack.c.b16 %v1388, %v1387
        %v1423 = vpack.c.b16 %v1390, %v1389
        %v1424 = vpack.c.b16 %v1392, %v1391
        %v1425 = vpack.c.b16 %v1394, %v1393
        %v1426 = vpack.c.b16 %v1396, %v1395
        %v1427 = vpack.c.b16 %v1398, %v1397
        %v1428 = vpack.c.b16 %v1400, %v1399
        %v1429 = vpack.c.b16 %v1402, %v1401
        %v1430 = vpack.c.b16 %v1404, %v1403
        %v1431 = vpack.c.b16 %v1406, %v1405
        %v1432 = vpack.c.b16 %v1408, %v1407
        %v1433 = vpack.c.b16 %v1410, %v1409
        %v1434 = vpack.c.b16 %v1412, %v1411
        %v1435 = vpack.c.b16 %v1414, %v1413
        %v1436 = vpack.c.b16 %v1416, %v1415
        %v1437 = vpack.c.b16 %v1418, %v1417
        %v1438 = vpack.c.b16 %v1420, %v1419
        %v1458 = vsel %vm263, %v1262, 0
        %v1461 = vsel %vm263, %v1265, 0
        %v1464 = vsel %vm263, %v1268, 0
        %v1467 = vsel %vm263, %v1271, 0
        %v1470 = vsel %vm263, %v1274, 0
        %v1473 = vsel %vm263, %v1277, 0
        %v1476 = vsel %vm263, %v1280, 0
        %v1479 = vsel %vm263, %v1283, 0
        %v1482 = vsel %vm263, %v1286, 0
        %v1485 = vsel %vm263, %v1289, 0
        %v1488 = vsel %vm263, %v1292, 0
        %v1491 = vsel %vm263, %v1295, 0
        %v1494 = vsel %vm263, %v1298, 0
        %v1497 = vsel %vm263, %v1301, 0
        %v1500 = vsel %vm263, %v1304, 0
        %v1503 = vsel %vm263, %v1307, 0
        %1505 = vmatprep.subr.bf16.mxu0 0
        %1506 = vmatpush1.bf16.msra.mxu0 %v1421
        %1507 = vmatprep.subr.bf16.mxu0 0
        %1508 = vmatpush1.bf16.msra.mxu0 %v1422
        %1509 = vmatprep.subr.bf16.mxu0 0
        %1510 = vmatpush1.bf16.msra.mxu0 %v1423
        %1511 = vmatprep.subr.bf16.mxu0 0
        %1512 = vmatpush1.bf16.msra.mxu0 %v1424
        %1513 = vmatprep.subr.bf16.mxu0 0
        %1514 = vmatpush1.bf16.msra.mxu0 %v1425
        %1515 = vmatprep.subr.bf16.mxu0 0
        %1516 = vmatpush1.bf16.msra.mxu0 %v1426
        %1517 = vmatprep.subr.bf16.mxu0 0
        %1518 = vmatpush1.bf16.msra.mxu0 %v1427
        %1519 = vmatprep.subr.bf16.mxu0 0
        %1520 = vmatpush1.bf16.msra.mxu0 %v1428
        %1521 = vmatprep.subr.bf16.mxu0 0
        %1522 = vmatpush1.bf16.msra.mxu0 %v1429
        %1523 = vmatprep.subr.bf16.mxu0 0
        %1524 = vmatpush1.bf16.msra.mxu0 %v1430
        %1525 = vmatprep.subr.bf16.mxu0 0
        %1526 = vmatpush1.bf16.msra.mxu0 %v1431
        %1527 = vmatprep.subr.bf16.mxu0 0
        %1528 = vmatpush1.bf16.msra.mxu0 %v1432
        %1529 = vmatprep.subr.bf16.mxu0 0
        %1530 = vmatpush1.bf16.msra.mxu0 %v1433
        %1531 = vmatprep.subr.bf16.mxu0 0
        %1532 = vmatpush1.bf16.msra.mxu0 %v1434
        %1533 = vmatprep.subr.bf16.mxu0 0
        %1534 = vmatpush1.bf16.msra.mxu0 %v1435
        %1535 = vmatprep.subr.bf16.mxu0 0
        %1536 = vmatpush1.bf16.msra.mxu0 %v1436
        %1537 = vmatprep.mubr.bf16.mxu0 %v1261
        %1538 = vmatmul.mubr.bf16.gmra.mrb[0].mxu0 %v1260
        %v1539 = vpop.f32.mrb[0].mxu0
        %v1540 = vadd.f32 %v1348, %v1539
        %v1541 = vpop.f32.mrb[0].mxu0
        %v1542 = vpop.f32.mrb[0].mxu0
        %v1543 = vadd.f32 %v1348, %v1542
        %v1544 = vpop.f32.mrb[0].mxu0
        %1545 = vmatprep.mubr.bf16.mxu0 %v1264
        %1546 = vmatmul.mubr.bf16.gmra.mrb[0].mxu0 %v1263
        %v1547 = vpop.f32.mrb[0].mxu0
        %v1548 = vadd.f32 %v1348, %v1547
        %v1549 = vpop.f32.mrb[0].mxu0
        %v1550 = vpop.f32.mrb[0].mxu0
        %v1551 = vadd.f32 %v1348, %v1550
        %v1552 = vpop.f32.mrb[0].mxu0
        %1553 = vmatprep.mubr.bf16.mxu0 %v1267
        %1554 = vmatmul.mubr.bf16.gmra.mrb[0].mxu0 %v1266
        %v1555 = vpop.f32.mrb[0].mxu0
        %v1556 = vadd.f32 %v1348, %v1555
        %v1557 = vpop.f32.mrb[0].mxu0
        %v1558 = vpop.f32.mrb[0].mxu0
        %v1559 = vadd.f32 %v1348, %v1558
        %v1560 = vpop.f32.mrb[0].mxu0
        %1561 = vmatprep.mubr.bf16.mxu0 %v1270
        %1562 = vmatmul.mubr.bf16.gmra.mrb[0].mxu0 %v1269
        %v1563 = vpop.f32.mrb[0].mxu0
        %v1564 = vadd.f32 %v1348, %v1563
        %v1565 = vpop.f32.mrb[0].mxu0
        %v1566 = vpop.f32.mrb[0].mxu0
        %v1567 = vadd.f32 %v1348, %v1566
        %v1568 = vpop.f32.mrb[0].mxu0
        %1569 = vmatprep.mubr.bf16.mxu0 %v1273
        %1570 = vmatmul.mubr.bf16.gmra.mrb[0].mxu0 %v1272
        %v1571 = vpop.f32.mrb[0].mxu0
        %v1572 = vadd.f32 %v1348, %v1571
        %v1573 = vpop.f32.mrb[0].mxu0
        %v1574 = vpop.f32.mrb[0].mxu0
        %v1575 = vadd.f32 %v1348, %v1574
        %v1576 = vpop.f32.mrb[0].mxu0
        %1577 = vmatprep.mubr.bf16.mxu0 %v1276
        %1578 = vmatmul.mubr.bf16.gmra.mrb[0].mxu0 %v1275
        %v1579 = vpop.f32.mrb[0].mxu0
        %v1580 = vadd.f32 %v1348, %v1579
        %v1581 = vpop.f32.mrb[0].mxu0
        %v1582 = vpop.f32.mrb[0].mxu0
        %v1583 = vadd.f32 %v1348, %v1582
        %v1584 = vpop.f32.mrb[0].mxu0
        %1585 = vmatprep.mubr.bf16.mxu0 %v1279
        %1586 = vmatmul.mubr.bf16.gmra.mrb[0].mxu0 %v1278
        %v1587 = vpop.f32.mrb[0].mxu0
        %v1588 = vadd.f32 %v1348, %v1587
        %v1589 = vpop.f32.mrb[0].mxu0
        %v1590 = vpop.f32.mrb[0].mxu0
        %v1591 = vadd.f32 %v1348, %v1590
        %v1592 = vpop.f32.mrb[0].mxu0
        %1593 = vmatprep.mubr.bf16.mxu0 %v1282
        %1594 = vmatmul.mubr.bf16.gmra.mrb[0].mxu0 %v1281
        %v1595 = vpop.f32.mrb[0].mxu0
        %v1596 = vadd.f32 %v1348, %v1595
        %v1597 = vpop.f32.mrb[0].mxu0
        %v1598 = vpop.f32.mrb[0].mxu0
        %v1599 = vadd.f32 %v1348, %v1598
        %v1600 = vpop.f32.mrb[0].mxu0
        %1601 = vmatprep.mubr.bf16.mxu0 %v1285
        %1602 = vmatmul.mubr.bf16.gmra.mrb[0].mxu0 %v1284
        %v1603 = vpop.f32.mrb[0].mxu0
        %v1604 = vadd.f32 %v1348, %v1603
        %v1605 = vpop.f32.mrb[0].mxu0
        %v1606 = vpop.f32.mrb[0].mxu0
        %v1607 = vadd.f32 %v1348, %v1606
        %v1608 = vpop.f32.mrb[0].mxu0
        %1609 = vmatprep.mubr.bf16.mxu0 %v1288
        %1610 = vmatmul.mubr.bf16.gmra.mrb[0].mxu0 %v1287
        %v1611 = vpop.f32.mrb[0].mxu0
        %v1612 = vadd.f32 %v1348, %v1611
        %v1613 = vpop.f32.mrb[0].mxu0
        %v1614 = vpop.f32.mrb[0].mxu0
        %v1615 = vadd.f32 %v1348, %v1614
        %v1616 = vpop.f32.mrb[0].mxu0
        %1617 = vmatprep.mubr.bf16.mxu0 %v1291
        %1618 = vmatmul.mubr.bf16.gmra.mrb[0].mxu0 %v1290
        %v1619 = vpop.f32.mrb[0].mxu0
        %v1620 = vadd.f32 %v1348, %v1619
        %v1621 = vpop.f32.mrb[0].mxu0
        %v1622 = vpop.f32.mrb[0].mxu0
        %v1623 = vadd.f32 %v1348, %v1622
        %v1624 = vpop.f32.mrb[0].mxu0
        %1625 = vmatprep.mubr.bf16.mxu0 %v1294
        %1626 = vmatmul.mubr.bf16.gmra.mrb[0].mxu0 %v1293
        %v1627 = vpop.f32.mrb[0].mxu0
        %v1628 = vadd.f32 %v1348, %v1627
        %v1629 = vpop.f32.mrb[0].mxu0
        %v1630 = vpop.f32.mrb[0].mxu0
        %v1631 = vadd.f32 %v1348, %v1630
        %v1632 = vpop.f32.mrb[0].mxu0
        %1633 = vmatprep.mubr.bf16.mxu0 %v1297
        %1634 = vmatmul.mubr.bf16.gmra.mrb[0].mxu0 %v1296
        %v1635 = vpop.f32.mrb[0].mxu0
        %v1636 = vadd.f32 %v1348, %v1635
        %v1637 = vpop.f32.mrb[0].mxu0
        %v1638 = vpop.f32.mrb[0].mxu0
        %v1639 = vadd.f32 %v1348, %v1638
        %v1640 = vpop.f32.mrb[0].mxu0
        %1641 = vmatprep.mubr.bf16.mxu0 %v1300
        %1642 = vmatmul.mubr.bf16.gmra.mrb[0].mxu0 %v1299
        %v1643 = vpop.f32.mrb[0].mxu0
        %v1644 = vadd.f32 %v1348, %v1643
        %v1645 = vpop.f32.mrb[0].mxu0
        %v1646 = vpop.f32.mrb[0].mxu0
        %v1647 = vadd.f32 %v1348, %v1646
        %v1648 = vpop.f32.mrb[0].mxu0
        %1649 = vmatprep.mubr.bf16.mxu0 %v1303
        %1650 = vmatmul.mubr.bf16.gmra.mrb[0].mxu0 %v1302
        %v1651 = vpop.f32.mrb[0].mxu0
        %v1652 = vadd.f32 %v1348, %v1651
        %v1653 = vpop.f32.mrb[0].mxu0
        %v1654 = vpop.f32.mrb[0].mxu0
        %v1655 = vadd.f32 %v1348, %v1654
        %v1656 = vpop.f32.mrb[0].mxu0
        %1657 = vmatprep.mubr.bf16.mxu0 %v1306
        %1658 = vmatmul.mubr.bf16.gmra.mrb[0].mxu0 %v1305
        %v1659 = vpop.f32.mrb[0].mxu0
        %v1660 = vadd.f32 %v1348, %v1659
        %v1661 = vpop.f32.mrb[0].mxu0
        %v1662 = vpop.f32.mrb[0].mxu0
        %v1663 = vadd.f32 %v1348, %v1662
        %v1664 = vpop.f32.mrb[0].mxu0
        %1665 = vdwg.mxu0
        %1666 = vmatprep.subr.bf16.mxu0 0
        %1667 = vmatpush1.bf16.msra.mxu0 %v1437
        %1668 = vmatprep.subr.bf16.mxu0 0
        %1669 = vmatpush1.bf16.msra.mxu0 %v1438
        %1670 = vmatprep.subr.bf16.mxu0 0
        %1671 = vmatpush1.bf16.msra.mxu0 0
        %1672 = vmatprep.subr.bf16.mxu0 0
        %1673 = vmatpush1.bf16.msra.mxu0 0
        %1674 = vmatprep.subr.bf16.mxu0 0
        %1675 = vmatpush1.bf16.msra.mxu0 0
        %1676 = vmatprep.subr.bf16.mxu0 0
        %1677 = vmatpush1.bf16.msra.mxu0 0
        %1678 = vmatprep.subr.bf16.mxu0 0
        %1679 = vmatpush1.bf16.msra.mxu0 0
        %1680 = vmatprep.subr.bf16.mxu0 0
        %1681 = vmatpush1.bf16.msra.mxu0 0
        %1682 = vmatprep.subr.bf16.mxu0 0
        %1683 = vmatpush1.bf16.msra.mxu0 0
        %1684 = vmatprep.subr.bf16.mxu0 0
        %1685 = vmatpush1.bf16.msra.mxu0 0
        %1686 = vmatprep.subr.bf16.mxu0 0
        %1687 = vmatpush1.bf16.msra.mxu0 0
        %1688 = vmatprep.subr.bf16.mxu0 0
        %1689 = vmatpush1.bf16.msra.mxu0 0
        %1690 = vmatprep.subr.bf16.mxu0 0
        %1691 = vmatpush1.bf16.msra.mxu0 0
        %1692 = vmatprep.subr.bf16.mxu0 0
        %1693 = vmatpush1.bf16.msra.mxu0 0
        %1694 = vmatprep.subr.bf16.mxu0 0
        %1695 = vmatpush1.bf16.msra.mxu0 0
        %1696 = vmatprep.subr.bf16.mxu0 0
        %1697 = vmatpush1.bf16.msra.mxu0 0
        %1698 = vmatprep.mubr.bf16.mxu0 0
        %1699 = vmatmul.mubr.bf16.gmra.mrb[0].mxu0 %v1458
        %v1700 = vpop.f32.mrb[0].mxu0
        %v1701 = vadd.f32 %v1540, %v1700
        %v1702 = vpop.f32.mrb[0].mxu0
        %v1703 = vpop.f32.mrb[0].mxu0
        %v1704 = vadd.f32 %v1543, %v1703
        %v1705 = vpop.f32.mrb[0].mxu0
        %1706 = vmatprep.mubr.bf16.mxu0 0
        %1707 = vmatmul.mubr.bf16.gmra.mrb[0].mxu0 %v1461
        %v1708 = vpop.f32.mrb[0].mxu0
        %v1709 = vadd.f32 %v1548, %v1708
        %v1710 = vpop.f32.mrb[0].mxu0
        %v1711 = vpop.f32.mrb[0].mxu0
        %v1712 = vadd.f32 %v1551, %v1711
        %v1713 = vpop.f32.mrb[0].mxu0
        %1714 = vmatprep.mubr.bf16.mxu0 0
        %1715 = vmatmul.mubr.bf16.gmra.mrb[0].mxu0 %v1464
        %v1716 = vpop.f32.mrb[0].mxu0
        %v1717 = vadd.f32 %v1556, %v1716
        %v1718 = vpop.f32.mrb[0].mxu0
        %v1719 = vpop.f32.mrb[0].mxu0
        %v1720 = vadd.f32 %v1559, %v1719
        %v1721 = vpop.f32.mrb[0].mxu0
        %1722 = vmatprep.mubr.bf16.mxu0 0
        %1723 = vmatmul.mubr.bf16.gmra.mrb[0].mxu0 %v1467
        %v1724 = vpop.f32.mrb[0].mxu0
        %v1725 = vadd.f32 %v1564, %v1724
        %v1726 = vpop.f32.mrb[0].mxu0
        %v1727 = vpop.f32.mrb[0].mxu0
        %v1728 = vadd.f32 %v1567, %v1727
        %v1729 = vpop.f32.mrb[0].mxu0
        %1730 = vmatprep.mubr.bf16.mxu0 0
        %1731 = vmatmul.mubr.bf16.gmra.mrb[0].mxu0 %v1470
        %v1732 = vpop.f32.mrb[0].mxu0
        %v1733 = vadd.f32 %v1572, %v1732
        %v1734 = vpop.f32.mrb[0].mxu0
        %v1735 = vpop.f32.mrb[0].mxu0
        %v1736 = vadd.f32 %v1575, %v1735
        %v1737 = vpop.f32.mrb[0].mxu0
        %1738 = vmatprep.mubr.bf16.mxu0 0
        %1739 = vmatmul.mubr.bf16.gmra.mrb[0].mxu0 %v1473
        %v1740 = vpop.f32.mrb[0].mxu0
        %v1741 = vadd.f32 %v1580, %v1740
        %v1742 = vpop.f32.mrb[0].mxu0
        %v1743 = vpop.f32.mrb[0].mxu0
        %v1744 = vadd.f32 %v1583, %v1743
        %v1745 = vpop.f32.mrb[0].mxu0
        %1746 = vmatprep.mubr.bf16.mxu0 0
        %1747 = vmatmul.mubr.bf16.gmra.mrb[0].mxu0 %v1476
        %v1748 = vpop.f32.mrb[0].mxu0
        %v1749 = vadd.f32 %v1588, %v1748
        %v1750 = vpop.f32.mrb[0].mxu0
        %v1751 = vpop.f32.mrb[0].mxu0
        %v1752 = vadd.f32 %v1591, %v1751
        %v1753 = vpop.f32.mrb[0].mxu0
        %1754 = vmatprep.mubr.bf16.mxu0 0
        %1755 = vmatmul.mubr.bf16.gmra.mrb[0].mxu0 %v1479
        %v1756 = vpop.f32.mrb[0].mxu0
        %v1757 = vadd.f32 %v1596, %v1756
        %v1758 = vpop.f32.mrb[0].mxu0
        %v1759 = vpop.f32.mrb[0].mxu0
        %v1760 = vadd.f32 %v1599, %v1759
        %v1761 = vpop.f32.mrb[0].mxu0
        %1762 = vmatprep.mubr.bf16.mxu0 0
        %1763 = vmatmul.mubr.bf16.gmra.mrb[0].mxu0 %v1482
        %v1764 = vpop.f32.mrb[0].mxu0
        %v1765 = vadd.f32 %v1604, %v1764
        %v1766 = vpop.f32.mrb[0].mxu0
        %v1767 = vpop.f32.mrb[0].mxu0
        %v1768 = vadd.f32 %v1607, %v1767
        %v1769 = vpop.f32.mrb[0].mxu0
        %1770 = vmatprep.mubr.bf16.mxu0 0
        %1771 = vmatmul.mubr.bf16.gmra.mrb[0].mxu0 %v1485
        %v1772 = vpop.f32.mrb[0].mxu0
        %v1773 = vadd.f32 %v1612, %v1772
        %v1774 = vpop.f32.mrb[0].mxu0
        %v1775 = vpop.f32.mrb[0].mxu0
        %v1776 = vadd.f32 %v1615, %v1775
        %v1777 = vpop.f32.mrb[0].mxu0
        %1778 = vmatprep.mubr.bf16.mxu0 0
        %1779 = vmatmul.mubr.bf16.gmra.mrb[0].mxu0 %v1488
        %v1780 = vpop.f32.mrb[0].mxu0
        %v1781 = vadd.f32 %v1620, %v1780
        %v1782 = vpop.f32.mrb[0].mxu0
        %v1783 = vpop.f32.mrb[0].mxu0
        %v1784 = vadd.f32 %v1623, %v1783
        %v1785 = vpop.f32.mrb[0].mxu0
        %1786 = vmatprep.mubr.bf16.mxu0 0
        %1787 = vmatmul.mubr.bf16.gmra.mrb[0].mxu0 %v1491
        %v1788 = vpop.f32.mrb[0].mxu0
        %v1789 = vadd.f32 %v1628, %v1788
        %v1790 = vpop.f32.mrb[0].mxu0
        %v1791 = vpop.f32.mrb[0].mxu0
        %v1792 = vadd.f32 %v1631, %v1791
        %v1793 = vpop.f32.mrb[0].mxu0
        %1794 = vmatprep.mubr.bf16.mxu0 0
        %1795 = vmatmul.mubr.bf16.gmra.mrb[0].mxu0 %v1494
        %v1796 = vpop.f32.mrb[0].mxu0
        %v1797 = vadd.f32 %v1636, %v1796
        %v1798 = vpop.f32.mrb[0].mxu0
        %v1799 = vpop.f32.mrb[0].mxu0
        %v1800 = vadd.f32 %v1639, %v1799
        %v1801 = vpop.f32.mrb[0].mxu0
        %1802 = vmatprep.mubr.bf16.mxu0 0
        %1803 = vmatmul.mubr.bf16.gmra.mrb[0].mxu0 %v1497
        %v1804 = vpop.f32.mrb[0].mxu0
        %v1805 = vadd.f32 %v1644, %v1804
        %v1806 = vpop.f32.mrb[0].mxu0
        %v1807 = vpop.f32.mrb[0].mxu0
        %v1808 = vadd.f32 %v1647, %v1807
        %v1809 = vpop.f32.mrb[0].mxu0
        %1810 = vmatprep.mubr.bf16.mxu0 0
        %1811 = vmatmul.mubr.bf16.gmra.mrb[0].mxu0 %v1500
        %v1812 = vpop.f32.mrb[0].mxu0
        %v1813 = vadd.f32 %v1652, %v1812
        %v1814 = vpop.f32.mrb[0].mxu0
        %v1815 = vpop.f32.mrb[0].mxu0
        %v1816 = vadd.f32 %v1655, %v1815
        %v1817 = vpop.f32.mrb[0].mxu0
        %1818 = vmatprep.mubr.bf16.mxu0 0
        %1819 = vmatmul.mubr.bf16.gmra.mrb[0].mxu0 %v1503
        %v1820 = vpop.f32.mrb[0].mxu0
        %v1821 = vadd.f32 %v1660, %v1820
        %v1822 = vpop.f32.mrb[0].mxu0
        %v1823 = vpop.f32.mrb[0].mxu0
        %v1824 = vadd.f32 %v1663, %v1823
        %v1825 = vpop.f32.mrb[0].mxu0
        %1826 = vdwg.mxu0
        %v1827 = vmax.f32 %v1701, 0.0
        %v1828 = vmax.f32 %v1704, 0.0
        %v1829 = vmax.f32 %v1709, 0.0
        %v1830 = vmax.f32 %v1712, 0.0
        %v1831 = vmax.f32 %v1717, 0.0
        %v1832 = vmax.f32 %v1720, 0.0
        %v1833 = vmax.f32 %v1725, 0.0
        %v1834 = vmax.f32 %v1728, 0.0
        %v1835 = vmax.f32 %v1733, 0.0
        %v1836 = vmax.f32 %v1736, 0.0
        %v1837 = vmax.f32 %v1741, 0.0
        %v1838 = vmax.f32 %v1744, 0.0
        %v1839 = vmax.f32 %v1749, 0.0
        %v1840 = vmax.f32 %v1752, 0.0
        %v1841 = vmax.f32 %v1757, 0.0
        %v1842 = vmax.f32 %v1760, 0.0
        %v1843 = vmax.f32 %v1765, 0.0
        %v1844 = vmax.f32 %v1768, 0.0
        %v1845 = vmax.f32 %v1773, 0.0
        %v1846 = vmax.f32 %v1776, 0.0
        %v1847 = vmax.f32 %v1781, 0.0
        %v1848 = vmax.f32 %v1784, 0.0
        %v1849 = vmax.f32 %v1789, 0.0
        %v1850 = vmax.f32 %v1792, 0.0
        %v1851 = vmax.f32 %v1797, 0.0
        %v1852 = vmax.f32 %v1800, 0.0
        %v1853 = vmax.f32 %v1805, 0.0
        %v1854 = vmax.f32 %v1808, 0.0
        %v1855 = vmax.f32 %v1813, 0.0
        %v1856 = vmax.f32 %v1816, 0.0
        %v1857 = vmax.f32 %v1821, 0.0
        %v1858 = vmax.f32 %v1824, 0.0
        %1859 = vst.msk [vmem:[%s262 + $0x1] sm:$0xff] %vm263, %v1827
        %1860 = vst.msk [vmem:[%s262 + $0x9] sm:$0xff] %vm263, %v1828
        %1861 = vst.msk [vmem:[%s262 + $0x19] sm:$0xff] %vm263, %v1829
        %1862 = vst.msk [vmem:[%s262 + $0x21] sm:$0xff] %vm263, %v1830
        %1863 = vst.msk [vmem:[%s262 + $0x31] sm:$0xff] %vm263, %v1831
        %1864 = vst.msk [vmem:[%s262 + $0x39] sm:$0xff] %vm263, %v1832
        %1865 = vst.msk [vmem:[%s262 + $0x49] sm:$0xff] %vm263, %v1833
        %1866 = vst.msk [vmem:[%s262 + $0x51] sm:$0xff] %vm263, %v1834
        %1867 = vst.msk [vmem:[%s262 + $0x61] sm:$0xff] %vm263, %v1835
        %1868 = vst.msk [vmem:[%s262 + $0x69] sm:$0xff] %vm263, %v1836
        %1869 = vst.msk [vmem:[%s262 + $0x79] sm:$0xff] %vm263, %v1837
        %1870 = vst.msk [vmem:[%s262 + $0x81] sm:$0xff] %vm263, %v1838
        %1871 = vst.msk [vmem:[%s262 + $0x91] sm:$0xff] %vm263, %v1839
        %1872 = vst.msk [vmem:[%s262 + $0x99] sm:$0xff] %vm263, %v1840
        %1873 = vst.msk [vmem:[%s262 + $0xa9] sm:$0xff] %vm263, %v1841
        %1874 = vst.msk [vmem:[%s262 + $0xb1] sm:$0xff] %vm263, %v1842
        %1875 = vst.msk [vmem:[%s262 + $0xc1] sm:$0xff] %vm263, %v1843
        %1876 = vst.msk [vmem:[%s262 + $0xc9] sm:$0xff] %vm263, %v1844
        %1877 = vst.msk [vmem:[%s262 + $0xd9] sm:$0xff] %vm263, %v1845
        %1878 = vst.msk [vmem:[%s262 + $0xe1] sm:$0xff] %vm263, %v1846
        %1879 = vst.msk [vmem:[%s262 + $0xf1] sm:$0xff] %vm263, %v1847
        %1880 = vst.msk [vmem:[%s262 + $0xf9] sm:$0xff] %vm263, %v1848
        %1881 = vst.msk [vmem:[%s262 + $0x109] sm:$0xff] %vm263, %v1849
        %1882 = vst.msk [vmem:[%s262 + $0x111] sm:$0xff] %vm263, %v1850
        %1883 = vst.msk [vmem:[%s262 + $0x121] sm:$0xff] %vm263, %v1851
        %1884 = vst.msk [vmem:[%s262 + $0x129] sm:$0xff] %vm263, %v1852
        %1885 = vst.msk [vmem:[%s262 + $0x139] sm:$0xff] %vm263, %v1853
        %1886 = vst.msk [vmem:[%s262 + $0x141] sm:$0xff] %vm263, %v1854
        %1887 = vst.msk [vmem:[%s262 + $0x151] sm:$0xff] %vm263, %v1855
        %1888 = vst.msk [vmem:[%s262 + $0x159] sm:$0xff] %vm263, %v1856
        %1889 = vst.msk [vmem:[%s262 + $0x169] sm:$0xff] %vm263, %v1857
        %1890 = vst.msk [vmem:[%s262 + $0x171] sm:$0xff] %vm263, %v1858
        %v1891 = vld [vmem:[#allocation2] sm:$0xff]
        %v1892 = vld [vmem:[#allocation2 + $0x8] sm:$0xff]
        %v1893 = vld [vmem:[#allocation2 + $0x18] sm:$0xff]
        %v1894 = vld [vmem:[#allocation2 + $0x20] sm:$0xff]
        %v1895 = vld [vmem:[#allocation2 + $0x30] sm:$0xff]
        %v1896 = vld [vmem:[#allocation2 + $0x38] sm:$0xff]
        %v1897 = vld [vmem:[#allocation2 + $0x48] sm:$0xff]
        %v1898 = vld [vmem:[#allocation2 + $0x50] sm:$0xff]
        %v1899 = vld [vmem:[#allocation2 + $0x60] sm:$0xff]
        %v1900 = vld [vmem:[#allocation2 + $0x68] sm:$0xff]
        %v1901 = vld [vmem:[#allocation2 + $0x78] sm:$0xff]
        %v1902 = vld [vmem:[#allocation2 + $0x80] sm:$0xff]
        %v1903 = vld [vmem:[#allocation2 + $0x90] sm:$0xff]
        %v1904 = vld [vmem:[#allocation2 + $0x98] sm:$0xff]
        %v1905 = vld [vmem:[#allocation2 + $0xa8] sm:$0xff]
        %v1906 = vld [vmem:[#allocation2 + $0xb0] sm:$0xff]
        %v1907 = vld [vmem:[#allocation2 + $0xc0] sm:$0xff]
        %v1908 = vld [vmem:[#allocation2 + $0xc8] sm:$0xff]
        %v1909 = vld [vmem:[#allocation2 + $0xd8] sm:$0xff]
        %v1910 = vld [vmem:[#allocation2 + $0xe0] sm:$0xff]
        %v1911 = vld [vmem:[#allocation2 + $0xf0] sm:$0xff]
        %v1912 = vld [vmem:[#allocation2 + $0xf8] sm:$0xff]
        %v1913 = vld [vmem:[#allocation2 + $0x108] sm:$0xff]
        %v1914 = vld [vmem:[#allocation2 + $0x110] sm:$0xff]
        %v1915 = vld [vmem:[#allocation2 + $0x120] sm:$0xff]
        %v1916 = vld [vmem:[#allocation2 + $0x128] sm:$0xff]
        %v1917 = vld [vmem:[#allocation2 + $0x138] sm:$0xff]
        %v1918 = vld [vmem:[#allocation2 + $0x140] sm:$0xff]
        %v1919 = vld [vmem:[#allocation2 + $0x150] sm:$0xff]
        %v1920 = vld [vmem:[#allocation2 + $0x158] sm:$0xff]
        %v1921 = vld [vmem:[#allocation2 + $0x168] sm:$0xff]
        %v1922 = vld [vmem:[#allocation2 + $0x170] sm:$0xff]
        %v1923 = vpack.c.bf16 %v1892, %v1891
        %v1924 = vpack.c.bf16 %v1894, %v1893
        %v1925 = vpack.c.bf16 %v1896, %v1895
        %v1926 = vpack.c.bf16 %v1898, %v1897
        %v1927 = vpack.c.bf16 %v1900, %v1899
        %v1928 = vpack.c.bf16 %v1902, %v1901
        %v1929 = vpack.c.bf16 %v1904, %v1903
        %v1930 = vpack.c.bf16 %v1906, %v1905
        %v1931 = vpack.c.bf16 %v1908, %v1907
        %v1932 = vpack.c.bf16 %v1910, %v1909
        %v1933 = vpack.c.bf16 %v1912, %v1911
        %v1934 = vpack.c.bf16 %v1914, %v1913
        %v1935 = vpack.c.bf16 %v1916, %v1915
        %v1936 = vpack.c.bf16 %v1918, %v1917
        %v1937 = vpack.c.bf16 %v1920, %v1919
        %v1938 = vpack.c.bf16 %v1922, %v1921
        %1939 = vst.msk [vmem:[#allocation3] sm:$0xff] %vm263, %v1923
        %1940 = vst.msk [vmem:[#allocation3 + $0x18] sm:$0xff] %vm263, %v1924
        %1941 = vst.msk [vmem:[#allocation3 + $0x30] sm:$0xff] %vm263, %v1925
        %1942 = vst.msk [vmem:[#allocation3 + $0x48] sm:$0xff] %vm263, %v1926
        %1943 = vst.msk [vmem:[#allocation3 + $0x60] sm:$0xff] %vm263, %v1927
        %1944 = vst.msk [vmem:[#allocation3 + $0x78] sm:$0xff] %vm263, %v1928
        %1945 = vst.msk [vmem:[#allocation3 + $0x90] sm:$0xff] %vm263, %v1929
        %1946 = vst.msk [vmem:[#allocation3 + $0xa8] sm:$0xff] %vm263, %v1930
        %1947 = vst.msk [vmem:[#allocation3 + $0xc0] sm:$0xff] %vm263, %v1931
        %1948 = vst.msk [vmem:[#allocation3 + $0xd8] sm:$0xff] %vm263, %v1932
        %1949 = vst.msk [vmem:[#allocation3 + $0xf0] sm:$0xff] %vm263, %v1933
        %1950 = vst.msk [vmem:[#allocation3 + $0x108] sm:$0xff] %vm263, %v1934
        %1951 = vst.msk [vmem:[#allocation3 + $0x120] sm:$0xff] %vm263, %v1935
        %1952 = vst.msk [vmem:[#allocation3 + $0x138] sm:$0xff] %vm263, %v1936
        %1953 = vst.msk [vmem:[#allocation3 + $0x150] sm:$0xff] %vm263, %v1937
        %1954 = vst.msk [vmem:[#allocation3 + $0x168] sm:$0xff] %vm263, %v1938
        %v1955 = vld [vmem:[#allocation2 + $0x1] sm:$0xff]
        %v1956 = vld [vmem:[#allocation2 + $0x9] sm:$0xff]
        %v1957 = vld [vmem:[#allocation2 + $0x19] sm:$0xff]
        %v1958 = vld [vmem:[#allocation2 + $0x21] sm:$0xff]
        %v1959 = vld [vmem:[#allocation2 + $0x31] sm:$0xff]
        %v1960 = vld [vmem:[#allocation2 + $0x39] sm:$0xff]
        %v1961 = vld [vmem:[#allocation2 + $0x49] sm:$0xff]
        %v1962 = vld [vmem:[#allocation2 + $0x51] sm:$0xff]
        %v1963 = vld [vmem:[#allocation2 + $0x61] sm:$0xff]
        %v1964 = vld [vmem:[#allocation2 + $0x69] sm:$0xff]
        %v1965 = vld [vmem:[#allocation2 + $0x79] sm:$0xff]
        %v1966 = vld [vmem:[#allocation2 + $0x81] sm:$0xff]
        %v1967 = vld [vmem:[#allocation2 + $0x91] sm:$0xff]
        %v1968 = vld [vmem:[#allocation2 + $0x99] sm:$0xff]
        %v1969 = vld [vmem:[#allocation2 + $0xa9] sm:$0xff]
        %v1970 = vld [vmem:[#allocation2 + $0xb1] sm:$0xff]
        %v1971 = vld [vmem:[#allocation2 + $0xc1] sm:$0xff]
        %v1972 = vld [vmem:[#allocation2 + $0xc9] sm:$0xff]
        %v1973 = vld [vmem:[#allocation2 + $0xd9] sm:$0xff]
        %v1974 = vld [vmem:[#allocation2 + $0xe1] sm:$0xff]
        %v1975 = vld [vmem:[#allocation2 + $0xf1] sm:$0xff]
        %v1976 = vld [vmem:[#allocation2 + $0xf9] sm:$0xff]
        %v1977 = vld [vmem:[#allocation2 + $0x109] sm:$0xff]
        %v1978 = vld [vmem:[#allocation2 + $0x111] sm:$0xff]
        %v1979 = vld [vmem:[#allocation2 + $0x121] sm:$0xff]
        %v1980 = vld [vmem:[#allocation2 + $0x129] sm:$0xff]
        %v1981 = vld [vmem:[#allocation2 + $0x139] sm:$0xff]
        %v1982 = vld [vmem:[#allocation2 + $0x141] sm:$0xff]
        %v1983 = vld [vmem:[#allocation2 + $0x151] sm:$0xff]
        %v1984 = vld [vmem:[#allocation2 + $0x159] sm:$0xff]
        %v1985 = vld [vmem:[#allocation2 + $0x169] sm:$0xff]
        %v1986 = vld [vmem:[#allocation2 + $0x171] sm:$0xff]
        %v1987 = vpack.c.bf16 %v1956, %v1955
        %v1988 = vpack.c.bf16 %v1958, %v1957
        %v1989 = vpack.c.bf16 %v1960, %v1959
        %v1990 = vpack.c.bf16 %v1962, %v1961
        %v1991 = vpack.c.bf16 %v1964, %v1963
        %v1992 = vpack.c.bf16 %v1966, %v1965
        %v1993 = vpack.c.bf16 %v1968, %v1967
        %v1994 = vpack.c.bf16 %v1970, %v1969
        %v1995 = vpack.c.bf16 %v1972, %v1971
        %v1996 = vpack.c.bf16 %v1974, %v1973
        %v1997 = vpack.c.bf16 %v1976, %v1975
        %v1998 = vpack.c.bf16 %v1978, %v1977
        %v1999 = vpack.c.bf16 %v1980, %v1979
        %v2000 = vpack.c.bf16 %v1982, %v1981
        %v2001 = vpack.c.bf16 %v1984, %v1983
        %v2002 = vpack.c.bf16 %v1986, %v1985
        %2019 = vrot.lane.b32.xlu0 %v1987, 32
        %v2020 = vpop.permute.xlu0 %2019
        %2021 = vrot.lane.b32.xlu0 %v1988, 32
        %v2022 = vpop.permute.xlu0 %2021
        %2023 = vrot.lane.b32.xlu0 %v1989, 32
        %v2024 = vpop.permute.xlu0 %2023
        %2025 = vrot.lane.b32.xlu0 %v1990, 32
        %v2026 = vpop.permute.xlu0 %2025
        %2027 = vrot.lane.b32.xlu0 %v1991, 32
        %v2028 = vpop.permute.xlu0 %2027
        %2029 = vrot.lane.b32.xlu0 %v1992, 32
        %v2030 = vpop.permute.xlu0 %2029
        %2031 = vrot.lane.b32.xlu0 %v1993, 32
        %v2032 = vpop.permute.xlu0 %2031
        %2033 = vrot.lane.b32.xlu0 %v1994, 32
        %v2034 = vpop.permute.xlu0 %2033
        %2035 = vrot.lane.b32.xlu0 %v1995, 32
        %v2036 = vpop.permute.xlu0 %2035
        %2037 = vrot.lane.b32.xlu0 %v1996, 32
        %v2038 = vpop.permute.xlu0 %2037
        %2039 = vrot.lane.b32.xlu0 %v1997, 32
        %v2040 = vpop.permute.xlu0 %2039
        %2041 = vrot.lane.b32.xlu0 %v1998, 32
        %v2042 = vpop.permute.xlu0 %2041
        %2043 = vrot.lane.b32.xlu0 %v1999, 32
        %v2044 = vpop.permute.xlu0 %2043
        %2045 = vrot.lane.b32.xlu0 %v2000, 32
        %v2046 = vpop.permute.xlu0 %2045
        %2047 = vrot.lane.b32.xlu0 %v2001, 32
        %v2048 = vpop.permute.xlu0 %2047
        %2049 = vrot.lane.b32.xlu0 %v2002, 32
        %v2050 = vpop.permute.xlu0 %2049
        %2067 = vst.msk [vmem:[#allocation3] sm:$0xff] %vm472, %v2020
        %2068 = vst.msk [vmem:[#allocation3 + $0x18] sm:$0xff] %vm472, %v2022
        %2069 = vst.msk [vmem:[#allocation3 + $0x30] sm:$0xff] %vm472, %v2024
        %2070 = vst.msk [vmem:[#allocation3 + $0x48] sm:$0xff] %vm472, %v2026
        %2071 = vst.msk [vmem:[#allocation3 + $0x60] sm:$0xff] %vm472, %v2028
        %2072 = vst.msk [vmem:[#allocation3 + $0x78] sm:$0xff] %vm472, %v2030
        %2073 = vst.msk [vmem:[#allocation3 + $0x90] sm:$0xff] %vm472, %v2032
        %2074 = vst.msk [vmem:[#allocation3 + $0xa8] sm:$0xff] %vm472, %v2034
        %2075 = vst.msk [vmem:[#allocation3 + $0xc0] sm:$0xff] %vm472, %v2036
        %2076 = vst.msk [vmem:[#allocation3 + $0xd8] sm:$0xff] %vm472, %v2038
        %2077 = vst.msk [vmem:[#allocation3 + $0xf0] sm:$0xff] %vm472, %v2040
        %2078 = vst.msk [vmem:[#allocation3 + $0x108] sm:$0xff] %vm472, %v2042
        %2079 = vst.msk [vmem:[#allocation3 + $0x120] sm:$0xff] %vm472, %v2044
        %2080 = vst.msk [vmem:[#allocation3 + $0x138] sm:$0xff] %vm472, %v2046
        %2081 = vst.msk [vmem:[#allocation3 + $0x150] sm:$0xff] %vm472, %v2048
        %2082 = vst.msk [vmem:[#allocation3 + $0x168] sm:$0xff] %vm472, %v2050
        %v2083 = vld [vmem:[#allocation2 + $0x2] sm:$0xff]
        %v2084 = vld [vmem:[#allocation2 + $0xa] sm:$0xff]
        %v2085 = vld [vmem:[#allocation2 + $0x1a] sm:$0xff]
        %v2086 = vld [vmem:[#allocation2 + $0x22] sm:$0xff]
        %v2087 = vld [vmem:[#allocation2 + $0x32] sm:$0xff]
        %v2088 = vld [vmem:[#allocation2 + $0x3a] sm:$0xff]
        %v2089 = vld [vmem:[#allocation2 + $0x4a] sm:$0xff]
        %v2090 = vld [vmem:[#allocation2 + $0x52] sm:$0xff]
        %v2091 = vld [vmem:[#allocation2 + $0x62] sm:$0xff]
        %v2092 = vld [vmem:[#allocation2 + $0x6a] sm:$0xff]
        %v2093 = vld [vmem:[#allocation2 + $0x7a] sm:$0xff]
        %v2094 = vld [vmem:[#allocation2 + $0x82] sm:$0xff]
        %v2095 = vld [vmem:[#allocation2 + $0x92] sm:$0xff]
        %v2096 = vld [vmem:[#allocation2 + $0x9a] sm:$0xff]
        %v2097 = vld [vmem:[#allocation2 + $0xaa] sm:$0xff]
        %v2098 = vld [vmem:[#allocation2 + $0xb2] sm:$0xff]
        %v2099 = vld [vmem:[#allocation2 + $0xc2] sm:$0xff]
        %v2100 = vld [vmem:[#allocation2 + $0xca] sm:$0xff]
        %v2101 = vld [vmem:[#allocation2 + $0xda] sm:$0xff]
        %v2102 = vld [vmem:[#allocation2 + $0xe2] sm:$0xff]
        %v2103 = vld [vmem:[#allocation2 + $0xf2] sm:$0xff]
        %v2104 = vld [vmem:[#allocation2 + $0xfa] sm:$0xff]
        %v2105 = vld [vmem:[#allocation2 + $0x10a] sm:$0xff]
        %v2106 = vld [vmem:[#allocation2 + $0x112] sm:$0xff]
        %v2107 = vld [vmem:[#allocation2 + $0x122] sm:$0xff]
        %v2108 = vld [vmem:[#allocation2 + $0x12a] sm:$0xff]
        %v2109 = vld [vmem:[#allocation2 + $0x13a] sm:$0xff]
        %v2110 = vld [vmem:[#allocation2 + $0x142] sm:$0xff]
        %v2111 = vld [vmem:[#allocation2 + $0x152] sm:$0xff]
        %v2112 = vld [vmem:[#allocation2 + $0x15a] sm:$0xff]
        %v2113 = vld [vmem:[#allocation2 + $0x16a] sm:$0xff]
        %v2114 = vld [vmem:[#allocation2 + $0x172] sm:$0xff]
        %v2115 = vpack.c.bf16 %v2084, %v2083
        %v2116 = vpack.c.bf16 %v2086, %v2085
        %v2117 = vpack.c.bf16 %v2088, %v2087
        %v2118 = vpack.c.bf16 %v2090, %v2089
        %v2119 = vpack.c.bf16 %v2092, %v2091
        %v2120 = vpack.c.bf16 %v2094, %v2093
        %v2121 = vpack.c.bf16 %v2096, %v2095
        %v2122 = vpack.c.bf16 %v2098, %v2097
        %v2123 = vpack.c.bf16 %v2100, %v2099
        %v2124 = vpack.c.bf16 %v2102, %v2101
        %v2125 = vpack.c.bf16 %v2104, %v2103
        %v2126 = vpack.c.bf16 %v2106, %v2105
        %v2127 = vpack.c.bf16 %v2108, %v2107
        %v2128 = vpack.c.bf16 %v2110, %v2109
        %v2129 = vpack.c.bf16 %v2112, %v2111
        %v2130 = vpack.c.bf16 %v2114, %v2113
        %2147 = vrot.lane.b32.xlu0 %v2115, 64
        %v2148 = vpop.permute.xlu0 %2147
        %2149 = vrot.lane.b32.xlu0 %v2116, 64
        %v2150 = vpop.permute.xlu0 %2149
        %2151 = vrot.lane.b32.xlu0 %v2117, 64
        %v2152 = vpop.permute.xlu0 %2151
        %2153 = vrot.lane.b32.xlu0 %v2118, 64
        %v2154 = vpop.permute.xlu0 %2153
        %2155 = vrot.lane.b32.xlu0 %v2119, 64
        %v2156 = vpop.permute.xlu0 %2155
        %2157 = vrot.lane.b32.xlu0 %v2120, 64
        %v2158 = vpop.permute.xlu0 %2157
        %2159 = vrot.lane.b32.xlu0 %v2121, 64
        %v2160 = vpop.permute.xlu0 %2159
        %2161 = vrot.lane.b32.xlu0 %v2122, 64
        %v2162 = vpop.permute.xlu0 %2161
        %2163 = vrot.lane.b32.xlu0 %v2123, 64
        %v2164 = vpop.permute.xlu0 %2163
        %2165 = vrot.lane.b32.xlu0 %v2124, 64
        %v2166 = vpop.permute.xlu0 %2165
        %2167 = vrot.lane.b32.xlu0 %v2125, 64
        %v2168 = vpop.permute.xlu0 %2167
        %2169 = vrot.lane.b32.xlu0 %v2126, 64
        %v2170 = vpop.permute.xlu0 %2169
        %2171 = vrot.lane.b32.xlu0 %v2127, 64
        %v2172 = vpop.permute.xlu0 %2171
        %2173 = vrot.lane.b32.xlu0 %v2128, 64
        %v2174 = vpop.permute.xlu0 %2173
        %2175 = vrot.lane.b32.xlu0 %v2129, 64
        %v2176 = vpop.permute.xlu0 %2175
        %2177 = vrot.lane.b32.xlu0 %v2130, 64
        %v2178 = vpop.permute.xlu0 %2177
        %2195 = vst.msk [vmem:[#allocation3] sm:$0xff] %vm601, %v2148
        %2196 = vst.msk [vmem:[#allocation3 + $0x18] sm:$0xff] %vm601, %v2150
        %2197 = vst.msk [vmem:[#allocation3 + $0x30] sm:$0xff] %vm601, %v2152
        %2198 = vst.msk [vmem:[#allocation3 + $0x48] sm:$0xff] %vm601, %v2154
        %2199 = vst.msk [vmem:[#allocation3 + $0x60] sm:$0xff] %vm601, %v2156
        %2200 = vst.msk [vmem:[#allocation3 + $0x78] sm:$0xff] %vm601, %v2158
        %2201 = vst.msk [vmem:[#allocation3 + $0x90] sm:$0xff] %vm601, %v2160
        %2202 = vst.msk [vmem:[#allocation3 + $0xa8] sm:$0xff] %vm601, %v2162
        %2203 = vst.msk [vmem:[#allocation3 + $0xc0] sm:$0xff] %vm601, %v2164
        %2204 = vst.msk [vmem:[#allocation3 + $0xd8] sm:$0xff] %vm601, %v2166
        %2205 = vst.msk [vmem:[#allocation3 + $0xf0] sm:$0xff] %vm601, %v2168
        %2206 = vst.msk [vmem:[#allocation3 + $0x108] sm:$0xff] %vm601, %v2170
        %2207 = vst.msk [vmem:[#allocation3 + $0x120] sm:$0xff] %vm601, %v2172
        %2208 = vst.msk [vmem:[#allocation3 + $0x138] sm:$0xff] %vm601, %v2174
        %2209 = vst.msk [vmem:[#allocation3 + $0x150] sm:$0xff] %vm601, %v2176
        %2210 = vst.msk [vmem:[#allocation3 + $0x168] sm:$0xff] %vm601, %v2178
        %v2211 = vld [vmem:[%s262] sm:$0xff]
        %v2212 = vld [vmem:[%s262 + $0x8] sm:$0xff]
        %v2213 = vld [vmem:[%s262 + $0x18] sm:$0xff]
        %v2214 = vld [vmem:[%s262 + $0x20] sm:$0xff]
        %v2215 = vld [vmem:[%s262 + $0x30] sm:$0xff]
        %v2216 = vld [vmem:[%s262 + $0x38] sm:$0xff]
        %v2217 = vld [vmem:[%s262 + $0x48] sm:$0xff]
        %v2218 = vld [vmem:[%s262 + $0x50] sm:$0xff]
        %v2219 = vld [vmem:[%s262 + $0x60] sm:$0xff]
        %v2220 = vld [vmem:[%s262 + $0x68] sm:$0xff]
        %v2221 = vld [vmem:[%s262 + $0x78] sm:$0xff]
        %v2222 = vld [vmem:[%s262 + $0x80] sm:$0xff]
        %v2223 = vld [vmem:[%s262 + $0x90] sm:$0xff]
        %v2224 = vld [vmem:[%s262 + $0x98] sm:$0xff]
        %v2225 = vld [vmem:[%s262 + $0xa8] sm:$0xff]
        %v2226 = vld [vmem:[%s262 + $0xb0] sm:$0xff]
        %v2227 = vld [vmem:[%s262 + $0xc0] sm:$0xff]
        %v2228 = vld [vmem:[%s262 + $0xc8] sm:$0xff]
        %v2229 = vld [vmem:[%s262 + $0xd8] sm:$0xff]
        %v2230 = vld [vmem:[%s262 + $0xe0] sm:$0xff]
        %v2231 = vld [vmem:[%s262 + $0xf0] sm:$0xff]
        %v2232 = vld [vmem:[%s262 + $0xf8] sm:$0xff]
        %v2233 = vld [vmem:[%s262 + $0x108] sm:$0xff]
        %v2234 = vld [vmem:[%s262 + $0x110] sm:$0xff]
        %v2235 = vld [vmem:[%s262 + $0x120] sm:$0xff]
        %v2236 = vld [vmem:[%s262 + $0x128] sm:$0xff]
        %v2237 = vld [vmem:[%s262 + $0x138] sm:$0xff]
        %v2238 = vld [vmem:[%s262 + $0x140] sm:$0xff]
        %v2239 = vld [vmem:[%s262 + $0x150] sm:$0xff]
        %v2240 = vld [vmem:[%s262 + $0x158] sm:$0xff]
        %v2241 = vld [vmem:[%s262 + $0x168] sm:$0xff]
        %v2242 = vld [vmem:[%s262 + $0x170] sm:$0xff]
        %v2243 = vpack.c.bf16 %v2212, %v2211
        %v2244 = vpack.c.bf16 %v2214, %v2213
        %v2245 = vpack.c.bf16 %v2216, %v2215
        %v2246 = vpack.c.bf16 %v2218, %v2217
        %v2247 = vpack.c.bf16 %v2220, %v2219
        %v2248 = vpack.c.bf16 %v2222, %v2221
        %v2249 = vpack.c.bf16 %v2224, %v2223
        %v2250 = vpack.c.bf16 %v2226, %v2225
        %v2251 = vpack.c.bf16 %v2228, %v2227
        %v2252 = vpack.c.bf16 %v2230, %v2229
        %v2253 = vpack.c.bf16 %v2232, %v2231
        %v2254 = vpack.c.bf16 %v2234, %v2233
        %v2255 = vpack.c.bf16 %v2236, %v2235
        %v2256 = vpack.c.bf16 %v2238, %v2237
        %v2257 = vpack.c.bf16 %v2240, %v2239
        %v2258 = vpack.c.bf16 %v2242, %v2241
        %2275 = vrot.lane.b32.xlu0 %v2243, 96
        %v2276 = vpop.permute.xlu0 %2275
        %2277 = vrot.lane.b32.xlu0 %v2244, 96
        %v2278 = vpop.permute.xlu0 %2277
        %2279 = vrot.lane.b32.xlu0 %v2245, 96
        %v2280 = vpop.permute.xlu0 %2279
        %2281 = vrot.lane.b32.xlu0 %v2246, 96
        %v2282 = vpop.permute.xlu0 %2281
        %2283 = vrot.lane.b32.xlu0 %v2247, 96
        %v2284 = vpop.permute.xlu0 %2283
        %2285 = vrot.lane.b32.xlu0 %v2248, 96
        %v2286 = vpop.permute.xlu0 %2285
        %2287 = vrot.lane.b32.xlu0 %v2249, 96
        %v2288 = vpop.permute.xlu0 %2287
        %2289 = vrot.lane.b32.xlu0 %v2250, 96
        %v2290 = vpop.permute.xlu0 %2289
        %2291 = vrot.lane.b32.xlu0 %v2251, 96
        %v2292 = vpop.permute.xlu0 %2291
        %2293 = vrot.lane.b32.xlu0 %v2252, 96
        %v2294 = vpop.permute.xlu0 %2293
        %2295 = vrot.lane.b32.xlu0 %v2253, 96
        %v2296 = vpop.permute.xlu0 %2295
        %2297 = vrot.lane.b32.xlu0 %v2254, 96
        %v2298 = vpop.permute.xlu0 %2297
        %2299 = vrot.lane.b32.xlu0 %v2255, 96
        %v2300 = vpop.permute.xlu0 %2299
        %2301 = vrot.lane.b32.xlu0 %v2256, 96
        %v2302 = vpop.permute.xlu0 %2301
        %2303 = vrot.lane.b32.xlu0 %v2257, 96
        %v2304 = vpop.permute.xlu0 %2303
        %2305 = vrot.lane.b32.xlu0 %v2258, 96
        %v2306 = vpop.permute.xlu0 %2305
        %2323 = vst.msk [vmem:[#allocation3] sm:$0xff] %vm730, %v2276
        %2324 = vst.msk [vmem:[#allocation3 + $0x18] sm:$0xff] %vm730, %v2278
        %2325 = vst.msk [vmem:[#allocation3 + $0x30] sm:$0xff] %vm730, %v2280
        %2326 = vst.msk [vmem:[#allocation3 + $0x48] sm:$0xff] %vm730, %v2282
        %2327 = vst.msk [vmem:[#allocation3 + $0x60] sm:$0xff] %vm730, %v2284
        %2328 = vst.msk [vmem:[#allocation3 + $0x78] sm:$0xff] %vm730, %v2286
        %2329 = vst.msk [vmem:[#allocation3 + $0x90] sm:$0xff] %vm730, %v2288
        %2330 = vst.msk [vmem:[#allocation3 + $0xa8] sm:$0xff] %vm730, %v2290
        %2331 = vst.msk [vmem:[#allocation3 + $0xc0] sm:$0xff] %vm730, %v2292
        %2332 = vst.msk [vmem:[#allocation3 + $0xd8] sm:$0xff] %vm730, %v2294
        %2333 = vst.msk [vmem:[#allocation3 + $0xf0] sm:$0xff] %vm730, %v2296
        %2334 = vst.msk [vmem:[#allocation3 + $0x108] sm:$0xff] %vm730, %v2298
        %2335 = vst.msk [vmem:[#allocation3 + $0x120] sm:$0xff] %vm730, %v2300
        %2336 = vst.msk [vmem:[#allocation3 + $0x138] sm:$0xff] %vm730, %v2302
        %2337 = vst.msk [vmem:[#allocation3 + $0x150] sm:$0xff] %vm730, %v2304
        %2338 = vst.msk [vmem:[#allocation3 + $0x168] sm:$0xff] %vm730, %v2306
        %v2339 = vld [vmem:[%s262 + $0x1] sm:$0xff]
        %v2340 = vld [vmem:[%s262 + $0x9] sm:$0xff]
        %v2341 = vld [vmem:[%s262 + $0x19] sm:$0xff]
        %v2342 = vld [vmem:[%s262 + $0x21] sm:$0xff]
        %v2343 = vld [vmem:[%s262 + $0x31] sm:$0xff]
        %v2344 = vld [vmem:[%s262 + $0x39] sm:$0xff]
        %v2345 = vld [vmem:[%s262 + $0x49] sm:$0xff]
        %v2346 = vld [vmem:[%s262 + $0x51] sm:$0xff]
        %v2347 = vld [vmem:[%s262 + $0x61] sm:$0xff]
        %v2348 = vld [vmem:[%s262 + $0x69] sm:$0xff]
        %v2349 = vld [vmem:[%s262 + $0x79] sm:$0xff]
        %v2350 = vld [vmem:[%s262 + $0x81] sm:$0xff]
        %v2351 = vld [vmem:[%s262 + $0x91] sm:$0xff]
        %v2352 = vld [vmem:[%s262 + $0x99] sm:$0xff]
        %v2353 = vld [vmem:[%s262 + $0xa9] sm:$0xff]
        %v2354 = vld [vmem:[%s262 + $0xb1] sm:$0xff]
        %v2355 = vld [vmem:[%s262 + $0xc1] sm:$0xff]
        %v2356 = vld [vmem:[%s262 + $0xc9] sm:$0xff]
        %v2357 = vld [vmem:[%s262 + $0xd9] sm:$0xff]
        %v2358 = vld [vmem:[%s262 + $0xe1] sm:$0xff]
        %v2359 = vld [vmem:[%s262 + $0xf1] sm:$0xff]
        %v2360 = vld [vmem:[%s262 + $0xf9] sm:$0xff]
        %v2361 = vld [vmem:[%s262 + $0x109] sm:$0xff]
        %v2362 = vld [vmem:[%s262 + $0x111] sm:$0xff]
        %v2363 = vld [vmem:[%s262 + $0x121] sm:$0xff]
        %v2364 = vld [vmem:[%s262 + $0x129] sm:$0xff]
        %v2365 = vld [vmem:[%s262 + $0x139] sm:$0xff]
        %v2366 = vld [vmem:[%s262 + $0x141] sm:$0xff]
        %v2367 = vld [vmem:[%s262 + $0x151] sm:$0xff]
        %v2368 = vld [vmem:[%s262 + $0x159] sm:$0xff]
        %v2369 = vld [vmem:[%s262 + $0x169] sm:$0xff]
        %v2370 = vld [vmem:[%s262 + $0x171] sm:$0xff]
        %v2371 = vpack.c.bf16 %v2340, %v2339
        %v2372 = vpack.c.bf16 %v2342, %v2341
        %v2373 = vpack.c.bf16 %v2344, %v2343
        %v2374 = vpack.c.bf16 %v2346, %v2345
        %v2375 = vpack.c.bf16 %v2348, %v2347
        %v2376 = vpack.c.bf16 %v2350, %v2349
        %v2377 = vpack.c.bf16 %v2352, %v2351
        %v2378 = vpack.c.bf16 %v2354, %v2353
        %v2379 = vpack.c.bf16 %v2356, %v2355
        %v2380 = vpack.c.bf16 %v2358, %v2357
        %v2381 = vpack.c.bf16 %v2360, %v2359
        %v2382 = vpack.c.bf16 %v2362, %v2361
        %v2383 = vpack.c.bf16 %v2364, %v2363
        %v2384 = vpack.c.bf16 %v2366, %v2365
        %v2385 = vpack.c.bf16 %v2368, %v2367
        %v2386 = vpack.c.bf16 %v2370, %v2369
        %2387 = vst.msk [vmem:[#allocation3 + $0x8] sm:$0xff] %vm263, %v2371
        %2388 = vst.msk [vmem:[#allocation3 + $0x20] sm:$0xff] %vm263, %v2372
        %2389 = vst.msk [vmem:[#allocation3 + $0x38] sm:$0xff] %vm263, %v2373
        %2390 = vst.msk [vmem:[#allocation3 + $0x50] sm:$0xff] %vm263, %v2374
        %2391 = vst.msk [vmem:[#allocation3 + $0x68] sm:$0xff] %vm263, %v2375
        %2392 = vst.msk [vmem:[#allocation3 + $0x80] sm:$0xff] %vm263, %v2376
        %2393 = vst.msk [vmem:[#allocation3 + $0x98] sm:$0xff] %vm263, %v2377
        %2394 = vst.msk [vmem:[#allocation3 + $0xb0] sm:$0xff] %vm263, %v2378
        %2395 = vst.msk [vmem:[#allocation3 + $0xc8] sm:$0xff] %vm263, %v2379
        %2396 = vst.msk [vmem:[#allocation3 + $0xe0] sm:$0xff] %vm263, %v2380
        %2397 = vst.msk [vmem:[#allocation3 + $0xf8] sm:$0xff] %vm263, %v2381
        %2398 = vst.msk [vmem:[#allocation3 + $0x110] sm:$0xff] %vm263, %v2382
        %2399 = vst.msk [vmem:[#allocation3 + $0x128] sm:$0xff] %vm263, %v2383
        %2400 = vst.msk [vmem:[#allocation3 + $0x140] sm:$0xff] %vm263, %v2384
        %2401 = vst.msk [vmem:[#allocation3 + $0x158] sm:$0xff] %vm263, %v2385
        %2402 = vst.msk [vmem:[#allocation3 + $0x170] sm:$0xff] %vm263, %v2386
        %v2403 = vld [vmem:[%s262 + $0x2] sm:$0xff]
        %v2404 = vld [vmem:[%s262 + $0xa] sm:$0xff]
        %v2405 = vld [vmem:[%s262 + $0x1a] sm:$0xff]
        %v2406 = vld [vmem:[%s262 + $0x22] sm:$0xff]
        %v2407 = vld [vmem:[%s262 + $0x32] sm:$0xff]
        %v2408 = vld [vmem:[%s262 + $0x3a] sm:$0xff]
        %v2409 = vld [vmem:[%s262 + $0x4a] sm:$0xff]
        %v2410 = vld [vmem:[%s262 + $0x52] sm:$0xff]
        %v2411 = vld [vmem:[%s262 + $0x62] sm:$0xff]
        %v2412 = vld [vmem:[%s262 + $0x6a] sm:$0xff]
        %v2413 = vld [vmem:[%s262 + $0x7a] sm:$0xff]
        %v2414 = vld [vmem:[%s262 + $0x82] sm:$0xff]
        %v2415 = vld [vmem:[%s262 + $0x92] sm:$0xff]
        %v2416 = vld [vmem:[%s262 + $0x9a] sm:$0xff]
        %v2417 = vld [vmem:[%s262 + $0xaa] sm:$0xff]
        %v2418 = vld [vmem:[%s262 + $0xb2] sm:$0xff]
        %v2419 = vld [vmem:[%s262 + $0xc2] sm:$0xff]
        %v2420 = vld [vmem:[%s262 + $0xca] sm:$0xff]
        %v2421 = vld [vmem:[%s262 + $0xda] sm:$0xff]
        %v2422 = vld [vmem:[%s262 + $0xe2] sm:$0xff]
        %v2423 = vld [vmem:[%s262 + $0xf2] sm:$0xff]
        %v2424 = vld [vmem:[%s262 + $0xfa] sm:$0xff]
        %v2425 = vld [vmem:[%s262 + $0x10a] sm:$0xff]
        %v2426 = vld [vmem:[%s262 + $0x112] sm:$0xff]
        %v2427 = vld [vmem:[%s262 + $0x122] sm:$0xff]
        %v2428 = vld [vmem:[%s262 + $0x12a] sm:$0xff]
        %v2429 = vld [vmem:[%s262 + $0x13a] sm:$0xff]
        %v2430 = vld [vmem:[%s262 + $0x142] sm:$0xff]
        %v2431 = vld [vmem:[%s262 + $0x152] sm:$0xff]
        %v2432 = vld [vmem:[%s262 + $0x15a] sm:$0xff]
        %v2433 = vld [vmem:[%s262 + $0x16a] sm:$0xff]
        %v2434 = vld [vmem:[%s262 + $0x172] sm:$0xff]
        %v2435 = vpack.c.bf16 %v2404, %v2403
        %v2436 = vpack.c.bf16 %v2406, %v2405
        %v2437 = vpack.c.bf16 %v2408, %v2407
        %v2438 = vpack.c.bf16 %v2410, %v2409
        %v2439 = vpack.c.bf16 %v2412, %v2411
        %v2440 = vpack.c.bf16 %v2414, %v2413
        %v2441 = vpack.c.bf16 %v2416, %v2415
        %v2442 = vpack.c.bf16 %v2418, %v2417
        %v2443 = vpack.c.bf16 %v2420, %v2419
        %v2444 = vpack.c.bf16 %v2422, %v2421
        %v2445 = vpack.c.bf16 %v2424, %v2423
        %v2446 = vpack.c.bf16 %v2426, %v2425
        %v2447 = vpack.c.bf16 %v2428, %v2427
        %v2448 = vpack.c.bf16 %v2430, %v2429
        %v2449 = vpack.c.bf16 %v2432, %v2431
        %v2450 = vpack.c.bf16 %v2434, %v2433
        %2467 = vrot.lane.b32.xlu0 %v2435, 32
        %v2468 = vpop.permute.xlu0 %2467
        %2469 = vrot.lane.b32.xlu0 %v2436, 32
        %v2470 = vpop.permute.xlu0 %2469
        %2471 = vrot.lane.b32.xlu0 %v2437, 32
        %v2472 = vpop.permute.xlu0 %2471
        %2473 = vrot.lane.b32.xlu0 %v2438, 32
        %v2474 = vpop.permute.xlu0 %2473
        %2475 = vrot.lane.b32.xlu0 %v2439, 32
        %v2476 = vpop.permute.xlu0 %2475
        %2477 = vrot.lane.b32.xlu0 %v2440, 32
        %v2478 = vpop.permute.xlu0 %2477
        %2479 = vrot.lane.b32.xlu0 %v2441, 32
        %v2480 = vpop.permute.xlu0 %2479
        %2481 = vrot.lane.b32.xlu0 %v2442, 32
        %v2482 = vpop.permute.xlu0 %2481
        %2483 = vrot.lane.b32.xlu0 %v2443, 32
        %v2484 = vpop.permute.xlu0 %2483
        %2485 = vrot.lane.b32.xlu0 %v2444, 32
        %v2486 = vpop.permute.xlu0 %2485
        %2487 = vrot.lane.b32.xlu0 %v2445, 32
        %v2488 = vpop.permute.xlu0 %2487
        %2489 = vrot.lane.b32.xlu0 %v2446, 32
        %v2490 = vpop.permute.xlu0 %2489
        %2491 = vrot.lane.b32.xlu0 %v2447, 32
        %v2492 = vpop.permute.xlu0 %2491
        %2493 = vrot.lane.b32.xlu0 %v2448, 32
        %v2494 = vpop.permute.xlu0 %2493
        %2495 = vrot.lane.b32.xlu0 %v2449, 32
        %v2496 = vpop.permute.xlu0 %2495
        %2497 = vrot.lane.b32.xlu0 %v2450, 32
        %v2498 = vpop.permute.xlu0 %2497
        %2515 = vst.msk [vmem:[#allocation3 + $0x8] sm:$0xff] %vm472, %v2468
        %2516 = vst.msk [vmem:[#allocation3 + $0x20] sm:$0xff] %vm472, %v2470
        %2517 = vst.msk [vmem:[#allocation3 + $0x38] sm:$0xff] %vm472, %v2472
        %2518 = vst.msk [vmem:[#allocation3 + $0x50] sm:$0xff] %vm472, %v2474
        %2519 = vst.msk [vmem:[#allocation3 + $0x68] sm:$0xff] %vm472, %v2476
        %2520 = vst.msk [vmem:[#allocation3 + $0x80] sm:$0xff] %vm472, %v2478
        %2521 = vst.msk [vmem:[#allocation3 + $0x98] sm:$0xff] %vm472, %v2480
        %2522 = vst.msk [vmem:[#allocation3 + $0xb0] sm:$0xff] %vm472, %v2482
        %2523 = vst.msk [vmem:[#allocation3 + $0xc8] sm:$0xff] %vm472, %v2484
        %2524 = vst.msk [vmem:[#allocation3 + $0xe0] sm:$0xff] %vm472, %v2486
        %2525 = vst.msk [vmem:[#allocation3 + $0xf8] sm:$0xff] %vm472, %v2488
        %2526 = vst.msk [vmem:[#allocation3 + $0x110] sm:$0xff] %vm472, %v2490
        %2527 = vst.msk [vmem:[#allocation3 + $0x128] sm:$0xff] %vm472, %v2492
        %2528 = vst.msk [vmem:[#allocation3 + $0x140] sm:$0xff] %vm472, %v2494
        %2529 = vst.msk [vmem:[#allocation3 + $0x158] sm:$0xff] %vm472, %v2496
        %2530 = vst.msk [vmem:[#allocation3 + $0x170] sm:$0xff] %vm472, %v2498
        %v2531 = vld [vmem:[%s939] sm:$0xff]
        %v2532 = vld [vmem:[%s939 + $0x8] sm:$0xff]
        %v2533 = vld [vmem:[%s939 + $0x18] sm:$0xff]
        %v2534 = vld [vmem:[%s939 + $0x20] sm:$0xff]
        %v2535 = vld [vmem:[%s939 + $0x30] sm:$0xff]
        %v2536 = vld [vmem:[%s939 + $0x38] sm:$0xff]
        %v2537 = vld [vmem:[%s939 + $0x48] sm:$0xff]
        %v2538 = vld [vmem:[%s939 + $0x50] sm:$0xff]
        %v2539 = vld [vmem:[%s939 + $0x60] sm:$0xff]
        %v2540 = vld [vmem:[%s939 + $0x68] sm:$0xff]
        %v2541 = vld [vmem:[%s939 + $0x78] sm:$0xff]
        %v2542 = vld [vmem:[%s939 + $0x80] sm:$0xff]
        %v2543 = vld [vmem:[%s939 + $0x90] sm:$0xff]
        %v2544 = vld [vmem:[%s939 + $0x98] sm:$0xff]
        %v2545 = vld [vmem:[%s939 + $0xa8] sm:$0xff]
        %v2546 = vld [vmem:[%s939 + $0xb0] sm:$0xff]
        %v2547 = vld [vmem:[%s939 + $0xc0] sm:$0xff]
        %v2548 = vld [vmem:[%s939 + $0xc8] sm:$0xff]
        %v2549 = vld [vmem:[%s939 + $0xd8] sm:$0xff]
        %v2550 = vld [vmem:[%s939 + $0xe0] sm:$0xff]
        %v2551 = vld [vmem:[%s939 + $0xf0] sm:$0xff]
        %v2552 = vld [vmem:[%s939 + $0xf8] sm:$0xff]
        %v2553 = vld [vmem:[%s939 + $0x108] sm:$0xff]
        %v2554 = vld [vmem:[%s939 + $0x110] sm:$0xff]
        %v2555 = vld [vmem:[%s939 + $0x120] sm:$0xff]
        %v2556 = vld [vmem:[%s939 + $0x128] sm:$0xff]
        %v2557 = vld [vmem:[%s939 + $0x138] sm:$0xff]
        %v2558 = vld [vmem:[%s939 + $0x140] sm:$0xff]
        %v2559 = vld [vmem:[%s939 + $0x150] sm:$0xff]
        %v2560 = vld [vmem:[%s939 + $0x158] sm:$0xff]
        %v2561 = vld [vmem:[%s939 + $0x168] sm:$0xff]
        %v2562 = vld [vmem:[%s939 + $0x170] sm:$0xff]
        %v2563 = vpack.c.bf16 %v2532, %v2531
        %v2564 = vpack.c.bf16 %v2534, %v2533
        %v2565 = vpack.c.bf16 %v2536, %v2535
        %v2566 = vpack.c.bf16 %v2538, %v2537
        %v2567 = vpack.c.bf16 %v2540, %v2539
        %v2568 = vpack.c.bf16 %v2542, %v2541
        %v2569 = vpack.c.bf16 %v2544, %v2543
        %v2570 = vpack.c.bf16 %v2546, %v2545
        %v2571 = vpack.c.bf16 %v2548, %v2547
        %v2572 = vpack.c.bf16 %v2550, %v2549
        %v2573 = vpack.c.bf16 %v2552, %v2551
        %v2574 = vpack.c.bf16 %v2554, %v2553
        %v2575 = vpack.c.bf16 %v2556, %v2555
        %v2576 = vpack.c.bf16 %v2558, %v2557
        %v2577 = vpack.c.bf16 %v2560, %v2559
        %v2578 = vpack.c.bf16 %v2562, %v2561
        %2595 = vrot.lane.b32.xlu0 %v2563, 64
        %v2596 = vpop.permute.xlu0 %2595
        %2597 = vrot.lane.b32.xlu0 %v2564, 64
        %v2598 = vpop.permute.xlu0 %2597
        %2599 = vrot.lane.b32.xlu0 %v2565, 64
        %v2600 = vpop.permute.xlu0 %2599
        %2601 = vrot.lane.b32.xlu0 %v2566, 64
        %v2602 = vpop.permute.xlu0 %2601
        %2603 = vrot.lane.b32.xlu0 %v2567, 64
        %v2604 = vpop.permute.xlu0 %2603
        %2605 = vrot.lane.b32.xlu0 %v2568, 64
        %v2606 = vpop.permute.xlu0 %2605
        %2607 = vrot.lane.b32.xlu0 %v2569, 64
        %v2608 = vpop.permute.xlu0 %2607
        %2609 = vrot.lane.b32.xlu0 %v2570, 64
        %v2610 = vpop.permute.xlu0 %2609
        %2611 = vrot.lane.b32.xlu0 %v2571, 64
        %v2612 = vpop.permute.xlu0 %2611
        %2613 = vrot.lane.b32.xlu0 %v2572, 64
        %v2614 = vpop.permute.xlu0 %2613
        %2615 = vrot.lane.b32.xlu0 %v2573, 64
        %v2616 = vpop.permute.xlu0 %2615
        %2617 = vrot.lane.b32.xlu0 %v2574, 64
        %v2618 = vpop.permute.xlu0 %2617
        %2619 = vrot.lane.b32.xlu0 %v2575, 64
        %v2620 = vpop.permute.xlu0 %2619
        %2621 = vrot.lane.b32.xlu0 %v2576, 64
        %v2622 = vpop.permute.xlu0 %2621
        %2623 = vrot.lane.b32.xlu0 %v2577, 64
        %v2624 = vpop.permute.xlu0 %2623
        %2625 = vrot.lane.b32.xlu0 %v2578, 64
        %v2626 = vpop.permute.xlu0 %2625
        %2643 = vst.msk [vmem:[#allocation3 + $0x8] sm:$0xff] %vm601, %v2596
        %2644 = vst.msk [vmem:[#allocation3 + $0x20] sm:$0xff] %vm601, %v2598
        %2645 = vst.msk [vmem:[#allocation3 + $0x38] sm:$0xff] %vm601, %v2600
        %2646 = vst.msk [vmem:[#allocation3 + $0x50] sm:$0xff] %vm601, %v2602
        %2647 = vst.msk [vmem:[#allocation3 + $0x68] sm:$0xff] %vm601, %v2604
        %2648 = vst.msk [vmem:[#allocation3 + $0x80] sm:$0xff] %vm601, %v2606
        %2649 = vst.msk [vmem:[#allocation3 + $0x98] sm:$0xff] %vm601, %v2608
        %2650 = vst.msk [vmem:[#allocation3 + $0xb0] sm:$0xff] %vm601, %v2610
        %2651 = vst.msk [vmem:[#allocation3 + $0xc8] sm:$0xff] %vm601, %v2612
        %2652 = vst.msk [vmem:[#allocation3 + $0xe0] sm:$0xff] %vm601, %v2614
        %2653 = vst.msk [vmem:[#allocation3 + $0xf8] sm:$0xff] %vm601, %v2616
        %2654 = vst.msk [vmem:[#allocation3 + $0x110] sm:$0xff] %vm601, %v2618
        %2655 = vst.msk [vmem:[#allocation3 + $0x128] sm:$0xff] %vm601, %v2620
        %2656 = vst.msk [vmem:[#allocation3 + $0x140] sm:$0xff] %vm601, %v2622
        %2657 = vst.msk [vmem:[#allocation3 + $0x158] sm:$0xff] %vm601, %v2624
        %2658 = vst.msk [vmem:[#allocation3 + $0x170] sm:$0xff] %vm601, %v2626
        %v2659 = vld [vmem:[%s939 + $0x1] sm:$0xff]
        %v2660 = vld [vmem:[%s939 + $0x9] sm:$0xff]
        %v2661 = vld [vmem:[%s939 + $0x19] sm:$0xff]
        %v2662 = vld [vmem:[%s939 + $0x21] sm:$0xff]
        %v2663 = vld [vmem:[%s939 + $0x31] sm:$0xff]
        %v2664 = vld [vmem:[%s939 + $0x39] sm:$0xff]
        %v2665 = vld [vmem:[%s939 + $0x49] sm:$0xff]
        %v2666 = vld [vmem:[%s939 + $0x51] sm:$0xff]
        %v2667 = vld [vmem:[%s939 + $0x61] sm:$0xff]
        %v2668 = vld [vmem:[%s939 + $0x69] sm:$0xff]
        %v2669 = vld [vmem:[%s939 + $0x79] sm:$0xff]
        %v2670 = vld [vmem:[%s939 + $0x81] sm:$0xff]
        %v2671 = vld [vmem:[%s939 + $0x91] sm:$0xff]
        %v2672 = vld [vmem:[%s939 + $0x99] sm:$0xff]
        %v2673 = vld [vmem:[%s939 + $0xa9] sm:$0xff]
        %v2674 = vld [vmem:[%s939 + $0xb1] sm:$0xff]
        %v2675 = vld [vmem:[%s939 + $0xc1] sm:$0xff]
        %v2676 = vld [vmem:[%s939 + $0xc9] sm:$0xff]
        %v2677 = vld [vmem:[%s939 + $0xd9] sm:$0xff]
        %v2678 = vld [vmem:[%s939 + $0xe1] sm:$0xff]
        %v2679 = vld [vmem:[%s939 + $0xf1] sm:$0xff]
        %v2680 = vld [vmem:[%s939 + $0xf9] sm:$0xff]
        %v2681 = vld [vmem:[%s939 + $0x109] sm:$0xff]
        %v2682 = vld [vmem:[%s939 + $0x111] sm:$0xff]
        %v2683 = vld [vmem:[%s939 + $0x121] sm:$0xff]
        %v2684 = vld [vmem:[%s939 + $0x129] sm:$0xff]
        %v2685 = vld [vmem:[%s939 + $0x139] sm:$0xff]
        %v2686 = vld [vmem:[%s939 + $0x141] sm:$0xff]
        %v2687 = vld [vmem:[%s939 + $0x151] sm:$0xff]
        %v2688 = vld [vmem:[%s939 + $0x159] sm:$0xff]
        %v2689 = vld [vmem:[%s939 + $0x169] sm:$0xff]
        %v2690 = vld [vmem:[%s939 + $0x171] sm:$0xff]
        %v2691 = vpack.c.bf16 %v2660, %v2659
        %v2692 = vpack.c.bf16 %v2662, %v2661
        %v2693 = vpack.c.bf16 %v2664, %v2663
        %v2694 = vpack.c.bf16 %v2666, %v2665
        %v2695 = vpack.c.bf16 %v2668, %v2667
        %v2696 = vpack.c.bf16 %v2670, %v2669
        %v2697 = vpack.c.bf16 %v2672, %v2671
        %v2698 = vpack.c.bf16 %v2674, %v2673
        %v2699 = vpack.c.bf16 %v2676, %v2675
        %v2700 = vpack.c.bf16 %v2678, %v2677
        %v2701 = vpack.c.bf16 %v2680, %v2679
        %v2702 = vpack.c.bf16 %v2682, %v2681
        %v2703 = vpack.c.bf16 %v2684, %v2683
        %v2704 = vpack.c.bf16 %v2686, %v2685
        %v2705 = vpack.c.bf16 %v2688, %v2687
        %v2706 = vpack.c.bf16 %v2690, %v2689
        %2723 = vrot.lane.b32.xlu0 %v2691, 96
        %v2724 = vpop.permute.xlu0 %2723
        %2725 = vrot.lane.b32.xlu0 %v2692, 96
        %v2726 = vpop.permute.xlu0 %2725
        %2727 = vrot.lane.b32.xlu0 %v2693, 96
        %v2728 = vpop.permute.xlu0 %2727
        %2729 = vrot.lane.b32.xlu0 %v2694, 96
        %v2730 = vpop.permute.xlu0 %2729
        %2731 = vrot.lane.b32.xlu0 %v2695, 96
        %v2732 = vpop.permute.xlu0 %2731
        %2733 = vrot.lane.b32.xlu0 %v2696, 96
        %v2734 = vpop.permute.xlu0 %2733
        %2735 = vrot.lane.b32.xlu0 %v2697, 96
        %v2736 = vpop.permute.xlu0 %2735
        %2737 = vrot.lane.b32.xlu0 %v2698, 96
        %v2738 = vpop.permute.xlu0 %2737
        %2739 = vrot.lane.b32.xlu0 %v2699, 96
        %v2740 = vpop.permute.xlu0 %2739
        %2741 = vrot.lane.b32.xlu0 %v2700, 96
        %v2742 = vpop.permute.xlu0 %2741
        %2743 = vrot.lane.b32.xlu0 %v2701, 96
        %v2744 = vpop.permute.xlu0 %2743
        %2745 = vrot.lane.b32.xlu0 %v2702, 96
        %v2746 = vpop.permute.xlu0 %2745
        %2747 = vrot.lane.b32.xlu0 %v2703, 96
        %v2748 = vpop.permute.xlu0 %2747
        %2749 = vrot.lane.b32.xlu0 %v2704, 96
        %v2750 = vpop.permute.xlu0 %2749
        %2751 = vrot.lane.b32.xlu0 %v2705, 96
        %v2752 = vpop.permute.xlu0 %2751
        %2753 = vrot.lane.b32.xlu0 %v2706, 96
        %v2754 = vpop.permute.xlu0 %2753
        %2771 = vst.msk [vmem:[#allocation3 + $0x8] sm:$0xff] %vm730, %v2724
        %2772 = vst.msk [vmem:[#allocation3 + $0x20] sm:$0xff] %vm730, %v2726
        %2773 = vst.msk [vmem:[#allocation3 + $0x38] sm:$0xff] %vm730, %v2728
        %2774 = vst.msk [vmem:[#allocation3 + $0x50] sm:$0xff] %vm730, %v2730
        %2775 = vst.msk [vmem:[#allocation3 + $0x68] sm:$0xff] %vm730, %v2732
        %2776 = vst.msk [vmem:[#allocation3 + $0x80] sm:$0xff] %vm730, %v2734
        %2777 = vst.msk [vmem:[#allocation3 + $0x98] sm:$0xff] %vm730, %v2736
        %2778 = vst.msk [vmem:[#allocation3 + $0xb0] sm:$0xff] %vm730, %v2738
        %2779 = vst.msk [vmem:[#allocation3 + $0xc8] sm:$0xff] %vm730, %v2740
        %2780 = vst.msk [vmem:[#allocation3 + $0xe0] sm:$0xff] %vm730, %v2742
        %2781 = vst.msk [vmem:[#allocation3 + $0xf8] sm:$0xff] %vm730, %v2744
        %2782 = vst.msk [vmem:[#allocation3 + $0x110] sm:$0xff] %vm730, %v2746
        %2783 = vst.msk [vmem:[#allocation3 + $0x128] sm:$0xff] %vm730, %v2748
        %2784 = vst.msk [vmem:[#allocation3 + $0x140] sm:$0xff] %vm730, %v2750
        %2785 = vst.msk [vmem:[#allocation3 + $0x158] sm:$0xff] %vm730, %v2752
        %2786 = vst.msk [vmem:[#allocation3 + $0x170] sm:$0xff] %vm730, %v2754
        %v2787 = vld [vmem:[%s939 + $0x2] sm:$0xff]
        %v2788 = vld [vmem:[%s939 + $0xa] sm:$0xff]
        %v2789 = vld [vmem:[%s939 + $0x1a] sm:$0xff]
        %v2790 = vld [vmem:[%s939 + $0x22] sm:$0xff]
        %v2791 = vld [vmem:[%s939 + $0x32] sm:$0xff]
        %v2792 = vld [vmem:[%s939 + $0x3a] sm:$0xff]
        %v2793 = vld [vmem:[%s939 + $0x4a] sm:$0xff]
        %v2794 = vld [vmem:[%s939 + $0x52] sm:$0xff]
        %v2795 = vld [vmem:[%s939 + $0x62] sm:$0xff]
        %v2796 = vld [vmem:[%s939 + $0x6a] sm:$0xff]
        %v2797 = vld [vmem:[%s939 + $0x7a] sm:$0xff]
        %v2798 = vld [vmem:[%s939 + $0x82] sm:$0xff]
        %v2799 = vld [vmem:[%s939 + $0x92] sm:$0xff]
        %v2800 = vld [vmem:[%s939 + $0x9a] sm:$0xff]
        %v2801 = vld [vmem:[%s939 + $0xaa] sm:$0xff]
        %v2802 = vld [vmem:[%s939 + $0xb2] sm:$0xff]
        %v2803 = vld [vmem:[%s939 + $0xc2] sm:$0xff]
        %v2804 = vld [vmem:[%s939 + $0xca] sm:$0xff]
        %v2805 = vld [vmem:[%s939 + $0xda] sm:$0xff]
        %v2806 = vld [vmem:[%s939 + $0xe2] sm:$0xff]
        %v2807 = vld [vmem:[%s939 + $0xf2] sm:$0xff]
        %v2808 = vld [vmem:[%s939 + $0xfa] sm:$0xff]
        %v2809 = vld [vmem:[%s939 + $0x10a] sm:$0xff]
        %v2810 = vld [vmem:[%s939 + $0x112] sm:$0xff]
        %v2811 = vld [vmem:[%s939 + $0x122] sm:$0xff]
        %v2812 = vld [vmem:[%s939 + $0x12a] sm:$0xff]
        %v2813 = vld [vmem:[%s939 + $0x13a] sm:$0xff]
        %v2814 = vld [vmem:[%s939 + $0x142] sm:$0xff]
        %v2815 = vld [vmem:[%s939 + $0x152] sm:$0xff]
        %v2816 = vld [vmem:[%s939 + $0x15a] sm:$0xff]
        %v2817 = vld [vmem:[%s939 + $0x16a] sm:$0xff]
        %v2818 = vld [vmem:[%s939 + $0x172] sm:$0xff]
        %v2819 = vpack.c.bf16 %v2788, %v2787
        %v2820 = vpack.c.bf16 %v2790, %v2789
        %v2821 = vpack.c.bf16 %v2792, %v2791
        %v2822 = vpack.c.bf16 %v2794, %v2793
        %v2823 = vpack.c.bf16 %v2796, %v2795
        %v2824 = vpack.c.bf16 %v2798, %v2797
        %v2825 = vpack.c.bf16 %v2800, %v2799
        %v2826 = vpack.c.bf16 %v2802, %v2801
        %v2827 = vpack.c.bf16 %v2804, %v2803
        %v2828 = vpack.c.bf16 %v2806, %v2805
        %v2829 = vpack.c.bf16 %v2808, %v2807
        %v2830 = vpack.c.bf16 %v2810, %v2809
        %v2831 = vpack.c.bf16 %v2812, %v2811
        %v2832 = vpack.c.bf16 %v2814, %v2813
        %v2833 = vpack.c.bf16 %v2816, %v2815
        %v2834 = vpack.c.bf16 %v2818, %v2817
        %2835 = vst.msk [vmem:[#allocation3 + $0x10] sm:$0xff] %vm263, %v2819
        %2836 = vst.msk [vmem:[#allocation3 + $0x28] sm:$0xff] %vm263, %v2820
        %2837 = vst.msk [vmem:[#allocation3 + $0x40] sm:$0xff] %vm263, %v2821
        %2838 = vst.msk [vmem:[#allocation3 + $0x58] sm:$0xff] %vm263, %v2822
        %2839 = vst.msk [vmem:[#allocation3 + $0x70] sm:$0xff] %vm263, %v2823
        %2840 = vst.msk [vmem:[#allocation3 + $0x88] sm:$0xff] %vm263, %v2824
        %2841 = vst.msk [vmem:[#allocation3 + $0xa0] sm:$0xff] %vm263, %v2825
        %2842 = vst.msk [vmem:[#allocation3 + $0xb8] sm:$0xff] %vm263, %v2826
        %2843 = vst.msk [vmem:[#allocation3 + $0xd0] sm:$0xff] %vm263, %v2827
        %2844 = vst.msk [vmem:[#allocation3 + $0xe8] sm:$0xff] %vm263, %v2828
        %2845 = vst.msk [vmem:[#allocation3 + $0x100] sm:$0xff] %vm263, %v2829
        %2846 = vst.msk [vmem:[#allocation3 + $0x118] sm:$0xff] %vm263, %v2830
        %2847 = vst.msk [vmem:[#allocation3 + $0x130] sm:$0xff] %vm263, %v2831
        %2848 = vst.msk [vmem:[#allocation3 + $0x148] sm:$0xff] %vm263, %v2832
        %2849 = vst.msk [vmem:[#allocation3 + $0x160] sm:$0xff] %vm263, %v2833
        %2850 = vst.msk [vmem:[#allocation3 + $0x178] sm:$0xff] %vm263, %v2834
        %v2851 = vld [vmem:[#allocation3] sm:$0xff]
        %v2852 = vld [vmem:[#allocation3 + $0x8] sm:$0xff]
        %v2853 = vld [vmem:[#allocation3 + $0x10] sm:$0xff]
        %v2854 = vld [vmem:[#allocation3 + $0x18] sm:$0xff]
        %v2855 = vld [vmem:[#allocation3 + $0x20] sm:$0xff]
        %v2856 = vld [vmem:[#allocation3 + $0x28] sm:$0xff]
        %v2857 = vld [vmem:[#allocation3 + $0x30] sm:$0xff]
        %v2858 = vld [vmem:[#allocation3 + $0x38] sm:$0xff]
        %v2859 = vld [vmem:[#allocation3 + $0x40] sm:$0xff]
        %v2860 = vld [vmem:[#allocation3 + $0x48] sm:$0xff]
        %v2861 = vld [vmem:[#allocation3 + $0x50] sm:$0xff]
        %v2862 = vld [vmem:[#allocation3 + $0x58] sm:$0xff]
        %v2863 = vld [vmem:[#allocation3 + $0x60] sm:$0xff]
        %v2864 = vld [vmem:[#allocation3 + $0x68] sm:$0xff]
        %v2865 = vld [vmem:[#allocation3 + $0x70] sm:$0xff]
        %v2866 = vld [vmem:[#allocation3 + $0x78] sm:$0xff]
        %v2867 = vld [vmem:[#allocation3 + $0x80] sm:$0xff]
        %v2868 = vld [vmem:[#allocation3 + $0x88] sm:$0xff]
        %v2869 = vld [vmem:[#allocation3 + $0x90] sm:$0xff]
        %v2870 = vld [vmem:[#allocation3 + $0x98] sm:$0xff]
        %v2871 = vld [vmem:[#allocation3 + $0xa0] sm:$0xff]
        %v2872 = vld [vmem:[#allocation3 + $0xa8] sm:$0xff]
        %v2873 = vld [vmem:[#allocation3 + $0xb0] sm:$0xff]
        %v2874 = vld [vmem:[#allocation3 + $0xb8] sm:$0xff]
        %v2875 = vld [vmem:[#allocation3 + $0xc0] sm:$0xff]
        %v2876 = vld [vmem:[#allocation3 + $0xc8] sm:$0xff]
        %v2877 = vld [vmem:[#allocation3 + $0xd0] sm:$0xff]
        %v2878 = vld [vmem:[#allocation3 + $0xd8] sm:$0xff]
        %v2879 = vld [vmem:[#allocation3 + $0xe0] sm:$0xff]
        %v2880 = vld [vmem:[#allocation3 + $0xe8] sm:$0xff]
        %v2881 = vld [vmem:[#allocation3 + $0xf0] sm:$0xff]
        %v2882 = vld [vmem:[#allocation3 + $0xf8] sm:$0xff]
        %v2883 = vld [vmem:[#allocation3 + $0x100] sm:$0xff]
        %v2884 = vld [vmem:[#allocation3 + $0x108] sm:$0xff]
        %v2885 = vld [vmem:[#allocation3 + $0x110] sm:$0xff]
        %v2886 = vld [vmem:[#allocation3 + $0x118] sm:$0xff]
        %v2887 = vld [vmem:[#allocation3 + $0x120] sm:$0xff]
        %v2888 = vld [vmem:[#allocation3 + $0x128] sm:$0xff]
        %v2889 = vld [vmem:[#allocation3 + $0x130] sm:$0xff]
        %v2890 = vld [vmem:[#allocation3 + $0x138] sm:$0xff]
        %v2891 = vld [vmem:[#allocation3 + $0x140] sm:$0xff]
        %v2892 = vld [vmem:[#allocation3 + $0x148] sm:$0xff]
        %v2893 = vld [vmem:[#allocation3 + $0x150] sm:$0xff]
        %v2894 = vld [vmem:[#allocation3 + $0x158] sm:$0xff]
        %v2895 = vld [vmem:[#allocation3 + $0x160] sm:$0xff]
        %v2896 = vld [vmem:[#allocation3 + $0x168] sm:$0xff]
        %v2897 = vld [vmem:[#allocation3 + $0x170] sm:$0xff]
        %v2898 = vld [vmem:[#allocation3 + $0x178] sm:$0xff]
        %s2899 = scalar_lea.vmem %s1, 144
        %v2900 = vld [vmem:[%s2899] sm:$0xf]
        %v2901 = vld [vmem:[%s2899 + $0x4] sm:$0xf]
        %v2902 = vld [vmem:[%s2899 + $0x8] sm:$0xf]
        %v2903 = vld [vmem:[%s2899 + $0xc] sm:$0xf]
        %v2904 = vld [vmem:[%s2899 + $0x10] sm:$0xf]
        %v2905 = vld [vmem:[%s2899 + $0x14] sm:$0xf]
        %v2906 = vld [vmem:[%s2899 + $0x18] sm:$0xf]
        %v2907 = vld [vmem:[%s2899 + $0x1c] sm:$0xf]
        %v2908 = vld [vmem:[%s2899 + $0x20] sm:$0xf]
        %v2909 = vld [vmem:[%s2899 + $0x24] sm:$0xf]
        %v2910 = vld [vmem:[%s2899 + $0x28] sm:$0xf]
        %v2911 = vld [vmem:[%s2899 + $0x2c] sm:$0xf]
        %v2912 = vld [vmem:[%s2899 + $0x30] sm:$0xf]
        %v2913 = vld [vmem:[%s2899 + $0x34] sm:$0xf]
        %v2914 = vld [vmem:[%s2899 + $0x38] sm:$0xf]
        %v2915 = vld [vmem:[%s2899 + $0x3c] sm:$0xf]
        %v2916 = vld [vmem:[%s2899 + $0x40] sm:$0xf]
        %v2917 = vld [vmem:[%s2899 + $0x44] sm:$0xf]
        %v2918 = vld [vmem:[%s2899 + $0x48] sm:$0xf]
        %v2919 = vld [vmem:[%s2899 + $0x4c] sm:$0xf]
        %v2920 = vld [vmem:[%s2899 + $0x50] sm:$0xf]
        %v2921 = vld [vmem:[%s2899 + $0x54] sm:$0xf]
        %v2922 = vld [vmem:[%s2899 + $0x58] sm:$0xf]
        %v2923 = vld [vmem:[%s2899 + $0x5c] sm:$0xf]
        %v2924 = vld [vmem:[%s2899 + $0x60] sm:$0xf]
        %v2925 = vld [vmem:[%s2899 + $0x64] sm:$0xf]
        %v2926 = vld [vmem:[%s2899 + $0x68] sm:$0xf]
        %v2927 = vld [vmem:[%s2899 + $0x6c] sm:$0xf]
        %v2928 = vld [vmem:[%s2899 + $0x70] sm:$0xf]
        %v2929 = vld [vmem:[%s2899 + $0x74] sm:$0xf]
        %v2930 = vld [vmem:[%s2899 + $0x78] sm:$0xf]
        %v2931 = vld [vmem:[%s2899 + $0x7c] sm:$0xf]
        %v2932 = vld [vmem:[%s2899 + $0x80] sm:$0xf]
        %v2933 = vld [vmem:[%s2899 + $0x84] sm:$0xf]
        %v2934 = vld [vmem:[%s2899 + $0x88] sm:$0xf]
        %v2935 = vld [vmem:[%s2899 + $0x8c] sm:$0xf]
        %v2936 = vld [vmem:[%s2 + $0x1] sm:$0x1]
        %v2937 = vlaneseq
        %v2938 = vshrl.u32 %v2937, 7
        %v2939 = vsub.s32 0, %v2938
        %v2940 = vrot.slane %v2936, %v2939
        %v2977 = vunpack.c.l.b16 %v2900
        %v2978 = vunpack.c.l.b16 %v2901
        %v2979 = vunpack.c.l.b16 %v2902
        %v2980 = vunpack.c.l.b16 %v2903
        %v2981 = vunpack.c.l.b16 %v2904
        %v2982 = vunpack.c.l.b16 %v2905
        %v2983 = vunpack.c.l.b16 %v2906
        %v2984 = vunpack.c.l.b16 %v2907
        %v2985 = vunpack.c.l.b16 %v2908
        %v2986 = vunpack.c.l.b16 %v2909
        %v2987 = vunpack.c.l.b16 %v2910
        %v2988 = vunpack.c.l.b16 %v2911
        %v2989 = vunpack.c.l.b16 %v2912
        %v2990 = vunpack.c.l.b16 %v2913
        %v2991 = vunpack.c.l.b16 %v2914
        %v2992 = vunpack.c.l.b16 %v2915
        %v2993 = vunpack.c.l.b16 %v2916
        %v2994 = vunpack.c.l.b16 %v2917
        %v2995 = vunpack.c.l.b16 %v2918
        %v2996 = vunpack.c.l.b16 %v2919
        %v2997 = vunpack.c.l.b16 %v2920
        %v2998 = vunpack.c.l.b16 %v2921
        %v2999 = vunpack.c.l.b16 %v2922
        %v3000 = vunpack.c.l.b16 %v2923
        %v3001 = vunpack.c.l.b16 %v2924
        %v3002 = vunpack.c.l.b16 %v2925
        %v3003 = vunpack.c.l.b16 %v2926
        %v3004 = vunpack.c.l.b16 %v2927
        %v3005 = vunpack.c.l.b16 %v2928
        %v3006 = vunpack.c.l.b16 %v2929
        %v3007 = vunpack.c.l.b16 %v2930
        %v3008 = vunpack.c.l.b16 %v2931
        %v3009 = vunpack.c.l.b16 %v2932
        %v3010 = vunpack.c.l.b16 %v2933
        %v3011 = vunpack.c.l.b16 %v2934
        %v3012 = vunpack.c.l.b16 %v2935
        %v3013 = vpack.c.b16 %v2978, %v2977
        %v3014 = vpack.c.b16 %v2980, %v2979
        %v3015 = vpack.c.b16 %v2982, %v2981
        %v3016 = vpack.c.b16 %v2984, %v2983
        %v3017 = vpack.c.b16 %v2986, %v2985
        %v3018 = vpack.c.b16 %v2988, %v2987
        %v3019 = vpack.c.b16 %v2990, %v2989
        %v3020 = vpack.c.b16 %v2992, %v2991
        %v3021 = vpack.c.b16 %v2994, %v2993
        %v3022 = vpack.c.b16 %v2996, %v2995
        %v3023 = vpack.c.b16 %v2998, %v2997
        %v3024 = vpack.c.b16 %v3000, %v2999
        %v3025 = vpack.c.b16 %v3002, %v3001
        %v3026 = vpack.c.b16 %v3004, %v3003
        %v3027 = vpack.c.b16 %v3006, %v3005
        %v3028 = vpack.c.b16 %v3008, %v3007
        %v3029 = vpack.c.b16 %v3010, %v3009
        %v3030 = vpack.c.b16 %v3012, %v3011
        %v3050 = vsel %vm263, %v2853, 0
        %v3053 = vsel %vm263, %v2856, 0
        %v3056 = vsel %vm263, %v2859, 0
        %v3059 = vsel %vm263, %v2862, 0
        %v3062 = vsel %vm263, %v2865, 0
        %v3065 = vsel %vm263, %v2868, 0
        %v3068 = vsel %vm263, %v2871, 0
        %v3071 = vsel %vm263, %v2874, 0
        %v3074 = vsel %vm263, %v2877, 0
        %v3077 = vsel %vm263, %v2880, 0
        %v3080 = vsel %vm263, %v2883, 0
        %v3083 = vsel %vm263, %v2886, 0
        %v3086 = vsel %vm263, %v2889, 0
        %v3089 = vsel %vm263, %v2892, 0
        %v3092 = vsel %vm263, %v2895, 0
        %v3095 = vsel %vm263, %v2898, 0
        %3097 = vmatprep.subr.bf16.mxu0 0
        %3098 = vmatpush1.bf16.msra.mxu0 %v3013
        %3099 = vmatprep.subr.bf16.mxu0 0
        %3100 = vmatpush1.bf16.msra.mxu0 %v3014
        %3101 = vmatprep.subr.bf16.mxu0 0
        %3102 = vmatpush1.bf16.msra.mxu0 %v3015
        %3103 = vmatprep.subr.bf16.mxu0 0
        %3104 = vmatpush1.bf16.msra.mxu0 %v3016
        %3105 = vmatprep.subr.bf16.mxu0 0
        %3106 = vmatpush1.bf16.msra.mxu0 %v3017
        %3107 = vmatprep.subr.bf16.mxu0 0
        %3108 = vmatpush1.bf16.msra.mxu0 %v3018
        %3109 = vmatprep.subr.bf16.mxu0 0
        %3110 = vmatpush1.bf16.msra.mxu0 %v3019
        %3111 = vmatprep.subr.bf16.mxu0 0
        %3112 = vmatpush1.bf16.msra.mxu0 %v3020
        %3113 = vmatprep.subr.bf16.mxu0 0
        %3114 = vmatpush1.bf16.msra.mxu0 %v3021
        %3115 = vmatprep.subr.bf16.mxu0 0
        %3116 = vmatpush1.bf16.msra.mxu0 %v3022
        %3117 = vmatprep.subr.bf16.mxu0 0
        %3118 = vmatpush1.bf16.msra.mxu0 %v3023
        %3119 = vmatprep.subr.bf16.mxu0 0
        %3120 = vmatpush1.bf16.msra.mxu0 %v3024
        %3121 = vmatprep.subr.bf16.mxu0 0
        %3122 = vmatpush1.bf16.msra.mxu0 %v3025
        %3123 = vmatprep.subr.bf16.mxu0 0
        %3124 = vmatpush1.bf16.msra.mxu0 %v3026
        %3125 = vmatprep.subr.bf16.mxu0 0
        %3126 = vmatpush1.bf16.msra.mxu0 %v3027
        %3127 = vmatprep.subr.bf16.mxu0 0
        %3128 = vmatpush1.bf16.msra.mxu0 %v3028
        %3129 = vmatprep.mubr.bf16.mxu0 %v2852
        %3130 = vmatmul.mubr.bf16.gmra.mrb[0].mxu0 %v2851
        %v3131 = vpop.f32.mrb[0].mxu0
        %v3132 = vadd.f32 %v2940, %v3131
        %v3133 = vpop.f32.mrb[0].mxu0
        %v3134 = vpop.f32.mrb[0].mxu0
        %v3135 = vadd.f32 %v2940, %v3134
        %v3136 = vpop.f32.mrb[0].mxu0
        %3137 = vmatprep.mubr.bf16.mxu0 %v2855
        %3138 = vmatmul.mubr.bf16.gmra.mrb[0].mxu0 %v2854
        %v3139 = vpop.f32.mrb[0].mxu0
        %v3140 = vadd.f32 %v2940, %v3139
        %v3141 = vpop.f32.mrb[0].mxu0
        %v3142 = vpop.f32.mrb[0].mxu0
        %v3143 = vadd.f32 %v2940, %v3142
        %v3144 = vpop.f32.mrb[0].mxu0
        %3145 = vmatprep.mubr.bf16.mxu0 %v2858
        %3146 = vmatmul.mubr.bf16.gmra.mrb[0].mxu0 %v2857
        %v3147 = vpop.f32.mrb[0].mxu0
        %v3148 = vadd.f32 %v2940, %v3147
        %v3149 = vpop.f32.mrb[0].mxu0
        %v3150 = vpop.f32.mrb[0].mxu0
        %v3151 = vadd.f32 %v2940, %v3150
        %v3152 = vpop.f32.mrb[0].mxu0
        %3153 = vmatprep.mubr.bf16.mxu0 %v2861
        %3154 = vmatmul.mubr.bf16.gmra.mrb[0].mxu0 %v2860
        %v3155 = vpop.f32.mrb[0].mxu0
        %v3156 = vadd.f32 %v2940, %v3155
        %v3157 = vpop.f32.mrb[0].mxu0
        %v3158 = vpop.f32.mrb[0].mxu0
        %v3159 = vadd.f32 %v2940, %v3158
        %v3160 = vpop.f32.mrb[0].mxu0
        %3161 = vmatprep.mubr.bf16.mxu0 %v2864
        %3162 = vmatmul.mubr.bf16.gmra.mrb[0].mxu0 %v2863
        %v3163 = vpop.f32.mrb[0].mxu0
        %v3164 = vadd.f32 %v2940, %v3163
        %v3165 = vpop.f32.mrb[0].mxu0
        %v3166 = vpop.f32.mrb[0].mxu0
        %v3167 = vadd.f32 %v2940, %v3166
        %v3168 = vpop.f32.mrb[0].mxu0
        %3169 = vmatprep.mubr.bf16.mxu0 %v2867
        %3170 = vmatmul.mubr.bf16.gmra.mrb[0].mxu0 %v2866
        %v3171 = vpop.f32.mrb[0].mxu0
        %v3172 = vadd.f32 %v2940, %v3171
        %v3173 = vpop.f32.mrb[0].mxu0
        %v3174 = vpop.f32.mrb[0].mxu0
        %v3175 = vadd.f32 %v2940, %v3174
        %v3176 = vpop.f32.mrb[0].mxu0
        %3177 = vmatprep.mubr.bf16.mxu0 %v2870
        %3178 = vmatmul.mubr.bf16.gmra.mrb[0].mxu0 %v2869
        %v3179 = vpop.f32.mrb[0].mxu0
        %v3180 = vadd.f32 %v2940, %v3179
        %v3181 = vpop.f32.mrb[0].mxu0
        %v3182 = vpop.f32.mrb[0].mxu0
        %v3183 = vadd.f32 %v2940, %v3182
        %v3184 = vpop.f32.mrb[0].mxu0
        %3185 = vmatprep.mubr.bf16.mxu0 %v2873
        %3186 = vmatmul.mubr.bf16.gmra.mrb[0].mxu0 %v2872
        %v3187 = vpop.f32.mrb[0].mxu0
        %v3188 = vadd.f32 %v2940, %v3187
        %v3189 = vpop.f32.mrb[0].mxu0
        %v3190 = vpop.f32.mrb[0].mxu0
        %v3191 = vadd.f32 %v2940, %v3190
        %v3192 = vpop.f32.mrb[0].mxu0
        %3193 = vmatprep.mubr.bf16.mxu0 %v2876
        %3194 = vmatmul.mubr.bf16.gmra.mrb[0].mxu0 %v2875
        %v3195 = vpop.f32.mrb[0].mxu0
        %v3196 = vadd.f32 %v2940, %v3195
        %v3197 = vpop.f32.mrb[0].mxu0
        %v3198 = vpop.f32.mrb[0].mxu0
        %v3199 = vadd.f32 %v2940, %v3198
        %v3200 = vpop.f32.mrb[0].mxu0
        %3201 = vmatprep.mubr.bf16.mxu0 %v2879
        %3202 = vmatmul.mubr.bf16.gmra.mrb[0].mxu0 %v2878
        %v3203 = vpop.f32.mrb[0].mxu0
        %v3204 = vadd.f32 %v2940, %v3203
        %v3205 = vpop.f32.mrb[0].mxu0
        %v3206 = vpop.f32.mrb[0].mxu0
        %v3207 = vadd.f32 %v2940, %v3206
        %v3208 = vpop.f32.mrb[0].mxu0
        %3209 = vmatprep.mubr.bf16.mxu0 %v2882
        %3210 = vmatmul.mubr.bf16.gmra.mrb[0].mxu0 %v2881
        %v3211 = vpop.f32.mrb[0].mxu0
        %v3212 = vadd.f32 %v2940, %v3211
        %v3213 = vpop.f32.mrb[0].mxu0
        %v3214 = vpop.f32.mrb[0].mxu0
        %v3215 = vadd.f32 %v2940, %v3214
        %v3216 = vpop.f32.mrb[0].mxu0
        %3217 = vmatprep.mubr.bf16.mxu0 %v2885
        %3218 = vmatmul.mubr.bf16.gmra.mrb[0].mxu0 %v2884
        %v3219 = vpop.f32.mrb[0].mxu0
        %v3220 = vadd.f32 %v2940, %v3219
        %v3221 = vpop.f32.mrb[0].mxu0
        %v3222 = vpop.f32.mrb[0].mxu0
        %v3223 = vadd.f32 %v2940, %v3222
        %v3224 = vpop.f32.mrb[0].mxu0
        %3225 = vmatprep.mubr.bf16.mxu0 %v2888
        %3226 = vmatmul.mubr.bf16.gmra.mrb[0].mxu0 %v2887
        %v3227 = vpop.f32.mrb[0].mxu0
        %v3228 = vadd.f32 %v2940, %v3227
        %v3229 = vpop.f32.mrb[0].mxu0
        %v3230 = vpop.f32.mrb[0].mxu0
        %v3231 = vadd.f32 %v2940, %v3230
        %v3232 = vpop.f32.mrb[0].mxu0
        %3233 = vmatprep.mubr.bf16.mxu0 %v2891
        %3234 = vmatmul.mubr.bf16.gmra.mrb[0].mxu0 %v2890
        %v3235 = vpop.f32.mrb[0].mxu0
        %v3236 = vadd.f32 %v2940, %v3235
        %v3237 = vpop.f32.mrb[0].mxu0
        %v3238 = vpop.f32.mrb[0].mxu0
        %v3239 = vadd.f32 %v2940, %v3238
        %v3240 = vpop.f32.mrb[0].mxu0
        %3241 = vmatprep.mubr.bf16.mxu0 %v2894
        %3242 = vmatmul.mubr.bf16.gmra.mrb[0].mxu0 %v2893
        %v3243 = vpop.f32.mrb[0].mxu0
        %v3244 = vadd.f32 %v2940, %v3243
        %v3245 = vpop.f32.mrb[0].mxu0
        %v3246 = vpop.f32.mrb[0].mxu0
        %v3247 = vadd.f32 %v2940, %v3246
        %v3248 = vpop.f32.mrb[0].mxu0
        %3249 = vmatprep.mubr.bf16.mxu0 %v2897
        %3250 = vmatmul.mubr.bf16.gmra.mrb[0].mxu0 %v2896
        %v3251 = vpop.f32.mrb[0].mxu0
        %v3252 = vadd.f32 %v2940, %v3251
        %v3253 = vpop.f32.mrb[0].mxu0
        %v3254 = vpop.f32.mrb[0].mxu0
        %v3255 = vadd.f32 %v2940, %v3254
        %v3256 = vpop.f32.mrb[0].mxu0
        %3257 = vdwg.mxu0
        %3258 = vmatprep.subr.bf16.mxu0 0
        %3259 = vmatpush1.bf16.msra.mxu0 %v3029
        %3260 = vmatprep.subr.bf16.mxu0 0
        %3261 = vmatpush1.bf16.msra.mxu0 %v3030
        %3262 = vmatprep.subr.bf16.mxu0 0
        %3263 = vmatpush1.bf16.msra.mxu0 0
        %3264 = vmatprep.subr.bf16.mxu0 0
        %3265 = vmatpush1.bf16.msra.mxu0 0
        %3266 = vmatprep.subr.bf16.mxu0 0
        %3267 = vmatpush1.bf16.msra.mxu0 0
        %3268 = vmatprep.subr.bf16.mxu0 0
        %3269 = vmatpush1.bf16.msra.mxu0 0
        %3270 = vmatprep.subr.bf16.mxu0 0
        %3271 = vmatpush1.bf16.msra.mxu0 0
        %3272 = vmatprep.subr.bf16.mxu0 0
        %3273 = vmatpush1.bf16.msra.mxu0 0
        %3274 = vmatprep.subr.bf16.mxu0 0
        %3275 = vmatpush1.bf16.msra.mxu0 0
        %3276 = vmatprep.subr.bf16.mxu0 0
        %3277 = vmatpush1.bf16.msra.mxu0 0
        %3278 = vmatprep.subr.bf16.mxu0 0
        %3279 = vmatpush1.bf16.msra.mxu0 0
        %3280 = vmatprep.subr.bf16.mxu0 0
        %3281 = vmatpush1.bf16.msra.mxu0 0
        %3282 = vmatprep.subr.bf16.mxu0 0
        %3283 = vmatpush1.bf16.msra.mxu0 0
        %3284 = vmatprep.subr.bf16.mxu0 0
        %3285 = vmatpush1.bf16.msra.mxu0 0
        %3286 = vmatprep.subr.bf16.mxu0 0
        %3287 = vmatpush1.bf16.msra.mxu0 0
        %3288 = vmatprep.subr.bf16.mxu0 0
        %3289 = vmatpush1.bf16.msra.mxu0 0
        %3290 = vmatprep.mubr.bf16.mxu0 0
        %3291 = vmatmul.mubr.bf16.gmra.mrb[0].mxu0 %v3050
        %v3292 = vpop.f32.mrb[0].mxu0
        %v3293 = vadd.f32 %v3132, %v3292
        %v3294 = vpop.f32.mrb[0].mxu0
        %v3295 = vpop.f32.mrb[0].mxu0
        %v3296 = vadd.f32 %v3135, %v3295
        %v3297 = vpop.f32.mrb[0].mxu0
        %3298 = vmatprep.mubr.bf16.mxu0 0
        %3299 = vmatmul.mubr.bf16.gmra.mrb[0].mxu0 %v3053
        %v3300 = vpop.f32.mrb[0].mxu0
        %v3301 = vadd.f32 %v3140, %v3300
        %v3302 = vpop.f32.mrb[0].mxu0
        %v3303 = vpop.f32.mrb[0].mxu0
        %v3304 = vadd.f32 %v3143, %v3303
        %v3305 = vpop.f32.mrb[0].mxu0
        %3306 = vmatprep.mubr.bf16.mxu0 0
        %3307 = vmatmul.mubr.bf16.gmra.mrb[0].mxu0 %v3056
        %v3308 = vpop.f32.mrb[0].mxu0
        %v3309 = vadd.f32 %v3148, %v3308
        %v3310 = vpop.f32.mrb[0].mxu0
        %v3311 = vpop.f32.mrb[0].mxu0
        %v3312 = vadd.f32 %v3151, %v3311
        %v3313 = vpop.f32.mrb[0].mxu0
        %3314 = vmatprep.mubr.bf16.mxu0 0
        %3315 = vmatmul.mubr.bf16.gmra.mrb[0].mxu0 %v3059
        %v3316 = vpop.f32.mrb[0].mxu0
        %v3317 = vadd.f32 %v3156, %v3316
        %v3318 = vpop.f32.mrb[0].mxu0
        %v3319 = vpop.f32.mrb[0].mxu0
        %v3320 = vadd.f32 %v3159, %v3319
        %v3321 = vpop.f32.mrb[0].mxu0
        %3322 = vmatprep.mubr.bf16.mxu0 0
        %3323 = vmatmul.mubr.bf16.gmra.mrb[0].mxu0 %v3062
        %v3324 = vpop.f32.mrb[0].mxu0
        %v3325 = vadd.f32 %v3164, %v3324
        %v3326 = vpop.f32.mrb[0].mxu0
        %v3327 = vpop.f32.mrb[0].mxu0
        %v3328 = vadd.f32 %v3167, %v3327
        %v3329 = vpop.f32.mrb[0].mxu0
        %3330 = vmatprep.mubr.bf16.mxu0 0
        %3331 = vmatmul.mubr.bf16.gmra.mrb[0].mxu0 %v3065
        %v3332 = vpop.f32.mrb[0].mxu0
        %v3333 = vadd.f32 %v3172, %v3332
        %v3334 = vpop.f32.mrb[0].mxu0
        %v3335 = vpop.f32.mrb[0].mxu0
        %v3336 = vadd.f32 %v3175, %v3335
        %v3337 = vpop.f32.mrb[0].mxu0
        %3338 = vmatprep.mubr.bf16.mxu0 0
        %3339 = vmatmul.mubr.bf16.gmra.mrb[0].mxu0 %v3068
        %v3340 = vpop.f32.mrb[0].mxu0
        %v3341 = vadd.f32 %v3180, %v3340
        %v3342 = vpop.f32.mrb[0].mxu0
        %v3343 = vpop.f32.mrb[0].mxu0
        %v3344 = vadd.f32 %v3183, %v3343
        %v3345 = vpop.f32.mrb[0].mxu0
        %3346 = vmatprep.mubr.bf16.mxu0 0
        %3347 = vmatmul.mubr.bf16.gmra.mrb[0].mxu0 %v3071
        %v3348 = vpop.f32.mrb[0].mxu0
        %v3349 = vadd.f32 %v3188, %v3348
        %v3350 = vpop.f32.mrb[0].mxu0
        %v3351 = vpop.f32.mrb[0].mxu0
        %v3352 = vadd.f32 %v3191, %v3351
        %v3353 = vpop.f32.mrb[0].mxu0
        %3354 = vmatprep.mubr.bf16.mxu0 0
        %3355 = vmatmul.mubr.bf16.gmra.mrb[0].mxu0 %v3074
        %v3356 = vpop.f32.mrb[0].mxu0
        %v3357 = vadd.f32 %v3196, %v3356
        %v3358 = vpop.f32.mrb[0].mxu0
        %v3359 = vpop.f32.mrb[0].mxu0
        %v3360 = vadd.f32 %v3199, %v3359
        %v3361 = vpop.f32.mrb[0].mxu0
        %3362 = vmatprep.mubr.bf16.mxu0 0
        %3363 = vmatmul.mubr.bf16.gmra.mrb[0].mxu0 %v3077
        %v3364 = vpop.f32.mrb[0].mxu0
        %v3365 = vadd.f32 %v3204, %v3364
        %v3366 = vpop.f32.mrb[0].mxu0
        %v3367 = vpop.f32.mrb[0].mxu0
        %v3368 = vadd.f32 %v3207, %v3367
        %v3369 = vpop.f32.mrb[0].mxu0
        %3370 = vmatprep.mubr.bf16.mxu0 0
        %3371 = vmatmul.mubr.bf16.gmra.mrb[0].mxu0 %v3080
        %v3372 = vpop.f32.mrb[0].mxu0
        %v3373 = vadd.f32 %v3212, %v3372
        %v3374 = vpop.f32.mrb[0].mxu0
        %v3375 = vpop.f32.mrb[0].mxu0
        %v3376 = vadd.f32 %v3215, %v3375
        %v3377 = vpop.f32.mrb[0].mxu0
        %3378 = vmatprep.mubr.bf16.mxu0 0
        %3379 = vmatmul.mubr.bf16.gmra.mrb[0].mxu0 %v3083
        %v3380 = vpop.f32.mrb[0].mxu0
        %v3381 = vadd.f32 %v3220, %v3380
        %v3382 = vpop.f32.mrb[0].mxu0
        %v3383 = vpop.f32.mrb[0].mxu0
        %v3384 = vadd.f32 %v3223, %v3383
        %v3385 = vpop.f32.mrb[0].mxu0
        %3386 = vmatprep.mubr.bf16.mxu0 0
        %3387 = vmatmul.mubr.bf16.gmra.mrb[0].mxu0 %v3086
        %v3388 = vpop.f32.mrb[0].mxu0
        %v3389 = vadd.f32 %v3228, %v3388
        %v3390 = vpop.f32.mrb[0].mxu0
        %v3391 = vpop.f32.mrb[0].mxu0
        %v3392 = vadd.f32 %v3231, %v3391
        %v3393 = vpop.f32.mrb[0].mxu0
        %3394 = vmatprep.mubr.bf16.mxu0 0
        %3395 = vmatmul.mubr.bf16.gmra.mrb[0].mxu0 %v3089
        %v3396 = vpop.f32.mrb[0].mxu0
        %v3397 = vadd.f32 %v3236, %v3396
        %v3398 = vpop.f32.mrb[0].mxu0
        %v3399 = vpop.f32.mrb[0].mxu0
        %v3400 = vadd.f32 %v3239, %v3399
        %v3401 = vpop.f32.mrb[0].mxu0
        %3402 = vmatprep.mubr.bf16.mxu0 0
        %3403 = vmatmul.mubr.bf16.gmra.mrb[0].mxu0 %v3092
        %v3404 = vpop.f32.mrb[0].mxu0
        %v3405 = vadd.f32 %v3244, %v3404
        %v3406 = vpop.f32.mrb[0].mxu0
        %v3407 = vpop.f32.mrb[0].mxu0
        %v3408 = vadd.f32 %v3247, %v3407
        %v3409 = vpop.f32.mrb[0].mxu0
        %3410 = vmatprep.mubr.bf16.mxu0 0
        %3411 = vmatmul.mubr.bf16.gmra.mrb[0].mxu0 %v3095
        %v3412 = vpop.f32.mrb[0].mxu0
        %v3413 = vadd.f32 %v3252, %v3412
        %v3414 = vpop.f32.mrb[0].mxu0
        %v3415 = vpop.f32.mrb[0].mxu0
        %v3416 = vadd.f32 %v3255, %v3415
        %v3417 = vpop.f32.mrb[0].mxu0
        %3418 = vdwg.mxu0
        %v3419 = vadd.f32 %v3293, %v230
        %v3420 = vadd.f32 %v3296, %v231
        %v3421 = vadd.f32 %v3301, %v232
        %v3422 = vadd.f32 %v3304, %v233
        %v3423 = vadd.f32 %v3309, %v234
        %v3424 = vadd.f32 %v3312, %v235
        %v3425 = vadd.f32 %v3317, %v236
        %v3426 = vadd.f32 %v3320, %v237
        %v3427 = vadd.f32 %v3325, %v238
        %v3428 = vadd.f32 %v3328, %v239
        %v3429 = vadd.f32 %v3333, %v240
        %v3430 = vadd.f32 %v3336, %v241
        %v3431 = vadd.f32 %v3341, %v242
        %v3432 = vadd.f32 %v3344, %v243
        %v3433 = vadd.f32 %v3349, %v244
        %v3434 = vadd.f32 %v3352, %v245
        %v3435 = vadd.f32 %v3357, %v246
        %v3436 = vadd.f32 %v3360, %v247
        %v3437 = vadd.f32 %v3365, %v248
        %v3438 = vadd.f32 %v3368, %v249
        %v3439 = vadd.f32 %v3373, %v250
        %v3440 = vadd.f32 %v3376, %v251
        %v3441 = vadd.f32 %v3381, %v252
        %v3442 = vadd.f32 %v3384, %v253
        %v3443 = vadd.f32 %v3389, %v254
        %v3444 = vadd.f32 %v3392, %v255
        %v3445 = vadd.f32 %v3397, %v256
        %v3446 = vadd.f32 %v3400, %v257
        %v3447 = vadd.f32 %v3405, %v258
        %v3448 = vadd.f32 %v3408, %v259
        %v3449 = vadd.f32 %v3413, %v260
        %v3450 = vadd.f32 %v3416, %v261
        %v3451 = vsel %vm263, %v3419, 0.0
        %3452 = vadd.xlane.f32.xlu0 %v3451
        %v3453 = vpop.xlane.xlu0 %3452
        %v3454 = vsel %vm263, %v3420, 0.0
        %3455 = vadd.xlane.f32.xlu0 %v3454
        %v3456 = vpop.xlane.xlu0 %3455
        %v3457 = vsel %vm263, %v3421, 0.0
        %3458 = vadd.xlane.f32.xlu0 %v3457
        %v3459 = vpop.xlane.xlu0 %3458
        %v3460 = vsel %vm263, %v3422, 0.0
        %3461 = vadd.xlane.f32.xlu0 %v3460
        %v3462 = vpop.xlane.xlu0 %3461
        %v3463 = vsel %vm263, %v3423, 0.0
        %3464 = vadd.xlane.f32.xlu0 %v3463
        %v3465 = vpop.xlane.xlu0 %3464
        %v3466 = vsel %vm263, %v3424, 0.0
        %3467 = vadd.xlane.f32.xlu0 %v3466
        %v3468 = vpop.xlane.xlu0 %3467
        %v3469 = vsel %vm263, %v3425, 0.0
        %3470 = vadd.xlane.f32.xlu0 %v3469
        %v3471 = vpop.xlane.xlu0 %3470
        %v3472 = vsel %vm263, %v3426, 0.0
        %3473 = vadd.xlane.f32.xlu0 %v3472
        %v3474 = vpop.xlane.xlu0 %3473
        %v3475 = vsel %vm263, %v3427, 0.0
        %3476 = vadd.xlane.f32.xlu0 %v3475
        %v3477 = vpop.xlane.xlu0 %3476
        %v3478 = vsel %vm263, %v3428, 0.0
        %3479 = vadd.xlane.f32.xlu0 %v3478
        %v3480 = vpop.xlane.xlu0 %3479
        %v3481 = vsel %vm263, %v3429, 0.0
        %3482 = vadd.xlane.f32.xlu0 %v3481
        %v3483 = vpop.xlane.xlu0 %3482
        %v3484 = vsel %vm263, %v3430, 0.0
        %3485 = vadd.xlane.f32.xlu0 %v3484
        %v3486 = vpop.xlane.xlu0 %3485
        %v3487 = vsel %vm263, %v3431, 0.0
        %3488 = vadd.xlane.f32.xlu0 %v3487
        %v3489 = vpop.xlane.xlu0 %3488
        %v3490 = vsel %vm263, %v3432, 0.0
        %3491 = vadd.xlane.f32.xlu0 %v3490
        %v3492 = vpop.xlane.xlu0 %3491
        %v3493 = vsel %vm263, %v3433, 0.0
        %3494 = vadd.xlane.f32.xlu0 %v3493
        %v3495 = vpop.xlane.xlu0 %3494
        %v3496 = vsel %vm263, %v3434, 0.0
        %3497 = vadd.xlane.f32.xlu0 %v3496
        %v3498 = vpop.xlane.xlu0 %3497
        %v3499 = vsel %vm263, %v3435, 0.0
        %3500 = vadd.xlane.f32.xlu0 %v3499
        %v3501 = vpop.xlane.xlu0 %3500
        %v3502 = vsel %vm263, %v3436, 0.0
        %3503 = vadd.xlane.f32.xlu0 %v3502
        %v3504 = vpop.xlane.xlu0 %3503
        %v3505 = vsel %vm263, %v3437, 0.0
        %3506 = vadd.xlane.f32.xlu0 %v3505
        %v3507 = vpop.xlane.xlu0 %3506
        %v3508 = vsel %vm263, %v3438, 0.0
        %3509 = vadd.xlane.f32.xlu0 %v3508
        %v3510 = vpop.xlane.xlu0 %3509
        %v3511 = vsel %vm263, %v3439, 0.0
        %3512 = vadd.xlane.f32.xlu0 %v3511
        %v3513 = vpop.xlane.xlu0 %3512
        %v3514 = vsel %vm263, %v3440, 0.0
        %3515 = vadd.xlane.f32.xlu0 %v3514
        %v3516 = vpop.xlane.xlu0 %3515
        %v3517 = vsel %vm263, %v3441, 0.0
        %3518 = vadd.xlane.f32.xlu0 %v3517
        %v3519 = vpop.xlane.xlu0 %3518
        %v3520 = vsel %vm263, %v3442, 0.0
        %3521 = vadd.xlane.f32.xlu0 %v3520
        %v3522 = vpop.xlane.xlu0 %3521
        %v3523 = vsel %vm263, %v3443, 0.0
        %3524 = vadd.xlane.f32.xlu0 %v3523
        %v3525 = vpop.xlane.xlu0 %3524
        %v3526 = vsel %vm263, %v3444, 0.0
        %3527 = vadd.xlane.f32.xlu0 %v3526
        %v3528 = vpop.xlane.xlu0 %3527
        %v3529 = vsel %vm263, %v3445, 0.0
        %3530 = vadd.xlane.f32.xlu0 %v3529
        %v3531 = vpop.xlane.xlu0 %3530
        %v3532 = vsel %vm263, %v3446, 0.0
        %3533 = vadd.xlane.f32.xlu0 %v3532
        %v3534 = vpop.xlane.xlu0 %3533
        %v3535 = vsel %vm263, %v3447, 0.0
        %3536 = vadd.xlane.f32.xlu0 %v3535
        %v3537 = vpop.xlane.xlu0 %3536
        %v3538 = vsel %vm263, %v3448, 0.0
        %3539 = vadd.xlane.f32.xlu0 %v3538
        %v3540 = vpop.xlane.xlu0 %3539
        %v3541 = vsel %vm263, %v3449, 0.0
        %3542 = vadd.xlane.f32.xlu0 %v3541
        %v3543 = vpop.xlane.xlu0 %3542
        %v3544 = vsel %vm263, %v3450, 0.0
        %3545 = vadd.xlane.f32.xlu0 %v3544
        %v3546 = vpop.xlane.xlu0 %3545
        %v3547 = vrcp.pop 32.0
        %v3548 = vmul.f32 %v3453, %v3547
        %v3549 = vmul.f32 %v3456, %v3547
        %v3550 = vmul.f32 %v3459, %v3547
        %v3551 = vmul.f32 %v3462, %v3547
        %v3552 = vmul.f32 %v3465, %v3547
        %v3553 = vmul.f32 %v3468, %v3547
        %v3554 = vmul.f32 %v3471, %v3547
        %v3555 = vmul.f32 %v3474, %v3547
        %v3556 = vmul.f32 %v3477, %v3547
        %v3557 = vmul.f32 %v3480, %v3547
        %v3558 = vmul.f32 %v3483, %v3547
        %v3559 = vmul.f32 %v3486, %v3547
        %v3560 = vmul.f32 %v3489, %v3547
        %v3561 = vmul.f32 %v3492, %v3547
        %v3562 = vmul.f32 %v3495, %v3547
        %v3563 = vmul.f32 %v3498, %v3547
        %v3564 = vmul.f32 %v3501, %v3547
        %v3565 = vmul.f32 %v3504, %v3547
        %v3566 = vmul.f32 %v3507, %v3547
        %v3567 = vmul.f32 %v3510, %v3547
        %v3568 = vmul.f32 %v3513, %v3547
        %v3569 = vmul.f32 %v3516, %v3547
        %v3570 = vmul.f32 %v3519, %v3547
        %v3571 = vmul.f32 %v3522, %v3547
        %v3572 = vmul.f32 %v3525, %v3547
        %v3573 = vmul.f32 %v3528, %v3547
        %v3574 = vmul.f32 %v3531, %v3547
        %v3575 = vmul.f32 %v3534, %v3547
        %v3576 = vmul.f32 %v3537, %v3547
        %v3577 = vmul.f32 %v3540, %v3547
        %v3578 = vmul.f32 %v3543, %v3547
        %v3579 = vmul.f32 %v3546, %v3547
        %v3580 = vsub.f32 %v3419, %v3548
        %v3581 = vsub.f32 %v3420, %v3549
        %v3582 = vsub.f32 %v3421, %v3550
        %v3583 = vsub.f32 %v3422, %v3551
        %v3584 = vsub.f32 %v3423, %v3552
        %v3585 = vsub.f32 %v3424, %v3553
        %v3586 = vsub.f32 %v3425, %v3554
        %v3587 = vsub.f32 %v3426, %v3555
        %v3588 = vsub.f32 %v3427, %v3556
        %v3589 = vsub.f32 %v3428, %v3557
        %v3590 = vsub.f32 %v3429, %v3558
        %v3591 = vsub.f32 %v3430, %v3559
        %v3592 = vsub.f32 %v3431, %v3560
        %v3593 = vsub.f32 %v3432, %v3561
        %v3594 = vsub.f32 %v3433, %v3562
        %v3595 = vsub.f32 %v3434, %v3563
        %v3596 = vsub.f32 %v3435, %v3564
        %v3597 = vsub.f32 %v3436, %v3565
        %v3598 = vsub.f32 %v3437, %v3566
        %v3599 = vsub.f32 %v3438, %v3567
        %v3600 = vsub.f32 %v3439, %v3568
        %v3601 = vsub.f32 %v3440, %v3569
        %v3602 = vsub.f32 %v3441, %v3570
        %v3603 = vsub.f32 %v3442, %v3571
        %v3604 = vsub.f32 %v3443, %v3572
        %v3605 = vsub.f32 %v3444, %v3573
        %v3606 = vsub.f32 %v3445, %v3574
        %v3607 = vsub.f32 %v3446, %v3575
        %v3608 = vsub.f32 %v3447, %v3576
        %v3609 = vsub.f32 %v3448, %v3577
        %v3610 = vsub.f32 %v3449, %v3578
        %v3611 = vsub.f32 %v3450, %v3579
        %v3612 = vmul.f32 %v3580, %v3580
        %v3613 = vmul.f32 %v3581, %v3581
        %v3614 = vmul.f32 %v3582, %v3582
        %v3615 = vmul.f32 %v3583, %v3583
        %v3616 = vmul.f32 %v3584, %v3584
        %v3617 = vmul.f32 %v3585, %v3585
        %v3618 = vmul.f32 %v3586, %v3586
        %v3619 = vmul.f32 %v3587, %v3587
        %v3620 = vmul.f32 %v3588, %v3588
        %v3621 = vmul.f32 %v3589, %v3589
        %v3622 = vmul.f32 %v3590, %v3590
        %v3623 = vmul.f32 %v3591, %v3591
        %v3624 = vmul.f32 %v3592, %v3592
        %v3625 = vmul.f32 %v3593, %v3593
        %v3626 = vmul.f32 %v3594, %v3594
        %v3627 = vmul.f32 %v3595, %v3595
        %v3628 = vmul.f32 %v3596, %v3596
        %v3629 = vmul.f32 %v3597, %v3597
        %v3630 = vmul.f32 %v3598, %v3598
        %v3631 = vmul.f32 %v3599, %v3599
        %v3632 = vmul.f32 %v3600, %v3600
        %v3633 = vmul.f32 %v3601, %v3601
        %v3634 = vmul.f32 %v3602, %v3602
        %v3635 = vmul.f32 %v3603, %v3603
        %v3636 = vmul.f32 %v3604, %v3604
        %v3637 = vmul.f32 %v3605, %v3605
        %v3638 = vmul.f32 %v3606, %v3606
        %v3639 = vmul.f32 %v3607, %v3607
        %v3640 = vmul.f32 %v3608, %v3608
        %v3641 = vmul.f32 %v3609, %v3609
        %v3642 = vmul.f32 %v3610, %v3610
        %v3643 = vmul.f32 %v3611, %v3611
        %v3644 = vsel %vm263, %v3612, 0.0
        %3645 = vadd.xlane.f32.xlu0 %v3644
        %v3646 = vpop.xlane.xlu0 %3645
        %v3647 = vsel %vm263, %v3613, 0.0
        %3648 = vadd.xlane.f32.xlu0 %v3647
        %v3649 = vpop.xlane.xlu0 %3648
        %v3650 = vsel %vm263, %v3614, 0.0
        %3651 = vadd.xlane.f32.xlu0 %v3650
        %v3652 = vpop.xlane.xlu0 %3651
        %v3653 = vsel %vm263, %v3615, 0.0
        %3654 = vadd.xlane.f32.xlu0 %v3653
        %v3655 = vpop.xlane.xlu0 %3654
        %v3656 = vsel %vm263, %v3616, 0.0
        %3657 = vadd.xlane.f32.xlu0 %v3656
        %v3658 = vpop.xlane.xlu0 %3657
        %v3659 = vsel %vm263, %v3617, 0.0
        %3660 = vadd.xlane.f32.xlu0 %v3659
        %v3661 = vpop.xlane.xlu0 %3660
        %v3662 = vsel %vm263, %v3618, 0.0
        %3663 = vadd.xlane.f32.xlu0 %v3662
        %v3664 = vpop.xlane.xlu0 %3663
        %v3665 = vsel %vm263, %v3619, 0.0
        %3666 = vadd.xlane.f32.xlu0 %v3665
        %v3667 = vpop.xlane.xlu0 %3666
        %v3668 = vsel %vm263, %v3620, 0.0
        %3669 = vadd.xlane.f32.xlu0 %v3668
        %v3670 = vpop.xlane.xlu0 %3669
        %v3671 = vsel %vm263, %v3621, 0.0
        %3672 = vadd.xlane.f32.xlu0 %v3671
        %v3673 = vpop.xlane.xlu0 %3672
        %v3674 = vsel %vm263, %v3622, 0.0
        %3675 = vadd.xlane.f32.xlu0 %v3674
        %v3676 = vpop.xlane.xlu0 %3675
        %v3677 = vsel %vm263, %v3623, 0.0
        %3678 = vadd.xlane.f32.xlu0 %v3677
        %v3679 = vpop.xlane.xlu0 %3678
        %v3680 = vsel %vm263, %v3624, 0.0
        %3681 = vadd.xlane.f32.xlu0 %v3680
        %v3682 = vpop.xlane.xlu0 %3681
        %v3683 = vsel %vm263, %v3625, 0.0
        %3684 = vadd.xlane.f32.xlu0 %v3683
        %v3685 = vpop.xlane.xlu0 %3684
        %v3686 = vsel %vm263, %v3626, 0.0
        %3687 = vadd.xlane.f32.xlu0 %v3686
        %v3688 = vpop.xlane.xlu0 %3687
        %v3689 = vsel %vm263, %v3627, 0.0
        %3690 = vadd.xlane.f32.xlu0 %v3689
        %v3691 = vpop.xlane.xlu0 %3690
        %v3692 = vsel %vm263, %v3628, 0.0
        %3693 = vadd.xlane.f32.xlu0 %v3692
        %v3694 = vpop.xlane.xlu0 %3693
        %v3695 = vsel %vm263, %v3629, 0.0
        %3696 = vadd.xlane.f32.xlu0 %v3695
        %v3697 = vpop.xlane.xlu0 %3696
        %v3698 = vsel %vm263, %v3630, 0.0
        %3699 = vadd.xlane.f32.xlu0 %v3698
        %v3700 = vpop.xlane.xlu0 %3699
        %v3701 = vsel %vm263, %v3631, 0.0
        %3702 = vadd.xlane.f32.xlu0 %v3701
        %v3703 = vpop.xlane.xlu0 %3702
        %v3704 = vsel %vm263, %v3632, 0.0
        %3705 = vadd.xlane.f32.xlu0 %v3704
        %v3706 = vpop.xlane.xlu0 %3705
        %v3707 = vsel %vm263, %v3633, 0.0
        %3708 = vadd.xlane.f32.xlu0 %v3707
        %v3709 = vpop.xlane.xlu0 %3708
        %v3710 = vsel %vm263, %v3634, 0.0
        %3711 = vadd.xlane.f32.xlu0 %v3710
        %v3712 = vpop.xlane.xlu0 %3711
        %v3713 = vsel %vm263, %v3635, 0.0
        %3714 = vadd.xlane.f32.xlu0 %v3713
        %v3715 = vpop.xlane.xlu0 %3714
        %v3716 = vsel %vm263, %v3636, 0.0
        %3717 = vadd.xlane.f32.xlu0 %v3716
        %v3718 = vpop.xlane.xlu0 %3717
        %v3719 = vsel %vm263, %v3637, 0.0
        %3720 = vadd.xlane.f32.xlu0 %v3719
        %v3721 = vpop.xlane.xlu0 %3720
        %v3722 = vsel %vm263, %v3638, 0.0
        %3723 = vadd.xlane.f32.xlu0 %v3722
        %v3724 = vpop.xlane.xlu0 %3723
        %v3725 = vsel %vm263, %v3639, 0.0
        %3726 = vadd.xlane.f32.xlu0 %v3725
        %v3727 = vpop.xlane.xlu0 %3726
        %v3728 = vsel %vm263, %v3640, 0.0
        %3729 = vadd.xlane.f32.xlu0 %v3728
        %v3730 = vpop.xlane.xlu0 %3729
        %v3731 = vsel %vm263, %v3641, 0.0
        %3732 = vadd.xlane.f32.xlu0 %v3731
        %v3733 = vpop.xlane.xlu0 %3732
        %v3734 = vsel %vm263, %v3642, 0.0
        %3735 = vadd.xlane.f32.xlu0 %v3734
        %v3736 = vpop.xlane.xlu0 %3735
        %v3737 = vsel %vm263, %v3643, 0.0
        %3738 = vadd.xlane.f32.xlu0 %v3737
        %v3739 = vpop.xlane.xlu0 %3738
        %v3740 = vmul.f32 %v3646, %v3547
        %v3741 = vmul.f32 %v3649, %v3547
        %v3742 = vmul.f32 %v3652, %v3547
        %v3743 = vmul.f32 %v3655, %v3547
        %v3744 = vmul.f32 %v3658, %v3547
        %v3745 = vmul.f32 %v3661, %v3547
        %v3746 = vmul.f32 %v3664, %v3547
        %v3747 = vmul.f32 %v3667, %v3547
        %v3748 = vmul.f32 %v3670, %v3547
        %v3749 = vmul.f32 %v3673, %v3547
        %v3750 = vmul.f32 %v3676, %v3547
        %v3751 = vmul.f32 %v3679, %v3547
        %v3752 = vmul.f32 %v3682, %v3547
        %v3753 = vmul.f32 %v3685, %v3547
        %v3754 = vmul.f32 %v3688, %v3547
        %v3755 = vmul.f32 %v3691, %v3547
        %v3756 = vmul.f32 %v3694, %v3547
        %v3757 = vmul.f32 %v3697, %v3547
        %v3758 = vmul.f32 %v3700, %v3547
        %v3759 = vmul.f32 %v3703, %v3547
        %v3760 = vmul.f32 %v3706, %v3547
        %v3761 = vmul.f32 %v3709, %v3547
        %v3762 = vmul.f32 %v3712, %v3547
        %v3763 = vmul.f32 %v3715, %v3547
        %v3764 = vmul.f32 %v3718, %v3547
        %v3765 = vmul.f32 %v3721, %v3547
        %v3766 = vmul.f32 %v3724, %v3547
        %v3767 = vmul.f32 %v3727, %v3547
        %v3768 = vmul.f32 %v3730, %v3547
        %v3769 = vmul.f32 %v3733, %v3547
        %v3770 = vmul.f32 %v3736, %v3547
        %v3771 = vmul.f32 %v3739, %v3547
        %v3772 = vadd.f32 %v3740, 1e-05
        %v3773 = vadd.f32 %v3741, 1e-05
        %v3774 = vadd.f32 %v3742, 1e-05
        %v3775 = vadd.f32 %v3743, 1e-05
        %v3776 = vadd.f32 %v3744, 1e-05
        %v3777 = vadd.f32 %v3745, 1e-05
        %v3778 = vadd.f32 %v3746, 1e-05
        %v3779 = vadd.f32 %v3747, 1e-05
        %v3780 = vadd.f32 %v3748, 1e-05
        %v3781 = vadd.f32 %v3749, 1e-05
        %v3782 = vadd.f32 %v3750, 1e-05
        %v3783 = vadd.f32 %v3751, 1e-05
        %v3784 = vadd.f32 %v3752, 1e-05
        %v3785 = vadd.f32 %v3753, 1e-05
        %v3786 = vadd.f32 %v3754, 1e-05
        %v3787 = vadd.f32 %v3755, 1e-05
        %v3788 = vadd.f32 %v3756, 1e-05
        %v3789 = vadd.f32 %v3757, 1e-05
        %v3790 = vadd.f32 %v3758, 1e-05
        %v3791 = vadd.f32 %v3759, 1e-05
        %v3792 = vadd.f32 %v3760, 1e-05
        %v3793 = vadd.f32 %v3761, 1e-05
        %v3794 = vadd.f32 %v3762, 1e-05
        %v3795 = vadd.f32 %v3763, 1e-05
        %v3796 = vadd.f32 %v3764, 1e-05
        %v3797 = vadd.f32 %v3765, 1e-05
        %v3798 = vadd.f32 %v3766, 1e-05
        %v3799 = vadd.f32 %v3767, 1e-05
        %v3800 = vadd.f32 %v3768, 1e-05
        %v3801 = vadd.f32 %v3769, 1e-05
        %v3802 = vadd.f32 %v3770, 1e-05
        %v3803 = vadd.f32 %v3771, 1e-05
        %v3804 = vrsqrt.pop %v3772
        %v3805 = vrsqrt.pop %v3773
        %v3806 = vrsqrt.pop %v3774
        %v3807 = vrsqrt.pop %v3775
        %v3808 = vrsqrt.pop %v3776
        %v3809 = vrsqrt.pop %v3777
        %v3810 = vrsqrt.pop %v3778
        %v3811 = vrsqrt.pop %v3779
        %v3812 = vrsqrt.pop %v3780
        %v3813 = vrsqrt.pop %v3781
        %v3814 = vrsqrt.pop %v3782
        %v3815 = vrsqrt.pop %v3783
        %v3816 = vrsqrt.pop %v3784
        %v3817 = vrsqrt.pop %v3785
        %v3818 = vrsqrt.pop %v3786
        %v3819 = vrsqrt.pop %v3787
        %v3820 = vrsqrt.pop %v3788
        %v3821 = vrsqrt.pop %v3789
        %v3822 = vrsqrt.pop %v3790
        %v3823 = vrsqrt.pop %v3791
        %v3824 = vrsqrt.pop %v3792
        %v3825 = vrsqrt.pop %v3793
        %v3826 = vrsqrt.pop %v3794
        %v3827 = vrsqrt.pop %v3795
        %v3828 = vrsqrt.pop %v3796
        %v3829 = vrsqrt.pop %v3797
        %v3830 = vrsqrt.pop %v3798
        %v3831 = vrsqrt.pop %v3799
        %v3832 = vrsqrt.pop %v3800
        %v3833 = vrsqrt.pop %v3801
        %v3834 = vrsqrt.pop %v3802
        %v3835 = vrsqrt.pop %v3803
        %v3836 = vmul.f32 %v3580, %v3804
        %v3837 = vmul.f32 %v3581, %v3805
        %v3838 = vmul.f32 %v3582, %v3806
        %v3839 = vmul.f32 %v3583, %v3807
        %v3840 = vmul.f32 %v3584, %v3808
        %v3841 = vmul.f32 %v3585, %v3809
        %v3842 = vmul.f32 %v3586, %v3810
        %v3843 = vmul.f32 %v3587, %v3811
        %v3844 = vmul.f32 %v3588, %v3812
        %v3845 = vmul.f32 %v3589, %v3813
        %v3846 = vmul.f32 %v3590, %v3814
        %v3847 = vmul.f32 %v3591, %v3815
        %v3848 = vmul.f32 %v3592, %v3816
        %v3849 = vmul.f32 %v3593, %v3817
        %v3850 = vmul.f32 %v3594, %v3818
        %v3851 = vmul.f32 %v3595, %v3819
        %v3852 = vmul.f32 %v3596, %v3820
        %v3853 = vmul.f32 %v3597, %v3821
        %v3854 = vmul.f32 %v3598, %v3822
        %v3855 = vmul.f32 %v3599, %v3823
        %v3856 = vmul.f32 %v3600, %v3824
        %v3857 = vmul.f32 %v3601, %v3825
        %v3858 = vmul.f32 %v3602, %v3826
        %v3859 = vmul.f32 %v3603, %v3827
        %v3860 = vmul.f32 %v3604, %v3828
        %v3861 = vmul.f32 %v3605, %v3829
        %v3862 = vmul.f32 %v3606, %v3830
        %v3863 = vmul.f32 %v3607, %v3831
        %v3864 = vmul.f32 %v3608, %v3832
        %v3865 = vmul.f32 %v3609, %v3833
        %v3866 = vmul.f32 %v3610, %v3834
        %v3867 = vmul.f32 %v3611, %v3835
        %v3868 = vld [vmem:[%s2 + $0x3] sm:$0x1]
        %v3869 = vlaneseq
        %v3870 = vshrl.u32 %v3869, 7
        %v3871 = vsub.s32 0, %v3870
        %v3872 = vrot.slane %v3868, %v3871
        %v3873 = vmul.f32 %v3836, %v3872
        %v3874 = vmul.f32 %v3837, %v3872
        %v3875 = vmul.f32 %v3838, %v3872
        %v3876 = vmul.f32 %v3839, %v3872
        %v3877 = vmul.f32 %v3840, %v3872
        %v3878 = vmul.f32 %v3841, %v3872
        %v3879 = vmul.f32 %v3842, %v3872
        %v3880 = vmul.f32 %v3843, %v3872
        %v3881 = vmul.f32 %v3844, %v3872
        %v3882 = vmul.f32 %v3845, %v3872
        %v3883 = vmul.f32 %v3846, %v3872
        %v3884 = vmul.f32 %v3847, %v3872
        %v3885 = vmul.f32 %v3848, %v3872
        %v3886 = vmul.f32 %v3849, %v3872
        %v3887 = vmul.f32 %v3850, %v3872
        %v3888 = vmul.f32 %v3851, %v3872
        %v3889 = vmul.f32 %v3852, %v3872
        %v3890 = vmul.f32 %v3853, %v3872
        %v3891 = vmul.f32 %v3854, %v3872
        %v3892 = vmul.f32 %v3855, %v3872
        %v3893 = vmul.f32 %v3856, %v3872
        %v3894 = vmul.f32 %v3857, %v3872
        %v3895 = vmul.f32 %v3858, %v3872
        %v3896 = vmul.f32 %v3859, %v3872
        %v3897 = vmul.f32 %v3860, %v3872
        %v3898 = vmul.f32 %v3861, %v3872
        %v3899 = vmul.f32 %v3862, %v3872
        %v3900 = vmul.f32 %v3863, %v3872
        %v3901 = vmul.f32 %v3864, %v3872
        %v3902 = vmul.f32 %v3865, %v3872
        %v3903 = vmul.f32 %v3866, %v3872
        %v3904 = vmul.f32 %v3867, %v3872
        %v3905 = vld [vmem:[%s2 + $0x4] sm:$0x1]
        %v3906 = vlaneseq
        %v3907 = vshrl.u32 %v3906, 7
        %v3908 = vsub.s32 0, %v3907
        %v3909 = vrot.slane %v3905, %v3908
        %v3910 = vadd.f32 %v3873, %v3909
        %v3911 = vadd.f32 %v3874, %v3909
        %v3912 = vadd.f32 %v3875, %v3909
        %v3913 = vadd.f32 %v3876, %v3909
        %v3914 = vadd.f32 %v3877, %v3909
        %v3915 = vadd.f32 %v3878, %v3909
        %v3916 = vadd.f32 %v3879, %v3909
        %v3917 = vadd.f32 %v3880, %v3909
        %v3918 = vadd.f32 %v3881, %v3909
        %v3919 = vadd.f32 %v3882, %v3909
        %v3920 = vadd.f32 %v3883, %v3909
        %v3921 = vadd.f32 %v3884, %v3909
        %v3922 = vadd.f32 %v3885, %v3909
        %v3923 = vadd.f32 %v3886, %v3909
        %v3924 = vadd.f32 %v3887, %v3909
        %v3925 = vadd.f32 %v3888, %v3909
        %v3926 = vadd.f32 %v3889, %v3909
        %v3927 = vadd.f32 %v3890, %v3909
        %v3928 = vadd.f32 %v3891, %v3909
        %v3929 = vadd.f32 %v3892, %v3909
        %v3930 = vadd.f32 %v3893, %v3909
        %v3931 = vadd.f32 %v3894, %v3909
        %v3932 = vadd.f32 %v3895, %v3909
        %v3933 = vadd.f32 %v3896, %v3909
        %v3934 = vadd.f32 %v3897, %v3909
        %v3935 = vadd.f32 %v3898, %v3909
        %v3936 = vadd.f32 %v3899, %v3909
        %v3937 = vadd.f32 %v3900, %v3909
        %v3938 = vadd.f32 %v3901, %v3909
        %v3939 = vadd.f32 %v3902, %v3909
        %v3940 = vadd.f32 %v3903, %v3909
        %v3941 = vadd.f32 %v3904, %v3909
        %3942 = vst.msk [vmem:[%s262 + $0x1] sm:$0xff] %vm263, %v3910
        %3943 = vst.msk [vmem:[%s262 + $0x9] sm:$0xff] %vm263, %v3911
        %3944 = vst.msk [vmem:[%s262 + $0x19] sm:$0xff] %vm263, %v3912
        %3945 = vst.msk [vmem:[%s262 + $0x21] sm:$0xff] %vm263, %v3913
        %3946 = vst.msk [vmem:[%s262 + $0x31] sm:$0xff] %vm263, %v3914
        %3947 = vst.msk [vmem:[%s262 + $0x39] sm:$0xff] %vm263, %v3915
        %3948 = vst.msk [vmem:[%s262 + $0x49] sm:$0xff] %vm263, %v3916
        %3949 = vst.msk [vmem:[%s262 + $0x51] sm:$0xff] %vm263, %v3917
        %3950 = vst.msk [vmem:[%s262 + $0x61] sm:$0xff] %vm263, %v3918
        %3951 = vst.msk [vmem:[%s262 + $0x69] sm:$0xff] %vm263, %v3919
        %3952 = vst.msk [vmem:[%s262 + $0x79] sm:$0xff] %vm263, %v3920
        %3953 = vst.msk [vmem:[%s262 + $0x81] sm:$0xff] %vm263, %v3921
        %3954 = vst.msk [vmem:[%s262 + $0x91] sm:$0xff] %vm263, %v3922
        %3955 = vst.msk [vmem:[%s262 + $0x99] sm:$0xff] %vm263, %v3923
        %3956 = vst.msk [vmem:[%s262 + $0xa9] sm:$0xff] %vm263, %v3924
        %3957 = vst.msk [vmem:[%s262 + $0xb1] sm:$0xff] %vm263, %v3925
        %3958 = vst.msk [vmem:[%s262 + $0xc1] sm:$0xff] %vm263, %v3926
        %3959 = vst.msk [vmem:[%s262 + $0xc9] sm:$0xff] %vm263, %v3927
        %3960 = vst.msk [vmem:[%s262 + $0xd9] sm:$0xff] %vm263, %v3928
        %3961 = vst.msk [vmem:[%s262 + $0xe1] sm:$0xff] %vm263, %v3929
        %3962 = vst.msk [vmem:[%s262 + $0xf1] sm:$0xff] %vm263, %v3930
        %3963 = vst.msk [vmem:[%s262 + $0xf9] sm:$0xff] %vm263, %v3931
        %3964 = vst.msk [vmem:[%s262 + $0x109] sm:$0xff] %vm263, %v3932
        %3965 = vst.msk [vmem:[%s262 + $0x111] sm:$0xff] %vm263, %v3933
        %3966 = vst.msk [vmem:[%s262 + $0x121] sm:$0xff] %vm263, %v3934
        %3967 = vst.msk [vmem:[%s262 + $0x129] sm:$0xff] %vm263, %v3935
        %3968 = vst.msk [vmem:[%s262 + $0x139] sm:$0xff] %vm263, %v3936
        %3969 = vst.msk [vmem:[%s262 + $0x141] sm:$0xff] %vm263, %v3937
        %3970 = vst.msk [vmem:[%s262 + $0x151] sm:$0xff] %vm263, %v3938
        %3971 = vst.msk [vmem:[%s262 + $0x159] sm:$0xff] %vm263, %v3939
        %3972 = vst.msk [vmem:[%s262 + $0x169] sm:$0xff] %vm263, %v3940
        %3973 = vst.msk [vmem:[%s262 + $0x171] sm:$0xff] %vm263, %v3941
        %v3974 = vld [vmem:[#allocation2] sm:$0xff]
        %v3975 = vld [vmem:[#allocation2 + $0x8] sm:$0xff]
        %v3976 = vld [vmem:[#allocation2 + $0x18] sm:$0xff]
        %v3977 = vld [vmem:[#allocation2 + $0x20] sm:$0xff]
        %v3978 = vld [vmem:[#allocation2 + $0x30] sm:$0xff]
        %v3979 = vld [vmem:[#allocation2 + $0x38] sm:$0xff]
        %v3980 = vld [vmem:[#allocation2 + $0x48] sm:$0xff]
        %v3981 = vld [vmem:[#allocation2 + $0x50] sm:$0xff]
        %v3982 = vld [vmem:[#allocation2 + $0x60] sm:$0xff]
        %v3983 = vld [vmem:[#allocation2 + $0x68] sm:$0xff]
        %v3984 = vld [vmem:[#allocation2 + $0x78] sm:$0xff]
        %v3985 = vld [vmem:[#allocation2 + $0x80] sm:$0xff]
        %v3986 = vld [vmem:[#allocation2 + $0x90] sm:$0xff]
        %v3987 = vld [vmem:[#allocation2 + $0x98] sm:$0xff]
        %v3988 = vld [vmem:[#allocation2 + $0xa8] sm:$0xff]
        %v3989 = vld [vmem:[#allocation2 + $0xb0] sm:$0xff]
        %v3990 = vld [vmem:[#allocation2 + $0xc0] sm:$0xff]
        %v3991 = vld [vmem:[#allocation2 + $0xc8] sm:$0xff]
        %v3992 = vld [vmem:[#allocation2 + $0xd8] sm:$0xff]
        %v3993 = vld [vmem:[#allocation2 + $0xe0] sm:$0xff]
        %v3994 = vld [vmem:[#allocation2 + $0xf0] sm:$0xff]
        %v3995 = vld [vmem:[#allocation2 + $0xf8] sm:$0xff]
        %v3996 = vld [vmem:[#allocation2 + $0x108] sm:$0xff]
        %v3997 = vld [vmem:[#allocation2 + $0x110] sm:$0xff]
        %v3998 = vld [vmem:[#allocation2 + $0x120] sm:$0xff]
        %v3999 = vld [vmem:[#allocation2 + $0x128] sm:$0xff]
        %v4000 = vld [vmem:[#allocation2 + $0x138] sm:$0xff]
        %v4001 = vld [vmem:[#allocation2 + $0x140] sm:$0xff]
        %v4002 = vld [vmem:[#allocation2 + $0x150] sm:$0xff]
        %v4003 = vld [vmem:[#allocation2 + $0x158] sm:$0xff]
        %v4004 = vld [vmem:[#allocation2 + $0x168] sm:$0xff]
        %v4005 = vld [vmem:[#allocation2 + $0x170] sm:$0xff]
        %v4006 = vpack.c.bf16 %v3975, %v3974
        %v4007 = vpack.c.bf16 %v3977, %v3976
        %v4008 = vpack.c.bf16 %v3979, %v3978
        %v4009 = vpack.c.bf16 %v3981, %v3980
        %v4010 = vpack.c.bf16 %v3983, %v3982
        %v4011 = vpack.c.bf16 %v3985, %v3984
        %v4012 = vpack.c.bf16 %v3987, %v3986
        %v4013 = vpack.c.bf16 %v3989, %v3988
        %v4014 = vpack.c.bf16 %v3991, %v3990
        %v4015 = vpack.c.bf16 %v3993, %v3992
        %v4016 = vpack.c.bf16 %v3995, %v3994
        %v4017 = vpack.c.bf16 %v3997, %v3996
        %v4018 = vpack.c.bf16 %v3999, %v3998
        %v4019 = vpack.c.bf16 %v4001, %v4000
        %v4020 = vpack.c.bf16 %v4003, %v4002
        %v4021 = vpack.c.bf16 %v4005, %v4004
        %4022 = vst.msk [vmem:[#allocation3] sm:$0xff] %vm263, %v4006
        %4023 = vst.msk [vmem:[#allocation3 + $0x18] sm:$0xff] %vm263, %v4007
        %4024 = vst.msk [vmem:[#allocation3 + $0x30] sm:$0xff] %vm263, %v4008
        %4025 = vst.msk [vmem:[#allocation3 + $0x48] sm:$0xff] %vm263, %v4009
        %4026 = vst.msk [vmem:[#allocation3 + $0x60] sm:$0xff] %vm263, %v4010
        %4027 = vst.msk [vmem:[#allocation3 + $0x78] sm:$0xff] %vm263, %v4011
        %4028 = vst.msk [vmem:[#allocation3 + $0x90] sm:$0xff] %vm263, %v4012
        %4029 = vst.msk [vmem:[#allocation3 + $0xa8] sm:$0xff] %vm263, %v4013
        %4030 = vst.msk [vmem:[#allocation3 + $0xc0] sm:$0xff] %vm263, %v4014
        %4031 = vst.msk [vmem:[#allocation3 + $0xd8] sm:$0xff] %vm263, %v4015
        %4032 = vst.msk [vmem:[#allocation3 + $0xf0] sm:$0xff] %vm263, %v4016
        %4033 = vst.msk [vmem:[#allocation3 + $0x108] sm:$0xff] %vm263, %v4017
        %4034 = vst.msk [vmem:[#allocation3 + $0x120] sm:$0xff] %vm263, %v4018
        %4035 = vst.msk [vmem:[#allocation3 + $0x138] sm:$0xff] %vm263, %v4019
        %4036 = vst.msk [vmem:[#allocation3 + $0x150] sm:$0xff] %vm263, %v4020
        %4037 = vst.msk [vmem:[#allocation3 + $0x168] sm:$0xff] %vm263, %v4021
        %v4038 = vld [vmem:[#allocation2 + $0x1] sm:$0xff]
        %v4039 = vld [vmem:[#allocation2 + $0x9] sm:$0xff]
        %v4040 = vld [vmem:[#allocation2 + $0x19] sm:$0xff]
        %v4041 = vld [vmem:[#allocation2 + $0x21] sm:$0xff]
        %v4042 = vld [vmem:[#allocation2 + $0x31] sm:$0xff]
        %v4043 = vld [vmem:[#allocation2 + $0x39] sm:$0xff]
        %v4044 = vld [vmem:[#allocation2 + $0x49] sm:$0xff]
        %v4045 = vld [vmem:[#allocation2 + $0x51] sm:$0xff]
        %v4046 = vld [vmem:[#allocation2 + $0x61] sm:$0xff]
        %v4047 = vld [vmem:[#allocation2 + $0x69] sm:$0xff]
        %v4048 = vld [vmem:[#allocation2 + $0x79] sm:$0xff]
        %v4049 = vld [vmem:[#allocation2 + $0x81] sm:$0xff]
        %v4050 = vld [vmem:[#allocation2 + $0x91] sm:$0xff]
        %v4051 = vld [vmem:[#allocation2 + $0x99] sm:$0xff]
        %v4052 = vld [vmem:[#allocation2 + $0xa9] sm:$0xff]
        %v4053 = vld [vmem:[#allocation2 + $0xb1] sm:$0xff]
        %v4054 = vld [vmem:[#allocation2 + $0xc1] sm:$0xff]
        %v4055 = vld [vmem:[#allocation2 + $0xc9] sm:$0xff]
        %v4056 = vld [vmem:[#allocation2 + $0xd9] sm:$0xff]
        %v4057 = vld [vmem:[#allocation2 + $0xe1] sm:$0xff]
        %v4058 = vld [vmem:[#allocation2 + $0xf1] sm:$0xff]
        %v4059 = vld [vmem:[#allocation2 + $0xf9] sm:$0xff]
        %v4060 = vld [vmem:[#allocation2 + $0x109] sm:$0xff]
        %v4061 = vld [vmem:[#allocation2 + $0x111] sm:$0xff]
        %v4062 = vld [vmem:[#allocation2 + $0x121] sm:$0xff]
        %v4063 = vld [vmem:[#allocation2 + $0x129] sm:$0xff]
        %v4064 = vld [vmem:[#allocation2 + $0x139] sm:$0xff]
        %v4065 = vld [vmem:[#allocation2 + $0x141] sm:$0xff]
        %v4066 = vld [vmem:[#allocation2 + $0x151] sm:$0xff]
        %v4067 = vld [vmem:[#allocation2 + $0x159] sm:$0xff]
        %v4068 = vld [vmem:[#allocation2 + $0x169] sm:$0xff]
        %v4069 = vld [vmem:[#allocation2 + $0x171] sm:$0xff]
        %v4070 = vpack.c.bf16 %v4039, %v4038
        %v4071 = vpack.c.bf16 %v4041, %v4040
        %v4072 = vpack.c.bf16 %v4043, %v4042
        %v4073 = vpack.c.bf16 %v4045, %v4044
        %v4074 = vpack.c.bf16 %v4047, %v4046
        %v4075 = vpack.c.bf16 %v4049, %v4048
        %v4076 = vpack.c.bf16 %v4051, %v4050
        %v4077 = vpack.c.bf16 %v4053, %v4052
        %v4078 = vpack.c.bf16 %v4055, %v4054
        %v4079 = vpack.c.bf16 %v4057, %v4056
        %v4080 = vpack.c.bf16 %v4059, %v4058
        %v4081 = vpack.c.bf16 %v4061, %v4060
        %v4082 = vpack.c.bf16 %v4063, %v4062
        %v4083 = vpack.c.bf16 %v4065, %v4064
        %v4084 = vpack.c.bf16 %v4067, %v4066
        %v4085 = vpack.c.bf16 %v4069, %v4068
        %4102 = vrot.lane.b32.xlu0 %v4070, 32
        %v4103 = vpop.permute.xlu0 %4102
        %4104 = vrot.lane.b32.xlu0 %v4071, 32
        %v4105 = vpop.permute.xlu0 %4104
        %4106 = vrot.lane.b32.xlu0 %v4072, 32
        %v4107 = vpop.permute.xlu0 %4106
        %4108 = vrot.lane.b32.xlu0 %v4073, 32
        %v4109 = vpop.permute.xlu0 %4108
        %4110 = vrot.lane.b32.xlu0 %v4074, 32
        %v4111 = vpop.permute.xlu0 %4110
        %4112 = vrot.lane.b32.xlu0 %v4075, 32
        %v4113 = vpop.permute.xlu0 %4112
        %4114 = vrot.lane.b32.xlu0 %v4076, 32
        %v4115 = vpop.permute.xlu0 %4114
        %4116 = vrot.lane.b32.xlu0 %v4077, 32
        %v4117 = vpop.permute.xlu0 %4116
        %4118 = vrot.lane.b32.xlu0 %v4078, 32
        %v4119 = vpop.permute.xlu0 %4118
        %4120 = vrot.lane.b32.xlu0 %v4079, 32
        %v4121 = vpop.permute.xlu0 %4120
        %4122 = vrot.lane.b32.xlu0 %v4080, 32
        %v4123 = vpop.permute.xlu0 %4122
        %4124 = vrot.lane.b32.xlu0 %v4081, 32
        %v4125 = vpop.permute.xlu0 %4124
        %4126 = vrot.lane.b32.xlu0 %v4082, 32
        %v4127 = vpop.permute.xlu0 %4126
        %4128 = vrot.lane.b32.xlu0 %v4083, 32
        %v4129 = vpop.permute.xlu0 %4128
        %4130 = vrot.lane.b32.xlu0 %v4084, 32
        %v4131 = vpop.permute.xlu0 %4130
        %4132 = vrot.lane.b32.xlu0 %v4085, 32
        %v4133 = vpop.permute.xlu0 %4132
        %4150 = vst.msk [vmem:[#allocation3] sm:$0xff] %vm472, %v4103
        %4151 = vst.msk [vmem:[#allocation3 + $0x18] sm:$0xff] %vm472, %v4105
        %4152 = vst.msk [vmem:[#allocation3 + $0x30] sm:$0xff] %vm472, %v4107
        %4153 = vst.msk [vmem:[#allocation3 + $0x48] sm:$0xff] %vm472, %v4109
        %4154 = vst.msk [vmem:[#allocation3 + $0x60] sm:$0xff] %vm472, %v4111
        %4155 = vst.msk [vmem:[#allocation3 + $0x78] sm:$0xff] %vm472, %v4113
        %4156 = vst.msk [vmem:[#allocation3 + $0x90] sm:$0xff] %vm472, %v4115
        %4157 = vst.msk [vmem:[#allocation3 + $0xa8] sm:$0xff] %vm472, %v4117
        %4158 = vst.msk [vmem:[#allocation3 + $0xc0] sm:$0xff] %vm472, %v4119
        %4159 = vst.msk [vmem:[#allocation3 + $0xd8] sm:$0xff] %vm472, %v4121
        %4160 = vst.msk [vmem:[#allocation3 + $0xf0] sm:$0xff] %vm472, %v4123
        %4161 = vst.msk [vmem:[#allocation3 + $0x108] sm:$0xff] %vm472, %v4125
        %4162 = vst.msk [vmem:[#allocation3 + $0x120] sm:$0xff] %vm472, %v4127
        %4163 = vst.msk [vmem:[#allocation3 + $0x138] sm:$0xff] %vm472, %v4129
        %4164 = vst.msk [vmem:[#allocation3 + $0x150] sm:$0xff] %vm472, %v4131
        %4165 = vst.msk [vmem:[#allocation3 + $0x168] sm:$0xff] %vm472, %v4133
        %v4166 = vld [vmem:[#allocation2 + $0x2] sm:$0xff]
        %v4167 = vld [vmem:[#allocation2 + $0xa] sm:$0xff]
        %v4168 = vld [vmem:[#allocation2 + $0x1a] sm:$0xff]
        %v4169 = vld [vmem:[#allocation2 + $0x22] sm:$0xff]
        %v4170 = vld [vmem:[#allocation2 + $0x32] sm:$0xff]
        %v4171 = vld [vmem:[#allocation2 + $0x3a] sm:$0xff]
        %v4172 = vld [vmem:[#allocation2 + $0x4a] sm:$0xff]
        %v4173 = vld [vmem:[#allocation2 + $0x52] sm:$0xff]
        %v4174 = vld [vmem:[#allocation2 + $0x62] sm:$0xff]
        %v4175 = vld [vmem:[#allocation2 + $0x6a] sm:$0xff]
        %v4176 = vld [vmem:[#allocation2 + $0x7a] sm:$0xff]
        %v4177 = vld [vmem:[#allocation2 + $0x82] sm:$0xff]
        %v4178 = vld [vmem:[#allocation2 + $0x92] sm:$0xff]
        %v4179 = vld [vmem:[#allocation2 + $0x9a] sm:$0xff]
        %v4180 = vld [vmem:[#allocation2 + $0xaa] sm:$0xff]
        %v4181 = vld [vmem:[#allocation2 + $0xb2] sm:$0xff]
        %v4182 = vld [vmem:[#allocation2 + $0xc2] sm:$0xff]
        %v4183 = vld [vmem:[#allocation2 + $0xca] sm:$0xff]
        %v4184 = vld [vmem:[#allocation2 + $0xda] sm:$0xff]
        %v4185 = vld [vmem:[#allocation2 + $0xe2] sm:$0xff]
        %v4186 = vld [vmem:[#allocation2 + $0xf2] sm:$0xff]
        %v4187 = vld [vmem:[#allocation2 + $0xfa] sm:$0xff]
        %v4188 = vld [vmem:[#allocation2 + $0x10a] sm:$0xff]
        %v4189 = vld [vmem:[#allocation2 + $0x112] sm:$0xff]
        %v4190 = vld [vmem:[#allocation2 + $0x122] sm:$0xff]
        %v4191 = vld [vmem:[#allocation2 + $0x12a] sm:$0xff]
        %v4192 = vld [vmem:[#allocation2 + $0x13a] sm:$0xff]
        %v4193 = vld [vmem:[#allocation2 + $0x142] sm:$0xff]
        %v4194 = vld [vmem:[#allocation2 + $0x152] sm:$0xff]
        %v4195 = vld [vmem:[#allocation2 + $0x15a] sm:$0xff]
        %v4196 = vld [vmem:[#allocation2 + $0x16a] sm:$0xff]
        %v4197 = vld [vmem:[#allocation2 + $0x172] sm:$0xff]
        %v4198 = vpack.c.bf16 %v4167, %v4166
        %v4199 = vpack.c.bf16 %v4169, %v4168
        %v4200 = vpack.c.bf16 %v4171, %v4170
        %v4201 = vpack.c.bf16 %v4173, %v4172
        %v4202 = vpack.c.bf16 %v4175, %v4174
        %v4203 = vpack.c.bf16 %v4177, %v4176
        %v4204 = vpack.c.bf16 %v4179, %v4178
        %v4205 = vpack.c.bf16 %v4181, %v4180
        %v4206 = vpack.c.bf16 %v4183, %v4182
        %v4207 = vpack.c.bf16 %v4185, %v4184
        %v4208 = vpack.c.bf16 %v4187, %v4186
        %v4209 = vpack.c.bf16 %v4189, %v4188
        %v4210 = vpack.c.bf16 %v4191, %v4190
        %v4211 = vpack.c.bf16 %v4193, %v4192
        %v4212 = vpack.c.bf16 %v4195, %v4194
        %v4213 = vpack.c.bf16 %v4197, %v4196
        %4230 = vrot.lane.b32.xlu0 %v4198, 64
        %v4231 = vpop.permute.xlu0 %4230
        %4232 = vrot.lane.b32.xlu0 %v4199, 64
        %v4233 = vpop.permute.xlu0 %4232
        %4234 = vrot.lane.b32.xlu0 %v4200, 64
        %v4235 = vpop.permute.xlu0 %4234
        %4236 = vrot.lane.b32.xlu0 %v4201, 64
        %v4237 = vpop.permute.xlu0 %4236
        %4238 = vrot.lane.b32.xlu0 %v4202, 64
        %v4239 = vpop.permute.xlu0 %4238
        %4240 = vrot.lane.b32.xlu0 %v4203, 64
        %v4241 = vpop.permute.xlu0 %4240
        %4242 = vrot.lane.b32.xlu0 %v4204, 64
        %v4243 = vpop.permute.xlu0 %4242
        %4244 = vrot.lane.b32.xlu0 %v4205, 64
        %v4245 = vpop.permute.xlu0 %4244
        %4246 = vrot.lane.b32.xlu0 %v4206, 64
        %v4247 = vpop.permute.xlu0 %4246
        %4248 = vrot.lane.b32.xlu0 %v4207, 64
        %v4249 = vpop.permute.xlu0 %4248
        %4250 = vrot.lane.b32.xlu0 %v4208, 64
        %v4251 = vpop.permute.xlu0 %4250
        %4252 = vrot.lane.b32.xlu0 %v4209, 64
        %v4253 = vpop.permute.xlu0 %4252
        %4254 = vrot.lane.b32.xlu0 %v4210, 64
        %v4255 = vpop.permute.xlu0 %4254
        %4256 = vrot.lane.b32.xlu0 %v4211, 64
        %v4257 = vpop.permute.xlu0 %4256
        %4258 = vrot.lane.b32.xlu0 %v4212, 64
        %v4259 = vpop.permute.xlu0 %4258
        %4260 = vrot.lane.b32.xlu0 %v4213, 64
        %v4261 = vpop.permute.xlu0 %4260
        %4278 = vst.msk [vmem:[#allocation3] sm:$0xff] %vm601, %v4231
        %4279 = vst.msk [vmem:[#allocation3 + $0x18] sm:$0xff] %vm601, %v4233
        %4280 = vst.msk [vmem:[#allocation3 + $0x30] sm:$0xff] %vm601, %v4235
        %4281 = vst.msk [vmem:[#allocation3 + $0x48] sm:$0xff] %vm601, %v4237
        %4282 = vst.msk [vmem:[#allocation3 + $0x60] sm:$0xff] %vm601, %v4239
        %4283 = vst.msk [vmem:[#allocation3 + $0x78] sm:$0xff] %vm601, %v4241
        %4284 = vst.msk [vmem:[#allocation3 + $0x90] sm:$0xff] %vm601, %v4243
        %4285 = vst.msk [vmem:[#allocation3 + $0xa8] sm:$0xff] %vm601, %v4245
        %4286 = vst.msk [vmem:[#allocation3 + $0xc0] sm:$0xff] %vm601, %v4247
        %4287 = vst.msk [vmem:[#allocation3 + $0xd8] sm:$0xff] %vm601, %v4249
        %4288 = vst.msk [vmem:[#allocation3 + $0xf0] sm:$0xff] %vm601, %v4251
        %4289 = vst.msk [vmem:[#allocation3 + $0x108] sm:$0xff] %vm601, %v4253
        %4290 = vst.msk [vmem:[#allocation3 + $0x120] sm:$0xff] %vm601, %v4255
        %4291 = vst.msk [vmem:[#allocation3 + $0x138] sm:$0xff] %vm601, %v4257
        %4292 = vst.msk [vmem:[#allocation3 + $0x150] sm:$0xff] %vm601, %v4259
        %4293 = vst.msk [vmem:[#allocation3 + $0x168] sm:$0xff] %vm601, %v4261
        %v4294 = vld [vmem:[%s262] sm:$0xff]
        %v4295 = vld [vmem:[%s262 + $0x8] sm:$0xff]
        %v4296 = vld [vmem:[%s262 + $0x18] sm:$0xff]
        %v4297 = vld [vmem:[%s262 + $0x20] sm:$0xff]
        %v4298 = vld [vmem:[%s262 + $0x30] sm:$0xff]
        %v4299 = vld [vmem:[%s262 + $0x38] sm:$0xff]
        %v4300 = vld [vmem:[%s262 + $0x48] sm:$0xff]
        %v4301 = vld [vmem:[%s262 + $0x50] sm:$0xff]
        %v4302 = vld [vmem:[%s262 + $0x60] sm:$0xff]
        %v4303 = vld [vmem:[%s262 + $0x68] sm:$0xff]
        %v4304 = vld [vmem:[%s262 + $0x78] sm:$0xff]
        %v4305 = vld [vmem:[%s262 + $0x80] sm:$0xff]
        %v4306 = vld [vmem:[%s262 + $0x90] sm:$0xff]
        %v4307 = vld [vmem:[%s262 + $0x98] sm:$0xff]
        %v4308 = vld [vmem:[%s262 + $0xa8] sm:$0xff]
        %v4309 = vld [vmem:[%s262 + $0xb0] sm:$0xff]
        %v4310 = vld [vmem:[%s262 + $0xc0] sm:$0xff]
        %v4311 = vld [vmem:[%s262 + $0xc8] sm:$0xff]
        %v4312 = vld [vmem:[%s262 + $0xd8] sm:$0xff]
        %v4313 = vld [vmem:[%s262 + $0xe0] sm:$0xff]
        %v4314 = vld [vmem:[%s262 + $0xf0] sm:$0xff]
        %v4315 = vld [vmem:[%s262 + $0xf8] sm:$0xff]
        %v4316 = vld [vmem:[%s262 + $0x108] sm:$0xff]
        %v4317 = vld [vmem:[%s262 + $0x110] sm:$0xff]
        %v4318 = vld [vmem:[%s262 + $0x120] sm:$0xff]
        %v4319 = vld [vmem:[%s262 + $0x128] sm:$0xff]
        %v4320 = vld [vmem:[%s262 + $0x138] sm:$0xff]
        %v4321 = vld [vmem:[%s262 + $0x140] sm:$0xff]
        %v4322 = vld [vmem:[%s262 + $0x150] sm:$0xff]
        %v4323 = vld [vmem:[%s262 + $0x158] sm:$0xff]
        %v4324 = vld [vmem:[%s262 + $0x168] sm:$0xff]
        %v4325 = vld [vmem:[%s262 + $0x170] sm:$0xff]
        %v4326 = vpack.c.bf16 %v4295, %v4294
        %v4327 = vpack.c.bf16 %v4297, %v4296
        %v4328 = vpack.c.bf16 %v4299, %v4298
        %v4329 = vpack.c.bf16 %v4301, %v4300
        %v4330 = vpack.c.bf16 %v4303, %v4302
        %v4331 = vpack.c.bf16 %v4305, %v4304
        %v4332 = vpack.c.bf16 %v4307, %v4306
        %v4333 = vpack.c.bf16 %v4309, %v4308
        %v4334 = vpack.c.bf16 %v4311, %v4310
        %v4335 = vpack.c.bf16 %v4313, %v4312
        %v4336 = vpack.c.bf16 %v4315, %v4314
        %v4337 = vpack.c.bf16 %v4317, %v4316
        %v4338 = vpack.c.bf16 %v4319, %v4318
        %v4339 = vpack.c.bf16 %v4321, %v4320
        %v4340 = vpack.c.bf16 %v4323, %v4322
        %v4341 = vpack.c.bf16 %v4325, %v4324
        %4358 = vrot.lane.b32.xlu0 %v4326, 96
        %v4359 = vpop.permute.xlu0 %4358
        %4360 = vrot.lane.b32.xlu0 %v4327, 96
        %v4361 = vpop.permute.xlu0 %4360
        %4362 = vrot.lane.b32.xlu0 %v4328, 96
        %v4363 = vpop.permute.xlu0 %4362
        %4364 = vrot.lane.b32.xlu0 %v4329, 96
        %v4365 = vpop.permute.xlu0 %4364
        %4366 = vrot.lane.b32.xlu0 %v4330, 96
        %v4367 = vpop.permute.xlu0 %4366
        %4368 = vrot.lane.b32.xlu0 %v4331, 96
        %v4369 = vpop.permute.xlu0 %4368
        %4370 = vrot.lane.b32.xlu0 %v4332, 96
        %v4371 = vpop.permute.xlu0 %4370
        %4372 = vrot.lane.b32.xlu0 %v4333, 96
        %v4373 = vpop.permute.xlu0 %4372
        %4374 = vrot.lane.b32.xlu0 %v4334, 96
        %v4375 = vpop.permute.xlu0 %4374
        %4376 = vrot.lane.b32.xlu0 %v4335, 96
        %v4377 = vpop.permute.xlu0 %4376
        %4378 = vrot.lane.b32.xlu0 %v4336, 96
        %v4379 = vpop.permute.xlu0 %4378
        %4380 = vrot.lane.b32.xlu0 %v4337, 96
        %v4381 = vpop.permute.xlu0 %4380
        %4382 = vrot.lane.b32.xlu0 %v4338, 96
        %v4383 = vpop.permute.xlu0 %4382
        %4384 = vrot.lane.b32.xlu0 %v4339, 96
        %v4385 = vpop.permute.xlu0 %4384
        %4386 = vrot.lane.b32.xlu0 %v4340, 96
        %v4387 = vpop.permute.xlu0 %4386
        %4388 = vrot.lane.b32.xlu0 %v4341, 96
        %v4389 = vpop.permute.xlu0 %4388
        %4406 = vst.msk [vmem:[#allocation3] sm:$0xff] %vm730, %v4359
        %4407 = vst.msk [vmem:[#allocation3 + $0x18] sm:$0xff] %vm730, %v4361
        %4408 = vst.msk [vmem:[#allocation3 + $0x30] sm:$0xff] %vm730, %v4363
        %4409 = vst.msk [vmem:[#allocation3 + $0x48] sm:$0xff] %vm730, %v4365
        %4410 = vst.msk [vmem:[#allocation3 + $0x60] sm:$0xff] %vm730, %v4367
        %4411 = vst.msk [vmem:[#allocation3 + $0x78] sm:$0xff] %vm730, %v4369
        %4412 = vst.msk [vmem:[#allocation3 + $0x90] sm:$0xff] %vm730, %v4371
        %4413 = vst.msk [vmem:[#allocation3 + $0xa8] sm:$0xff] %vm730, %v4373
        %4414 = vst.msk [vmem:[#allocation3 + $0xc0] sm:$0xff] %vm730, %v4375
        %4415 = vst.msk [vmem:[#allocation3 + $0xd8] sm:$0xff] %vm730, %v4377
        %4416 = vst.msk [vmem:[#allocation3 + $0xf0] sm:$0xff] %vm730, %v4379
        %4417 = vst.msk [vmem:[#allocation3 + $0x108] sm:$0xff] %vm730, %v4381
        %4418 = vst.msk [vmem:[#allocation3 + $0x120] sm:$0xff] %vm730, %v4383
        %4419 = vst.msk [vmem:[#allocation3 + $0x138] sm:$0xff] %vm730, %v4385
        %4420 = vst.msk [vmem:[#allocation3 + $0x150] sm:$0xff] %vm730, %v4387
        %4421 = vst.msk [vmem:[#allocation3 + $0x168] sm:$0xff] %vm730, %v4389
        %v4422 = vld [vmem:[%s262 + $0x1] sm:$0xff]
        %v4423 = vld [vmem:[%s262 + $0x9] sm:$0xff]
        %v4424 = vld [vmem:[%s262 + $0x19] sm:$0xff]
        %v4425 = vld [vmem:[%s262 + $0x21] sm:$0xff]
        %v4426 = vld [vmem:[%s262 + $0x31] sm:$0xff]
        %v4427 = vld [vmem:[%s262 + $0x39] sm:$0xff]
        %v4428 = vld [vmem:[%s262 + $0x49] sm:$0xff]
        %v4429 = vld [vmem:[%s262 + $0x51] sm:$0xff]
        %v4430 = vld [vmem:[%s262 + $0x61] sm:$0xff]
        %v4431 = vld [vmem:[%s262 + $0x69] sm:$0xff]
        %v4432 = vld [vmem:[%s262 + $0x79] sm:$0xff]
        %v4433 = vld [vmem:[%s262 + $0x81] sm:$0xff]
        %v4434 = vld [vmem:[%s262 + $0x91] sm:$0xff]
        %v4435 = vld [vmem:[%s262 + $0x99] sm:$0xff]
        %v4436 = vld [vmem:[%s262 + $0xa9] sm:$0xff]
        %v4437 = vld [vmem:[%s262 + $0xb1] sm:$0xff]
        %v4438 = vld [vmem:[%s262 + $0xc1] sm:$0xff]
        %v4439 = vld [vmem:[%s262 + $0xc9] sm:$0xff]
        %v4440 = vld [vmem:[%s262 + $0xd9] sm:$0xff]
        %v4441 = vld [vmem:[%s262 + $0xe1] sm:$0xff]
        %v4442 = vld [vmem:[%s262 + $0xf1] sm:$0xff]
        %v4443 = vld [vmem:[%s262 + $0xf9] sm:$0xff]
        %v4444 = vld [vmem:[%s262 + $0x109] sm:$0xff]
        %v4445 = vld [vmem:[%s262 + $0x111] sm:$0xff]
        %v4446 = vld [vmem:[%s262 + $0x121] sm:$0xff]
        %v4447 = vld [vmem:[%s262 + $0x129] sm:$0xff]
        %v4448 = vld [vmem:[%s262 + $0x139] sm:$0xff]
        %v4449 = vld [vmem:[%s262 + $0x141] sm:$0xff]
        %v4450 = vld [vmem:[%s262 + $0x151] sm:$0xff]
        %v4451 = vld [vmem:[%s262 + $0x159] sm:$0xff]
        %v4452 = vld [vmem:[%s262 + $0x169] sm:$0xff]
        %v4453 = vld [vmem:[%s262 + $0x171] sm:$0xff]
        %v4454 = vpack.c.bf16 %v4423, %v4422
        %v4455 = vpack.c.bf16 %v4425, %v4424
        %v4456 = vpack.c.bf16 %v4427, %v4426
        %v4457 = vpack.c.bf16 %v4429, %v4428
        %v4458 = vpack.c.bf16 %v4431, %v4430
        %v4459 = vpack.c.bf16 %v4433, %v4432
        %v4460 = vpack.c.bf16 %v4435, %v4434
        %v4461 = vpack.c.bf16 %v4437, %v4436
        %v4462 = vpack.c.bf16 %v4439, %v4438
        %v4463 = vpack.c.bf16 %v4441, %v4440
        %v4464 = vpack.c.bf16 %v4443, %v4442
        %v4465 = vpack.c.bf16 %v4445, %v4444
        %v4466 = vpack.c.bf16 %v4447, %v4446
        %v4467 = vpack.c.bf16 %v4449, %v4448
        %v4468 = vpack.c.bf16 %v4451, %v4450
        %v4469 = vpack.c.bf16 %v4453, %v4452
        %4470 = vst.msk [vmem:[#allocation3 + $0x8] sm:$0xff] %vm263, %v4454
        %4471 = vst.msk [vmem:[#allocation3 + $0x20] sm:$0xff] %vm263, %v4455
        %4472 = vst.msk [vmem:[#allocation3 + $0x38] sm:$0xff] %vm263, %v4456
        %4473 = vst.msk [vmem:[#allocation3 + $0x50] sm:$0xff] %vm263, %v4457
        %4474 = vst.msk [vmem:[#allocation3 + $0x68] sm:$0xff] %vm263, %v4458
        %4475 = vst.msk [vmem:[#allocation3 + $0x80] sm:$0xff] %vm263, %v4459
        %4476 = vst.msk [vmem:[#allocation3 + $0x98] sm:$0xff] %vm263, %v4460
        %4477 = vst.msk [vmem:[#allocation3 + $0xb0] sm:$0xff] %vm263, %v4461
        %4478 = vst.msk [vmem:[#allocation3 + $0xc8] sm:$0xff] %vm263, %v4462
        %4479 = vst.msk [vmem:[#allocation3 + $0xe0] sm:$0xff] %vm263, %v4463
        %4480 = vst.msk [vmem:[#allocation3 + $0xf8] sm:$0xff] %vm263, %v4464
        %4481 = vst.msk [vmem:[#allocation3 + $0x110] sm:$0xff] %vm263, %v4465
        %4482 = vst.msk [vmem:[#allocation3 + $0x128] sm:$0xff] %vm263, %v4466
        %4483 = vst.msk [vmem:[#allocation3 + $0x140] sm:$0xff] %vm263, %v4467
        %4484 = vst.msk [vmem:[#allocation3 + $0x158] sm:$0xff] %vm263, %v4468
        %4485 = vst.msk [vmem:[#allocation3 + $0x170] sm:$0xff] %vm263, %v4469
        %v4486 = vld [vmem:[%s262 + $0x2] sm:$0xff]
        %v4487 = vld [vmem:[%s262 + $0xa] sm:$0xff]
        %v4488 = vld [vmem:[%s262 + $0x1a] sm:$0xff]
        %v4489 = vld [vmem:[%s262 + $0x22] sm:$0xff]
        %v4490 = vld [vmem:[%s262 + $0x32] sm:$0xff]
        %v4491 = vld [vmem:[%s262 + $0x3a] sm:$0xff]
        %v4492 = vld [vmem:[%s262 + $0x4a] sm:$0xff]
        %v4493 = vld [vmem:[%s262 + $0x52] sm:$0xff]
        %v4494 = vld [vmem:[%s262 + $0x62] sm:$0xff]
        %v4495 = vld [vmem:[%s262 + $0x6a] sm:$0xff]
        %v4496 = vld [vmem:[%s262 + $0x7a] sm:$0xff]
        %v4497 = vld [vmem:[%s262 + $0x82] sm:$0xff]
        %v4498 = vld [vmem:[%s262 + $0x92] sm:$0xff]
        %v4499 = vld [vmem:[%s262 + $0x9a] sm:$0xff]
        %v4500 = vld [vmem:[%s262 + $0xaa] sm:$0xff]
        %v4501 = vld [vmem:[%s262 + $0xb2] sm:$0xff]
        %v4502 = vld [vmem:[%s262 + $0xc2] sm:$0xff]
        %v4503 = vld [vmem:[%s262 + $0xca] sm:$0xff]
        %v4504 = vld [vmem:[%s262 + $0xda] sm:$0xff]
        %v4505 = vld [vmem:[%s262 + $0xe2] sm:$0xff]
        %v4506 = vld [vmem:[%s262 + $0xf2] sm:$0xff]
        %v4507 = vld [vmem:[%s262 + $0xfa] sm:$0xff]
        %v4508 = vld [vmem:[%s262 + $0x10a] sm:$0xff]
        %v4509 = vld [vmem:[%s262 + $0x112] sm:$0xff]
        %v4510 = vld [vmem:[%s262 + $0x122] sm:$0xff]
        %v4511 = vld [vmem:[%s262 + $0x12a] sm:$0xff]
        %v4512 = vld [vmem:[%s262 + $0x13a] sm:$0xff]
        %v4513 = vld [vmem:[%s262 + $0x142] sm:$0xff]
        %v4514 = vld [vmem:[%s262 + $0x152] sm:$0xff]
        %v4515 = vld [vmem:[%s262 + $0x15a] sm:$0xff]
        %v4516 = vld [vmem:[%s262 + $0x16a] sm:$0xff]
        %v4517 = vld [vmem:[%s262 + $0x172] sm:$0xff]
        %v4518 = vpack.c.bf16 %v4487, %v4486
        %v4519 = vpack.c.bf16 %v4489, %v4488
        %v4520 = vpack.c.bf16 %v4491, %v4490
        %v4521 = vpack.c.bf16 %v4493, %v4492
        %v4522 = vpack.c.bf16 %v4495, %v4494
        %v4523 = vpack.c.bf16 %v4497, %v4496
        %v4524 = vpack.c.bf16 %v4499, %v4498
        %v4525 = vpack.c.bf16 %v4501, %v4500
        %v4526 = vpack.c.bf16 %v4503, %v4502
        %v4527 = vpack.c.bf16 %v4505, %v4504
        %v4528 = vpack.c.bf16 %v4507, %v4506
        %v4529 = vpack.c.bf16 %v4509, %v4508
        %v4530 = vpack.c.bf16 %v4511, %v4510
        %v4531 = vpack.c.bf16 %v4513, %v4512
        %v4532 = vpack.c.bf16 %v4515, %v4514
        %v4533 = vpack.c.bf16 %v4517, %v4516
        %4550 = vrot.lane.b32.xlu0 %v4518, 32
        %v4551 = vpop.permute.xlu0 %4550
        %4552 = vrot.lane.b32.xlu0 %v4519, 32
        %v4553 = vpop.permute.xlu0 %4552
        %4554 = vrot.lane.b32.xlu0 %v4520, 32
        %v4555 = vpop.permute.xlu0 %4554
        %4556 = vrot.lane.b32.xlu0 %v4521, 32
        %v4557 = vpop.permute.xlu0 %4556
        %4558 = vrot.lane.b32.xlu0 %v4522, 32
        %v4559 = vpop.permute.xlu0 %4558
        %4560 = vrot.lane.b32.xlu0 %v4523, 32
        %v4561 = vpop.permute.xlu0 %4560
        %4562 = vrot.lane.b32.xlu0 %v4524, 32
        %v4563 = vpop.permute.xlu0 %4562
        %4564 = vrot.lane.b32.xlu0 %v4525, 32
        %v4565 = vpop.permute.xlu0 %4564
        %4566 = vrot.lane.b32.xlu0 %v4526, 32
        %v4567 = vpop.permute.xlu0 %4566
        %4568 = vrot.lane.b32.xlu0 %v4527, 32
        %v4569 = vpop.permute.xlu0 %4568
        %4570 = vrot.lane.b32.xlu0 %v4528, 32
        %v4571 = vpop.permute.xlu0 %4570
        %4572 = vrot.lane.b32.xlu0 %v4529, 32
        %v4573 = vpop.permute.xlu0 %4572
        %4574 = vrot.lane.b32.xlu0 %v4530, 32
        %v4575 = vpop.permute.xlu0 %4574
        %4576 = vrot.lane.b32.xlu0 %v4531, 32
        %v4577 = vpop.permute.xlu0 %4576
        %4578 = vrot.lane.b32.xlu0 %v4532, 32
        %v4579 = vpop.permute.xlu0 %4578
        %4580 = vrot.lane.b32.xlu0 %v4533, 32
        %v4581 = vpop.permute.xlu0 %4580
        %4598 = vst.msk [vmem:[#allocation3 + $0x8] sm:$0xff] %vm472, %v4551
        %4599 = vst.msk [vmem:[#allocation3 + $0x20] sm:$0xff] %vm472, %v4553
        %4600 = vst.msk [vmem:[#allocation3 + $0x38] sm:$0xff] %vm472, %v4555
        %4601 = vst.msk [vmem:[#allocation3 + $0x50] sm:$0xff] %vm472, %v4557
        %4602 = vst.msk [vmem:[#allocation3 + $0x68] sm:$0xff] %vm472, %v4559
        %4603 = vst.msk [vmem:[#allocation3 + $0x80] sm:$0xff] %vm472, %v4561
        %4604 = vst.msk [vmem:[#allocation3 + $0x98] sm:$0xff] %vm472, %v4563
        %4605 = vst.msk [vmem:[#allocation3 + $0xb0] sm:$0xff] %vm472, %v4565
        %4606 = vst.msk [vmem:[#allocation3 + $0xc8] sm:$0xff] %vm472, %v4567
        %4607 = vst.msk [vmem:[#allocation3 + $0xe0] sm:$0xff] %vm472, %v4569
        %4608 = vst.msk [vmem:[#allocation3 + $0xf8] sm:$0xff] %vm472, %v4571
        %4609 = vst.msk [vmem:[#allocation3 + $0x110] sm:$0xff] %vm472, %v4573
        %4610 = vst.msk [vmem:[#allocation3 + $0x128] sm:$0xff] %vm472, %v4575
        %4611 = vst.msk [vmem:[#allocation3 + $0x140] sm:$0xff] %vm472, %v4577
        %4612 = vst.msk [vmem:[#allocation3 + $0x158] sm:$0xff] %vm472, %v4579
        %4613 = vst.msk [vmem:[#allocation3 + $0x170] sm:$0xff] %vm472, %v4581
        %v4614 = vld [vmem:[%s939] sm:$0xff]
        %v4615 = vld [vmem:[%s939 + $0x8] sm:$0xff]
        %v4616 = vld [vmem:[%s939 + $0x18] sm:$0xff]
        %v4617 = vld [vmem:[%s939 + $0x20] sm:$0xff]
        %v4618 = vld [vmem:[%s939 + $0x30] sm:$0xff]
        %v4619 = vld [vmem:[%s939 + $0x38] sm:$0xff]
        %v4620 = vld [vmem:[%s939 + $0x48] sm:$0xff]
        %v4621 = vld [vmem:[%s939 + $0x50] sm:$0xff]
        %v4622 = vld [vmem:[%s939 + $0x60] sm:$0xff]
        %v4623 = vld [vmem:[%s939 + $0x68] sm:$0xff]
        %v4624 = vld [vmem:[%s939 + $0x78] sm:$0xff]
        %v4625 = vld [vmem:[%s939 + $0x80] sm:$0xff]
        %v4626 = vld [vmem:[%s939 + $0x90] sm:$0xff]
        %v4627 = vld [vmem:[%s939 + $0x98] sm:$0xff]
        %v4628 = vld [vmem:[%s939 + $0xa8] sm:$0xff]
        %v4629 = vld [vmem:[%s939 + $0xb0] sm:$0xff]
        %v4630 = vld [vmem:[%s939 + $0xc0] sm:$0xff]
        %v4631 = vld [vmem:[%s939 + $0xc8] sm:$0xff]
        %v4632 = vld [vmem:[%s939 + $0xd8] sm:$0xff]
        %v4633 = vld [vmem:[%s939 + $0xe0] sm:$0xff]
        %v4634 = vld [vmem:[%s939 + $0xf0] sm:$0xff]
        %v4635 = vld [vmem:[%s939 + $0xf8] sm:$0xff]
        %v4636 = vld [vmem:[%s939 + $0x108] sm:$0xff]
        %v4637 = vld [vmem:[%s939 + $0x110] sm:$0xff]
        %v4638 = vld [vmem:[%s939 + $0x120] sm:$0xff]
        %v4639 = vld [vmem:[%s939 + $0x128] sm:$0xff]
        %v4640 = vld [vmem:[%s939 + $0x138] sm:$0xff]
        %v4641 = vld [vmem:[%s939 + $0x140] sm:$0xff]
        %v4642 = vld [vmem:[%s939 + $0x150] sm:$0xff]
        %v4643 = vld [vmem:[%s939 + $0x158] sm:$0xff]
        %v4644 = vld [vmem:[%s939 + $0x168] sm:$0xff]
        %v4645 = vld [vmem:[%s939 + $0x170] sm:$0xff]
        %v4646 = vpack.c.bf16 %v4615, %v4614
        %v4647 = vpack.c.bf16 %v4617, %v4616
        %v4648 = vpack.c.bf16 %v4619, %v4618
        %v4649 = vpack.c.bf16 %v4621, %v4620
        %v4650 = vpack.c.bf16 %v4623, %v4622
        %v4651 = vpack.c.bf16 %v4625, %v4624
        %v4652 = vpack.c.bf16 %v4627, %v4626
        %v4653 = vpack.c.bf16 %v4629, %v4628
        %v4654 = vpack.c.bf16 %v4631, %v4630
        %v4655 = vpack.c.bf16 %v4633, %v4632
        %v4656 = vpack.c.bf16 %v4635, %v4634
        %v4657 = vpack.c.bf16 %v4637, %v4636
        %v4658 = vpack.c.bf16 %v4639, %v4638
        %v4659 = vpack.c.bf16 %v4641, %v4640
        %v4660 = vpack.c.bf16 %v4643, %v4642
        %v4661 = vpack.c.bf16 %v4645, %v4644
        %4678 = vrot.lane.b32.xlu0 %v4646, 64
        %v4679 = vpop.permute.xlu0 %4678
        %4680 = vrot.lane.b32.xlu0 %v4647, 64
        %v4681 = vpop.permute.xlu0 %4680
        %4682 = vrot.lane.b32.xlu0 %v4648, 64
        %v4683 = vpop.permute.xlu0 %4682
        %4684 = vrot.lane.b32.xlu0 %v4649, 64
        %v4685 = vpop.permute.xlu0 %4684
        %4686 = vrot.lane.b32.xlu0 %v4650, 64
        %v4687 = vpop.permute.xlu0 %4686
        %4688 = vrot.lane.b32.xlu0 %v4651, 64
        %v4689 = vpop.permute.xlu0 %4688
        %4690 = vrot.lane.b32.xlu0 %v4652, 64
        %v4691 = vpop.permute.xlu0 %4690
        %4692 = vrot.lane.b32.xlu0 %v4653, 64
        %v4693 = vpop.permute.xlu0 %4692
        %4694 = vrot.lane.b32.xlu0 %v4654, 64
        %v4695 = vpop.permute.xlu0 %4694
        %4696 = vrot.lane.b32.xlu0 %v4655, 64
        %v4697 = vpop.permute.xlu0 %4696
        %4698 = vrot.lane.b32.xlu0 %v4656, 64
        %v4699 = vpop.permute.xlu0 %4698
        %4700 = vrot.lane.b32.xlu0 %v4657, 64
        %v4701 = vpop.permute.xlu0 %4700
        %4702 = vrot.lane.b32.xlu0 %v4658, 64
        %v4703 = vpop.permute.xlu0 %4702
        %4704 = vrot.lane.b32.xlu0 %v4659, 64
        %v4705 = vpop.permute.xlu0 %4704
        %4706 = vrot.lane.b32.xlu0 %v4660, 64
        %v4707 = vpop.permute.xlu0 %4706
        %4708 = vrot.lane.b32.xlu0 %v4661, 64
        %v4709 = vpop.permute.xlu0 %4708
        %4726 = vst.msk [vmem:[#allocation3 + $0x8] sm:$0xff] %vm601, %v4679
        %4727 = vst.msk [vmem:[#allocation3 + $0x20] sm:$0xff] %vm601, %v4681
        %4728 = vst.msk [vmem:[#allocation3 + $0x38] sm:$0xff] %vm601, %v4683
        %4729 = vst.msk [vmem:[#allocation3 + $0x50] sm:$0xff] %vm601, %v4685
        %4730 = vst.msk [vmem:[#allocation3 + $0x68] sm:$0xff] %vm601, %v4687
        %4731 = vst.msk [vmem:[#allocation3 + $0x80] sm:$0xff] %vm601, %v4689
        %4732 = vst.msk [vmem:[#allocation3 + $0x98] sm:$0xff] %vm601, %v4691
        %4733 = vst.msk [vmem:[#allocation3 + $0xb0] sm:$0xff] %vm601, %v4693
        %4734 = vst.msk [vmem:[#allocation3 + $0xc8] sm:$0xff] %vm601, %v4695
        %4735 = vst.msk [vmem:[#allocation3 + $0xe0] sm:$0xff] %vm601, %v4697
        %4736 = vst.msk [vmem:[#allocation3 + $0xf8] sm:$0xff] %vm601, %v4699
        %4737 = vst.msk [vmem:[#allocation3 + $0x110] sm:$0xff] %vm601, %v4701
        %4738 = vst.msk [vmem:[#allocation3 + $0x128] sm:$0xff] %vm601, %v4703
        %4739 = vst.msk [vmem:[#allocation3 + $0x140] sm:$0xff] %vm601, %v4705
        %4740 = vst.msk [vmem:[#allocation3 + $0x158] sm:$0xff] %vm601, %v4707
        %4741 = vst.msk [vmem:[#allocation3 + $0x170] sm:$0xff] %vm601, %v4709
        %v4742 = vld [vmem:[%s939 + $0x1] sm:$0xff]
        %v4743 = vld [vmem:[%s939 + $0x9] sm:$0xff]
        %v4744 = vld [vmem:[%s939 + $0x19] sm:$0xff]
        %v4745 = vld [vmem:[%s939 + $0x21] sm:$0xff]
        %v4746 = vld [vmem:[%s939 + $0x31] sm:$0xff]
        %v4747 = vld [vmem:[%s939 + $0x39] sm:$0xff]
        %v4748 = vld [vmem:[%s939 + $0x49] sm:$0xff]
        %v4749 = vld [vmem:[%s939 + $0x51] sm:$0xff]
        %v4750 = vld [vmem:[%s939 + $0x61] sm:$0xff]
        %v4751 = vld [vmem:[%s939 + $0x69] sm:$0xff]
        %v4752 = vld [vmem:[%s939 + $0x79] sm:$0xff]
        %v4753 = vld [vmem:[%s939 + $0x81] sm:$0xff]
        %v4754 = vld [vmem:[%s939 + $0x91] sm:$0xff]
        %v4755 = vld [vmem:[%s939 + $0x99] sm:$0xff]
        %v4756 = vld [vmem:[%s939 + $0xa9] sm:$0xff]
        %v4757 = vld [vmem:[%s939 + $0xb1] sm:$0xff]
        %v4758 = vld [vmem:[%s939 + $0xc1] sm:$0xff]
        %v4759 = vld [vmem:[%s939 + $0xc9] sm:$0xff]
        %v4760 = vld [vmem:[%s939 + $0xd9] sm:$0xff]
        %v4761 = vld [vmem:[%s939 + $0xe1] sm:$0xff]
        %v4762 = vld [vmem:[%s939 + $0xf1] sm:$0xff]
        %v4763 = vld [vmem:[%s939 + $0xf9] sm:$0xff]
        %v4764 = vld [vmem:[%s939 + $0x109] sm:$0xff]
        %v4765 = vld [vmem:[%s939 + $0x111] sm:$0xff]
        %v4766 = vld [vmem:[%s939 + $0x121] sm:$0xff]
        %v4767 = vld [vmem:[%s939 + $0x129] sm:$0xff]
        %v4768 = vld [vmem:[%s939 + $0x139] sm:$0xff]
        %v4769 = vld [vmem:[%s939 + $0x141] sm:$0xff]
        %v4770 = vld [vmem:[%s939 + $0x151] sm:$0xff]
        %v4771 = vld [vmem:[%s939 + $0x159] sm:$0xff]
        %v4772 = vld [vmem:[%s939 + $0x169] sm:$0xff]
        %v4773 = vld [vmem:[%s939 + $0x171] sm:$0xff]
        %v4774 = vpack.c.bf16 %v4743, %v4742
        %v4775 = vpack.c.bf16 %v4745, %v4744
        %v4776 = vpack.c.bf16 %v4747, %v4746
        %v4777 = vpack.c.bf16 %v4749, %v4748
        %v4778 = vpack.c.bf16 %v4751, %v4750
        %v4779 = vpack.c.bf16 %v4753, %v4752
        %v4780 = vpack.c.bf16 %v4755, %v4754
        %v4781 = vpack.c.bf16 %v4757, %v4756
        %v4782 = vpack.c.bf16 %v4759, %v4758
        %v4783 = vpack.c.bf16 %v4761, %v4760
        %v4784 = vpack.c.bf16 %v4763, %v4762
        %v4785 = vpack.c.bf16 %v4765, %v4764
        %v4786 = vpack.c.bf16 %v4767, %v4766
        %v4787 = vpack.c.bf16 %v4769, %v4768
        %v4788 = vpack.c.bf16 %v4771, %v4770
        %v4789 = vpack.c.bf16 %v4773, %v4772
        %4806 = vrot.lane.b32.xlu0 %v4774, 96
        %v4807 = vpop.permute.xlu0 %4806
        %4808 = vrot.lane.b32.xlu0 %v4775, 96
        %v4809 = vpop.permute.xlu0 %4808
        %4810 = vrot.lane.b32.xlu0 %v4776, 96
        %v4811 = vpop.permute.xlu0 %4810
        %4812 = vrot.lane.b32.xlu0 %v4777, 96
        %v4813 = vpop.permute.xlu0 %4812
        %4814 = vrot.lane.b32.xlu0 %v4778, 96
        %v4815 = vpop.permute.xlu0 %4814
        %4816 = vrot.lane.b32.xlu0 %v4779, 96
        %v4817 = vpop.permute.xlu0 %4816
        %4818 = vrot.lane.b32.xlu0 %v4780, 96
        %v4819 = vpop.permute.xlu0 %4818
        %4820 = vrot.lane.b32.xlu0 %v4781, 96
        %v4821 = vpop.permute.xlu0 %4820
        %4822 = vrot.lane.b32.xlu0 %v4782, 96
        %v4823 = vpop.permute.xlu0 %4822
        %4824 = vrot.lane.b32.xlu0 %v4783, 96
        %v4825 = vpop.permute.xlu0 %4824
        %4826 = vrot.lane.b32.xlu0 %v4784, 96
        %v4827 = vpop.permute.xlu0 %4826
        %4828 = vrot.lane.b32.xlu0 %v4785, 96
        %v4829 = vpop.permute.xlu0 %4828
        %4830 = vrot.lane.b32.xlu0 %v4786, 96
        %v4831 = vpop.permute.xlu0 %4830
        %4832 = vrot.lane.b32.xlu0 %v4787, 96
        %v4833 = vpop.permute.xlu0 %4832
        %4834 = vrot.lane.b32.xlu0 %v4788, 96
        %v4835 = vpop.permute.xlu0 %4834
        %4836 = vrot.lane.b32.xlu0 %v4789, 96
        %v4837 = vpop.permute.xlu0 %4836
        %4854 = vst.msk [vmem:[#allocation3 + $0x8] sm:$0xff] %vm730, %v4807
        %4855 = vst.msk [vmem:[#allocation3 + $0x20] sm:$0xff] %vm730, %v4809
        %4856 = vst.msk [vmem:[#allocation3 + $0x38] sm:$0xff] %vm730, %v4811
        %4857 = vst.msk [vmem:[#allocation3 + $0x50] sm:$0xff] %vm730, %v4813
        %4858 = vst.msk [vmem:[#allocation3 + $0x68] sm:$0xff] %vm730, %v4815
        %4859 = vst.msk [vmem:[#allocation3 + $0x80] sm:$0xff] %vm730, %v4817
        %4860 = vst.msk [vmem:[#allocation3 + $0x98] sm:$0xff] %vm730, %v4819
        %4861 = vst.msk [vmem:[#allocation3 + $0xb0] sm:$0xff] %vm730, %v4821
        %4862 = vst.msk [vmem:[#allocation3 + $0xc8] sm:$0xff] %vm730, %v4823
        %4863 = vst.msk [vmem:[#allocation3 + $0xe0] sm:$0xff] %vm730, %v4825
        %4864 = vst.msk [vmem:[#allocation3 + $0xf8] sm:$0xff] %vm730, %v4827
        %4865 = vst.msk [vmem:[#allocation3 + $0x110] sm:$0xff] %vm730, %v4829
        %4866 = vst.msk [vmem:[#allocation3 + $0x128] sm:$0xff] %vm730, %v4831
        %4867 = vst.msk [vmem:[#allocation3 + $0x140] sm:$0xff] %vm730, %v4833
        %4868 = vst.msk [vmem:[#allocation3 + $0x158] sm:$0xff] %vm730, %v4835
        %4869 = vst.msk [vmem:[#allocation3 + $0x170] sm:$0xff] %vm730, %v4837
        %v4870 = vld [vmem:[%s939 + $0x2] sm:$0xff]
        %v4871 = vld [vmem:[%s939 + $0xa] sm:$0xff]
        %v4872 = vld [vmem:[%s939 + $0x1a] sm:$0xff]
        %v4873 = vld [vmem:[%s939 + $0x22] sm:$0xff]
        %v4874 = vld [vmem:[%s939 + $0x32] sm:$0xff]
        %v4875 = vld [vmem:[%s939 + $0x3a] sm:$0xff]
        %v4876 = vld [vmem:[%s939 + $0x4a] sm:$0xff]
        %v4877 = vld [vmem:[%s939 + $0x52] sm:$0xff]
        %v4878 = vld [vmem:[%s939 + $0x62] sm:$0xff]
        %v4879 = vld [vmem:[%s939 + $0x6a] sm:$0xff]
        %v4880 = vld [vmem:[%s939 + $0x7a] sm:$0xff]
        %v4881 = vld [vmem:[%s939 + $0x82] sm:$0xff]
        %v4882 = vld [vmem:[%s939 + $0x92] sm:$0xff]
        %v4883 = vld [vmem:[%s939 + $0x9a] sm:$0xff]
        %v4884 = vld [vmem:[%s939 + $0xaa] sm:$0xff]
        %v4885 = vld [vmem:[%s939 + $0xb2] sm:$0xff]
        %v4886 = vld [vmem:[%s939 + $0xc2] sm:$0xff]
        %v4887 = vld [vmem:[%s939 + $0xca] sm:$0xff]
        %v4888 = vld [vmem:[%s939 + $0xda] sm:$0xff]
        %v4889 = vld [vmem:[%s939 + $0xe2] sm:$0xff]
        %v4890 = vld [vmem:[%s939 + $0xf2] sm:$0xff]
        %v4891 = vld [vmem:[%s939 + $0xfa] sm:$0xff]
        %v4892 = vld [vmem:[%s939 + $0x10a] sm:$0xff]
        %v4893 = vld [vmem:[%s939 + $0x112] sm:$0xff]
        %v4894 = vld [vmem:[%s939 + $0x122] sm:$0xff]
        %v4895 = vld [vmem:[%s939 + $0x12a] sm:$0xff]
        %v4896 = vld [vmem:[%s939 + $0x13a] sm:$0xff]
        %v4897 = vld [vmem:[%s939 + $0x142] sm:$0xff]
        %v4898 = vld [vmem:[%s939 + $0x152] sm:$0xff]
        %v4899 = vld [vmem:[%s939 + $0x15a] sm:$0xff]
        %v4900 = vld [vmem:[%s939 + $0x16a] sm:$0xff]
        %v4901 = vld [vmem:[%s939 + $0x172] sm:$0xff]
        %v4902 = vpack.c.bf16 %v4871, %v4870
        %v4903 = vpack.c.bf16 %v4873, %v4872
        %v4904 = vpack.c.bf16 %v4875, %v4874
        %v4905 = vpack.c.bf16 %v4877, %v4876
        %v4906 = vpack.c.bf16 %v4879, %v4878
        %v4907 = vpack.c.bf16 %v4881, %v4880
        %v4908 = vpack.c.bf16 %v4883, %v4882
        %v4909 = vpack.c.bf16 %v4885, %v4884
        %v4910 = vpack.c.bf16 %v4887, %v4886
        %v4911 = vpack.c.bf16 %v4889, %v4888
        %v4912 = vpack.c.bf16 %v4891, %v4890
        %v4913 = vpack.c.bf16 %v4893, %v4892
        %v4914 = vpack.c.bf16 %v4895, %v4894
        %v4915 = vpack.c.bf16 %v4897, %v4896
        %v4916 = vpack.c.bf16 %v4899, %v4898
        %v4917 = vpack.c.bf16 %v4901, %v4900
        %4918 = vst.msk [vmem:[#allocation3 + $0x10] sm:$0xff] %vm263, %v4902
        %4919 = vst.msk [vmem:[#allocation3 + $0x28] sm:$0xff] %vm263, %v4903
        %4920 = vst.msk [vmem:[#allocation3 + $0x40] sm:$0xff] %vm263, %v4904
        %4921 = vst.msk [vmem:[#allocation3 + $0x58] sm:$0xff] %vm263, %v4905
        %4922 = vst.msk [vmem:[#allocation3 + $0x70] sm:$0xff] %vm263, %v4906
        %4923 = vst.msk [vmem:[#allocation3 + $0x88] sm:$0xff] %vm263, %v4907
        %4924 = vst.msk [vmem:[#allocation3 + $0xa0] sm:$0xff] %vm263, %v4908
        %4925 = vst.msk [vmem:[#allocation3 + $0xb8] sm:$0xff] %vm263, %v4909
        %4926 = vst.msk [vmem:[#allocation3 + $0xd0] sm:$0xff] %vm263, %v4910
        %4927 = vst.msk [vmem:[#allocation3 + $0xe8] sm:$0xff] %vm263, %v4911
        %4928 = vst.msk [vmem:[#allocation3 + $0x100] sm:$0xff] %vm263, %v4912
        %4929 = vst.msk [vmem:[#allocation3 + $0x118] sm:$0xff] %vm263, %v4913
        %4930 = vst.msk [vmem:[#allocation3 + $0x130] sm:$0xff] %vm263, %v4914
        %4931 = vst.msk [vmem:[#allocation3 + $0x148] sm:$0xff] %vm263, %v4915
        %4932 = vst.msk [vmem:[#allocation3 + $0x160] sm:$0xff] %vm263, %v4916
        %4933 = vst.msk [vmem:[#allocation3 + $0x178] sm:$0xff] %vm263, %v4917
        %v4934 = vld [vmem:[#allocation3] sm:$0xff]
        %v4935 = vld [vmem:[#allocation3 + $0x8] sm:$0xff]
        %v4936 = vld [vmem:[#allocation3 + $0x10] sm:$0xff]
        %v4937 = vld [vmem:[#allocation3 + $0x18] sm:$0xff]
        %v4938 = vld [vmem:[#allocation3 + $0x20] sm:$0xff]
        %v4939 = vld [vmem:[#allocation3 + $0x28] sm:$0xff]
        %v4940 = vld [vmem:[#allocation3 + $0x30] sm:$0xff]
        %v4941 = vld [vmem:[#allocation3 + $0x38] sm:$0xff]
        %v4942 = vld [vmem:[#allocation3 + $0x40] sm:$0xff]
        %v4943 = vld [vmem:[#allocation3 + $0x48] sm:$0xff]
        %v4944 = vld [vmem:[#allocation3 + $0x50] sm:$0xff]
        %v4945 = vld [vmem:[#allocation3 + $0x58] sm:$0xff]
        %v4946 = vld [vmem:[#allocation3 + $0x60] sm:$0xff]
        %v4947 = vld [vmem:[#allocation3 + $0x68] sm:$0xff]
        %v4948 = vld [vmem:[#allocation3 + $0x70] sm:$0xff]
        %v4949 = vld [vmem:[#allocation3 + $0x78] sm:$0xff]
        %v4950 = vld [vmem:[#allocation3 + $0x80] sm:$0xff]
        %v4951 = vld [vmem:[#allocation3 + $0x88] sm:$0xff]
        %v4952 = vld [vmem:[#allocation3 + $0x90] sm:$0xff]
        %v4953 = vld [vmem:[#allocation3 + $0x98] sm:$0xff]
        %v4954 = vld [vmem:[#allocation3 + $0xa0] sm:$0xff]
        %v4955 = vld [vmem:[#allocation3 + $0xa8] sm:$0xff]
        %v4956 = vld [vmem:[#allocation3 + $0xb0] sm:$0xff]
        %v4957 = vld [vmem:[#allocation3 + $0xb8] sm:$0xff]
        %v4958 = vld [vmem:[#allocation3 + $0xc0] sm:$0xff]
        %v4959 = vld [vmem:[#allocation3 + $0xc8] sm:$0xff]
        %v4960 = vld [vmem:[#allocation3 + $0xd0] sm:$0xff]
        %v4961 = vld [vmem:[#allocation3 + $0xd8] sm:$0xff]
        %v4962 = vld [vmem:[#allocation3 + $0xe0] sm:$0xff]
        %v4963 = vld [vmem:[#allocation3 + $0xe8] sm:$0xff]
        %v4964 = vld [vmem:[#allocation3 + $0xf0] sm:$0xff]
        %v4965 = vld [vmem:[#allocation3 + $0xf8] sm:$0xff]
        %v4966 = vld [vmem:[#allocation3 + $0x100] sm:$0xff]
        %v4967 = vld [vmem:[#allocation3 + $0x108] sm:$0xff]
        %v4968 = vld [vmem:[#allocation3 + $0x110] sm:$0xff]
        %v4969 = vld [vmem:[#allocation3 + $0x118] sm:$0xff]
        %v4970 = vld [vmem:[#allocation3 + $0x120] sm:$0xff]
        %v4971 = vld [vmem:[#allocation3 + $0x128] sm:$0xff]
        %v4972 = vld [vmem:[#allocation3 + $0x130] sm:$0xff]
        %v4973 = vld [vmem:[#allocation3 + $0x138] sm:$0xff]
        %v4974 = vld [vmem:[#allocation3 + $0x140] sm:$0xff]
        %v4975 = vld [vmem:[#allocation3 + $0x148] sm:$0xff]
        %v4976 = vld [vmem:[#allocation3 + $0x150] sm:$0xff]
        %v4977 = vld [vmem:[#allocation3 + $0x158] sm:$0xff]
        %v4978 = vld [vmem:[#allocation3 + $0x160] sm:$0xff]
        %v4979 = vld [vmem:[#allocation3 + $0x168] sm:$0xff]
        %v4980 = vld [vmem:[#allocation3 + $0x170] sm:$0xff]
        %v4981 = vld [vmem:[#allocation3 + $0x178] sm:$0xff]
        %s4982 = scalar_lea.vmem %s1, 288
        %v4983 = vld [vmem:[%s4982] sm:$0xf]
        %v4984 = vld [vmem:[%s4982 + $0x4] sm:$0xf]
        %v4985 = vld [vmem:[%s4982 + $0x8] sm:$0xf]
        %v4986 = vld [vmem:[%s4982 + $0xc] sm:$0xf]
        %v4987 = vld [vmem:[%s4982 + $0x10] sm:$0xf]
        %v4988 = vld [vmem:[%s4982 + $0x14] sm:$0xf]
        %v4989 = vld [vmem:[%s4982 + $0x18] sm:$0xf]
        %v4990 = vld [vmem:[%s4982 + $0x1c] sm:$0xf]
        %v4991 = vld [vmem:[%s4982 + $0x20] sm:$0xf]
        %v4992 = vld [vmem:[%s4982 + $0x24] sm:$0xf]
        %v4993 = vld [vmem:[%s4982 + $0x28] sm:$0xf]
        %v4994 = vld [vmem:[%s4982 + $0x2c] sm:$0xf]
        %v4995 = vld [vmem:[%s4982 + $0x30] sm:$0xf]
        %v4996 = vld [vmem:[%s4982 + $0x34] sm:$0xf]
        %v4997 = vld [vmem:[%s4982 + $0x38] sm:$0xf]
        %v4998 = vld [vmem:[%s4982 + $0x3c] sm:$0xf]
        %v4999 = vld [vmem:[%s4982 + $0x40] sm:$0xf]
        %v5000 = vld [vmem:[%s4982 + $0x44] sm:$0xf]
        %v5001 = vld [vmem:[%s4982 + $0x48] sm:$0xf]
        %v5002 = vld [vmem:[%s4982 + $0x4c] sm:$0xf]
        %v5003 = vld [vmem:[%s4982 + $0x50] sm:$0xf]
        %v5004 = vld [vmem:[%s4982 + $0x54] sm:$0xf]
        %v5005 = vld [vmem:[%s4982 + $0x58] sm:$0xf]
        %v5006 = vld [vmem:[%s4982 + $0x5c] sm:$0xf]
        %v5007 = vld [vmem:[%s4982 + $0x60] sm:$0xf]
        %v5008 = vld [vmem:[%s4982 + $0x64] sm:$0xf]
        %v5009 = vld [vmem:[%s4982 + $0x68] sm:$0xf]
        %v5010 = vld [vmem:[%s4982 + $0x6c] sm:$0xf]
        %v5011 = vld [vmem:[%s4982 + $0x70] sm:$0xf]
        %v5012 = vld [vmem:[%s4982 + $0x74] sm:$0xf]
        %v5013 = vld [vmem:[%s4982 + $0x78] sm:$0xf]
        %v5014 = vld [vmem:[%s4982 + $0x7c] sm:$0xf]
        %v5015 = vld [vmem:[%s4982 + $0x80] sm:$0xf]
        %v5016 = vld [vmem:[%s4982 + $0x84] sm:$0xf]
        %v5017 = vld [vmem:[%s4982 + $0x88] sm:$0xf]
        %v5018 = vld [vmem:[%s4982 + $0x8c] sm:$0xf]
        %v5019 = vld [vmem:[%s2 + $0x2] sm:$0x1]
        %v5020 = vlaneseq
        %v5021 = vshrl.u32 %v5020, 7
        %v5022 = vsub.s32 0, %v5021
        %v5023 = vrot.slane %v5019, %v5022
        %v5060 = vunpack.c.l.b16 %v4983
        %v5061 = vunpack.c.l.b16 %v4984
        %v5062 = vunpack.c.l.b16 %v4985
        %v5063 = vunpack.c.l.b16 %v4986
        %v5064 = vunpack.c.l.b16 %v4987
        %v5065 = vunpack.c.l.b16 %v4988
        %v5066 = vunpack.c.l.b16 %v4989
        %v5067 = vunpack.c.l.b16 %v4990
        %v5068 = vunpack.c.l.b16 %v4991
        %v5069 = vunpack.c.l.b16 %v4992
        %v5070 = vunpack.c.l.b16 %v4993
        %v5071 = vunpack.c.l.b16 %v4994
        %v5072 = vunpack.c.l.b16 %v4995
        %v5073 = vunpack.c.l.b16 %v4996
        %v5074 = vunpack.c.l.b16 %v4997
        %v5075 = vunpack.c.l.b16 %v4998
        %v5076 = vunpack.c.l.b16 %v4999
        %v5077 = vunpack.c.l.b16 %v5000
        %v5078 = vunpack.c.l.b16 %v5001
        %v5079 = vunpack.c.l.b16 %v5002
        %v5080 = vunpack.c.l.b16 %v5003
        %v5081 = vunpack.c.l.b16 %v5004
        %v5082 = vunpack.c.l.b16 %v5005
        %v5083 = vunpack.c.l.b16 %v5006
        %v5084 = vunpack.c.l.b16 %v5007
        %v5085 = vunpack.c.l.b16 %v5008
        %v5086 = vunpack.c.l.b16 %v5009
        %v5087 = vunpack.c.l.b16 %v5010
        %v5088 = vunpack.c.l.b16 %v5011
        %v5089 = vunpack.c.l.b16 %v5012
        %v5090 = vunpack.c.l.b16 %v5013
        %v5091 = vunpack.c.l.b16 %v5014
        %v5092 = vunpack.c.l.b16 %v5015
        %v5093 = vunpack.c.l.b16 %v5016
        %v5094 = vunpack.c.l.b16 %v5017
        %v5095 = vunpack.c.l.b16 %v5018
        %v5096 = vpack.c.b16 %v5061, %v5060
        %v5097 = vpack.c.b16 %v5063, %v5062
        %v5098 = vpack.c.b16 %v5065, %v5064
        %v5099 = vpack.c.b16 %v5067, %v5066
        %v5100 = vpack.c.b16 %v5069, %v5068
        %v5101 = vpack.c.b16 %v5071, %v5070
        %v5102 = vpack.c.b16 %v5073, %v5072
        %v5103 = vpack.c.b16 %v5075, %v5074
        %v5104 = vpack.c.b16 %v5077, %v5076
        %v5105 = vpack.c.b16 %v5079, %v5078
        %v5106 = vpack.c.b16 %v5081, %v5080
        %v5107 = vpack.c.b16 %v5083, %v5082
        %v5108 = vpack.c.b16 %v5085, %v5084
        %v5109 = vpack.c.b16 %v5087, %v5086
        %v5110 = vpack.c.b16 %v5089, %v5088
        %v5111 = vpack.c.b16 %v5091, %v5090
        %v5112 = vpack.c.b16 %v5093, %v5092
        %v5113 = vpack.c.b16 %v5095, %v5094
        %v5133 = vsel %vm263, %v4936, 0
        %v5136 = vsel %vm263, %v4939, 0
        %v5139 = vsel %vm263, %v4942, 0
        %v5142 = vsel %vm263, %v4945, 0
        %v5145 = vsel %vm263, %v4948, 0
        %v5148 = vsel %vm263, %v4951, 0
        %v5151 = vsel %vm263, %v4954, 0
        %v5154 = vsel %vm263, %v4957, 0
        %v5157 = vsel %vm263, %v4960, 0
        %v5160 = vsel %vm263, %v4963, 0
        %v5163 = vsel %vm263, %v4966, 0
        %v5166 = vsel %vm263, %v4969, 0
        %v5169 = vsel %vm263, %v4972, 0
        %v5172 = vsel %vm263, %v4975, 0
        %v5175 = vsel %vm263, %v4978, 0
        %v5178 = vsel %vm263, %v4981, 0
        %5180 = vmatprep.subr.bf16.mxu0 0
        %5181 = vmatpush1.bf16.msra.mxu0 %v5096
        %5182 = vmatprep.subr.bf16.mxu0 0
        %5183 = vmatpush1.bf16.msra.mxu0 %v5097
        %5184 = vmatprep.subr.bf16.mxu0 0
        %5185 = vmatpush1.bf16.msra.mxu0 %v5098
        %5186 = vmatprep.subr.bf16.mxu0 0
        %5187 = vmatpush1.bf16.msra.mxu0 %v5099
        %5188 = vmatprep.subr.bf16.mxu0 0
        %5189 = vmatpush1.bf16.msra.mxu0 %v5100
        %5190 = vmatprep.subr.bf16.mxu0 0
        %5191 = vmatpush1.bf16.msra.mxu0 %v5101
        %5192 = vmatprep.subr.bf16.mxu0 0
        %5193 = vmatpush1.bf16.msra.mxu0 %v5102
        %5194 = vmatprep.subr.bf16.mxu0 0
        %5195 = vmatpush1.bf16.msra.mxu0 %v5103
        %5196 = vmatprep.subr.bf16.mxu0 0
        %5197 = vmatpush1.bf16.msra.mxu0 %v5104
        %5198 = vmatprep.subr.bf16.mxu0 0
        %5199 = vmatpush1.bf16.msra.mxu0 %v5105
        %5200 = vmatprep.subr.bf16.mxu0 0
        %5201 = vmatpush1.bf16.msra.mxu0 %v5106
        %5202 = vmatprep.subr.bf16.mxu0 0
        %5203 = vmatpush1.bf16.msra.mxu0 %v5107
        %5204 = vmatprep.subr.bf16.mxu0 0
        %5205 = vmatpush1.bf16.msra.mxu0 %v5108
        %5206 = vmatprep.subr.bf16.mxu0 0
        %5207 = vmatpush1.bf16.msra.mxu0 %v5109
        %5208 = vmatprep.subr.bf16.mxu0 0
        %5209 = vmatpush1.bf16.msra.mxu0 %v5110
        %5210 = vmatprep.subr.bf16.mxu0 0
        %5211 = vmatpush1.bf16.msra.mxu0 %v5111
        %5212 = vmatprep.mubr.bf16.mxu0 %v4935
        %5213 = vmatmul.mubr.bf16.gmra.mrb[0].mxu0 %v4934
        %v5214 = vpop.f32.mrb[0].mxu0
        %v5215 = vadd.f32 %v5023, %v5214
        %v5216 = vpop.f32.mrb[0].mxu0
        %v5217 = vpop.f32.mrb[0].mxu0
        %v5218 = vadd.f32 %v5023, %v5217
        %v5219 = vpop.f32.mrb[0].mxu0
        %5220 = vmatprep.mubr.bf16.mxu0 %v4938
        %5221 = vmatmul.mubr.bf16.gmra.mrb[0].mxu0 %v4937
        %v5222 = vpop.f32.mrb[0].mxu0
        %v5223 = vadd.f32 %v5023, %v5222
        %v5224 = vpop.f32.mrb[0].mxu0
        %v5225 = vpop.f32.mrb[0].mxu0
        %v5226 = vadd.f32 %v5023, %v5225
        %v5227 = vpop.f32.mrb[0].mxu0
        %5228 = vmatprep.mubr.bf16.mxu0 %v4941
        %5229 = vmatmul.mubr.bf16.gmra.mrb[0].mxu0 %v4940
        %v5230 = vpop.f32.mrb[0].mxu0
        %v5231 = vadd.f32 %v5023, %v5230
        %v5232 = vpop.f32.mrb[0].mxu0
        %v5233 = vpop.f32.mrb[0].mxu0
        %v5234 = vadd.f32 %v5023, %v5233
        %v5235 = vpop.f32.mrb[0].mxu0
        %5236 = vmatprep.mubr.bf16.mxu0 %v4944
        %5237 = vmatmul.mubr.bf16.gmra.mrb[0].mxu0 %v4943
        %v5238 = vpop.f32.mrb[0].mxu0
        %v5239 = vadd.f32 %v5023, %v5238
        %v5240 = vpop.f32.mrb[0].mxu0
        %v5241 = vpop.f32.mrb[0].mxu0
        %v5242 = vadd.f32 %v5023, %v5241
        %v5243 = vpop.f32.mrb[0].mxu0
        %5244 = vmatprep.mubr.bf16.mxu0 %v4947
        %5245 = vmatmul.mubr.bf16.gmra.mrb[0].mxu0 %v4946
        %v5246 = vpop.f32.mrb[0].mxu0
        %v5247 = vadd.f32 %v5023, %v5246
        %v5248 = vpop.f32.mrb[0].mxu0
        %v5249 = vpop.f32.mrb[0].mxu0
        %v5250 = vadd.f32 %v5023, %v5249
        %v5251 = vpop.f32.mrb[0].mxu0
        %5252 = vmatprep.mubr.bf16.mxu0 %v4950
        %5253 = vmatmul.mubr.bf16.gmra.mrb[0].mxu0 %v4949
        %v5254 = vpop.f32.mrb[0].mxu0
        %v5255 = vadd.f32 %v5023, %v5254
        %v5256 = vpop.f32.mrb[0].mxu0
        %v5257 = vpop.f32.mrb[0].mxu0
        %v5258 = vadd.f32 %v5023, %v5257
        %v5259 = vpop.f32.mrb[0].mxu0
        %5260 = vmatprep.mubr.bf16.mxu0 %v4953
        %5261 = vmatmul.mubr.bf16.gmra.mrb[0].mxu0 %v4952
        %v5262 = vpop.f32.mrb[0].mxu0
        %v5263 = vadd.f32 %v5023, %v5262
        %v5264 = vpop.f32.mrb[0].mxu0
        %v5265 = vpop.f32.mrb[0].mxu0
        %v5266 = vadd.f32 %v5023, %v5265
        %v5267 = vpop.f32.mrb[0].mxu0
        %5268 = vmatprep.mubr.bf16.mxu0 %v4956
        %5269 = vmatmul.mubr.bf16.gmra.mrb[0].mxu0 %v4955
        %v5270 = vpop.f32.mrb[0].mxu0
        %v5271 = vadd.f32 %v5023, %v5270
        %v5272 = vpop.f32.mrb[0].mxu0
        %v5273 = vpop.f32.mrb[0].mxu0
        %v5274 = vadd.f32 %v5023, %v5273
        %v5275 = vpop.f32.mrb[0].mxu0
        %5276 = vmatprep.mubr.bf16.mxu0 %v4959
        %5277 = vmatmul.mubr.bf16.gmra.mrb[0].mxu0 %v4958
        %v5278 = vpop.f32.mrb[0].mxu0
        %v5279 = vadd.f32 %v5023, %v5278
        %v5280 = vpop.f32.mrb[0].mxu0
        %v5281 = vpop.f32.mrb[0].mxu0
        %v5282 = vadd.f32 %v5023, %v5281
        %v5283 = vpop.f32.mrb[0].mxu0
        %5284 = vmatprep.mubr.bf16.mxu0 %v4962
        %5285 = vmatmul.mubr.bf16.gmra.mrb[0].mxu0 %v4961
        %v5286 = vpop.f32.mrb[0].mxu0
        %v5287 = vadd.f32 %v5023, %v5286
        %v5288 = vpop.f32.mrb[0].mxu0
        %v5289 = vpop.f32.mrb[0].mxu0
        %v5290 = vadd.f32 %v5023, %v5289
        %v5291 = vpop.f32.mrb[0].mxu0
        %5292 = vmatprep.mubr.bf16.mxu0 %v4965
        %5293 = vmatmul.mubr.bf16.gmra.mrb[0].mxu0 %v4964
        %v5294 = vpop.f32.mrb[0].mxu0
        %v5295 = vadd.f32 %v5023, %v5294
        %v5296 = vpop.f32.mrb[0].mxu0
        %v5297 = vpop.f32.mrb[0].mxu0
        %v5298 = vadd.f32 %v5023, %v5297
        %v5299 = vpop.f32.mrb[0].mxu0
        %5300 = vmatprep.mubr.bf16.mxu0 %v4968
        %5301 = vmatmul.mubr.bf16.gmra.mrb[0].mxu0 %v4967
        %v5302 = vpop.f32.mrb[0].mxu0
        %v5303 = vadd.f32 %v5023, %v5302
        %v5304 = vpop.f32.mrb[0].mxu0
        %v5305 = vpop.f32.mrb[0].mxu0
        %v5306 = vadd.f32 %v5023, %v5305
        %v5307 = vpop.f32.mrb[0].mxu0
        %5308 = vmatprep.mubr.bf16.mxu0 %v4971
        %5309 = vmatmul.mubr.bf16.gmra.mrb[0].mxu0 %v4970
        %v5310 = vpop.f32.mrb[0].mxu0
        %v5311 = vadd.f32 %v5023, %v5310
        %v5312 = vpop.f32.mrb[0].mxu0
        %v5313 = vpop.f32.mrb[0].mxu0
        %v5314 = vadd.f32 %v5023, %v5313
        %v5315 = vpop.f32.mrb[0].mxu0
        %5316 = vmatprep.mubr.bf16.mxu0 %v4974
        %5317 = vmatmul.mubr.bf16.gmra.mrb[0].mxu0 %v4973
        %v5318 = vpop.f32.mrb[0].mxu0
        %v5319 = vadd.f32 %v5023, %v5318
        %v5320 = vpop.f32.mrb[0].mxu0
        %v5321 = vpop.f32.mrb[0].mxu0
        %v5322 = vadd.f32 %v5023, %v5321
        %v5323 = vpop.f32.mrb[0].mxu0
        %5324 = vmatprep.mubr.bf16.mxu0 %v4977
        %5325 = vmatmul.mubr.bf16.gmra.mrb[0].mxu0 %v4976
        %v5326 = vpop.f32.mrb[0].mxu0
        %v5327 = vadd.f32 %v5023, %v5326
        %v5328 = vpop.f32.mrb[0].mxu0
        %v5329 = vpop.f32.mrb[0].mxu0
        %v5330 = vadd.f32 %v5023, %v5329
        %v5331 = vpop.f32.mrb[0].mxu0
        %5332 = vmatprep.mubr.bf16.mxu0 %v4980
        %5333 = vmatmul.mubr.bf16.gmra.mrb[0].mxu0 %v4979
        %v5334 = vpop.f32.mrb[0].mxu0
        %v5335 = vadd.f32 %v5023, %v5334
        %v5336 = vpop.f32.mrb[0].mxu0
        %v5337 = vpop.f32.mrb[0].mxu0
        %v5338 = vadd.f32 %v5023, %v5337
        %v5339 = vpop.f32.mrb[0].mxu0
        %5340 = vdwg.mxu0
        %5341 = vmatprep.subr.bf16.mxu0 0
        %5342 = vmatpush1.bf16.msra.mxu0 %v5112
        %5343 = vmatprep.subr.bf16.mxu0 0
        %5344 = vmatpush1.bf16.msra.mxu0 %v5113
        %5345 = vmatprep.subr.bf16.mxu0 0
        %5346 = vmatpush1.bf16.msra.mxu0 0
        %5347 = vmatprep.subr.bf16.mxu0 0
        %5348 = vmatpush1.bf16.msra.mxu0 0
        %5349 = vmatprep.subr.bf16.mxu0 0
        %5350 = vmatpush1.bf16.msra.mxu0 0
        %5351 = vmatprep.subr.bf16.mxu0 0
        %5352 = vmatpush1.bf16.msra.mxu0 0
        %5353 = vmatprep.subr.bf16.mxu0 0
        %5354 = vmatpush1.bf16.msra.mxu0 0
        %5355 = vmatprep.subr.bf16.mxu0 0
        %5356 = vmatpush1.bf16.msra.mxu0 0
        %5357 = vmatprep.subr.bf16.mxu0 0
        %5358 = vmatpush1.bf16.msra.mxu0 0
        %5359 = vmatprep.subr.bf16.mxu0 0
        %5360 = vmatpush1.bf16.msra.mxu0 0
        %5361 = vmatprep.subr.bf16.mxu0 0
        %5362 = vmatpush1.bf16.msra.mxu0 0
        %5363 = vmatprep.subr.bf16.mxu0 0
        %5364 = vmatpush1.bf16.msra.mxu0 0
        %5365 = vmatprep.subr.bf16.mxu0 0
        %5366 = vmatpush1.bf16.msra.mxu0 0
        %5367 = vmatprep.subr.bf16.mxu0 0
        %5368 = vmatpush1.bf16.msra.mxu0 0
        %5369 = vmatprep.subr.bf16.mxu0 0
        %5370 = vmatpush1.bf16.msra.mxu0 0
        %5371 = vmatprep.subr.bf16.mxu0 0
        %5372 = vmatpush1.bf16.msra.mxu0 0
        %5373 = vmatprep.mubr.bf16.mxu0 0
        %5374 = vmatmul.mubr.bf16.gmra.mrb[0].mxu0 %v5133
        %v5375 = vpop.f32.mrb[0].mxu0
        %v5376 = vadd.f32 %v5215, %v5375
        %v5377 = vpop.f32.mrb[0].mxu0
        %v5378 = vpop.f32.mrb[0].mxu0
        %v5379 = vadd.f32 %v5218, %v5378
        %v5380 = vpop.f32.mrb[0].mxu0
        %5381 = vmatprep.mubr.bf16.mxu0 0
        %5382 = vmatmul.mubr.bf16.gmra.mrb[0].mxu0 %v5136
        %v5383 = vpop.f32.mrb[0].mxu0
        %v5384 = vadd.f32 %v5223, %v5383
        %v5385 = vpop.f32.mrb[0].mxu0
        %v5386 = vpop.f32.mrb[0].mxu0
        %v5387 = vadd.f32 %v5226, %v5386
        %v5388 = vpop.f32.mrb[0].mxu0
        %5389 = vmatprep.mubr.bf16.mxu0 0
        %5390 = vmatmul.mubr.bf16.gmra.mrb[0].mxu0 %v5139
        %v5391 = vpop.f32.mrb[0].mxu0
        %v5392 = vadd.f32 %v5231, %v5391
        %v5393 = vpop.f32.mrb[0].mxu0
        %v5394 = vpop.f32.mrb[0].mxu0
        %v5395 = vadd.f32 %v5234, %v5394
        %v5396 = vpop.f32.mrb[0].mxu0
        %5397 = vmatprep.mubr.bf16.mxu0 0
        %5398 = vmatmul.mubr.bf16.gmra.mrb[0].mxu0 %v5142
        %v5399 = vpop.f32.mrb[0].mxu0
        %v5400 = vadd.f32 %v5239, %v5399
        %v5401 = vpop.f32.mrb[0].mxu0
        %v5402 = vpop.f32.mrb[0].mxu0
        %v5403 = vadd.f32 %v5242, %v5402
        %v5404 = vpop.f32.mrb[0].mxu0
        %5405 = vmatprep.mubr.bf16.mxu0 0
        %5406 = vmatmul.mubr.bf16.gmra.mrb[0].mxu0 %v5145
        %v5407 = vpop.f32.mrb[0].mxu0
        %v5408 = vadd.f32 %v5247, %v5407
        %v5409 = vpop.f32.mrb[0].mxu0
        %v5410 = vpop.f32.mrb[0].mxu0
        %v5411 = vadd.f32 %v5250, %v5410
        %v5412 = vpop.f32.mrb[0].mxu0
        %5413 = vmatprep.mubr.bf16.mxu0 0
        %5414 = vmatmul.mubr.bf16.gmra.mrb[0].mxu0 %v5148
        %v5415 = vpop.f32.mrb[0].mxu0
        %v5416 = vadd.f32 %v5255, %v5415
        %v5417 = vpop.f32.mrb[0].mxu0
        %v5418 = vpop.f32.mrb[0].mxu0
        %v5419 = vadd.f32 %v5258, %v5418
        %v5420 = vpop.f32.mrb[0].mxu0
        %5421 = vmatprep.mubr.bf16.mxu0 0
        %5422 = vmatmul.mubr.bf16.gmra.mrb[0].mxu0 %v5151
        %v5423 = vpop.f32.mrb[0].mxu0
        %v5424 = vadd.f32 %v5263, %v5423
        %v5425 = vpop.f32.mrb[0].mxu0
        %v5426 = vpop.f32.mrb[0].mxu0
        %v5427 = vadd.f32 %v5266, %v5426
        %v5428 = vpop.f32.mrb[0].mxu0
        %5429 = vmatprep.mubr.bf16.mxu0 0
        %5430 = vmatmul.mubr.bf16.gmra.mrb[0].mxu0 %v5154
        %v5431 = vpop.f32.mrb[0].mxu0
        %v5432 = vadd.f32 %v5271, %v5431
        %v5433 = vpop.f32.mrb[0].mxu0
        %v5434 = vpop.f32.mrb[0].mxu0
        %v5435 = vadd.f32 %v5274, %v5434
        %v5436 = vpop.f32.mrb[0].mxu0
        %5437 = vmatprep.mubr.bf16.mxu0 0
        %5438 = vmatmul.mubr.bf16.gmra.mrb[0].mxu0 %v5157
        %v5439 = vpop.f32.mrb[0].mxu0
        %v5440 = vadd.f32 %v5279, %v5439
        %v5441 = vpop.f32.mrb[0].mxu0
        %v5442 = vpop.f32.mrb[0].mxu0
        %v5443 = vadd.f32 %v5282, %v5442
        %v5444 = vpop.f32.mrb[0].mxu0
        %5445 = vmatprep.mubr.bf16.mxu0 0
        %5446 = vmatmul.mubr.bf16.gmra.mrb[0].mxu0 %v5160
        %v5447 = vpop.f32.mrb[0].mxu0
        %v5448 = vadd.f32 %v5287, %v5447
        %v5449 = vpop.f32.mrb[0].mxu0
        %v5450 = vpop.f32.mrb[0].mxu0
        %v5451 = vadd.f32 %v5290, %v5450
        %v5452 = vpop.f32.mrb[0].mxu0
        %5453 = vmatprep.mubr.bf16.mxu0 0
        %5454 = vmatmul.mubr.bf16.gmra.mrb[0].mxu0 %v5163
        %v5455 = vpop.f32.mrb[0].mxu0
        %v5456 = vadd.f32 %v5295, %v5455
        %v5457 = vpop.f32.mrb[0].mxu0
        %v5458 = vpop.f32.mrb[0].mxu0
        %v5459 = vadd.f32 %v5298, %v5458
        %v5460 = vpop.f32.mrb[0].mxu0
        %5461 = vmatprep.mubr.bf16.mxu0 0
        %5462 = vmatmul.mubr.bf16.gmra.mrb[0].mxu0 %v5166
        %v5463 = vpop.f32.mrb[0].mxu0
        %v5464 = vadd.f32 %v5303, %v5463
        %v5465 = vpop.f32.mrb[0].mxu0
        %v5466 = vpop.f32.mrb[0].mxu0
        %v5467 = vadd.f32 %v5306, %v5466
        %v5468 = vpop.f32.mrb[0].mxu0
        %5469 = vmatprep.mubr.bf16.mxu0 0
        %5470 = vmatmul.mubr.bf16.gmra.mrb[0].mxu0 %v5169
        %v5471 = vpop.f32.mrb[0].mxu0
        %v5472 = vadd.f32 %v5311, %v5471
        %v5473 = vpop.f32.mrb[0].mxu0
        %v5474 = vpop.f32.mrb[0].mxu0
        %v5475 = vadd.f32 %v5314, %v5474
        %v5476 = vpop.f32.mrb[0].mxu0
        %5477 = vmatprep.mubr.bf16.mxu0 0
        %5478 = vmatmul.mubr.bf16.gmra.mrb[0].mxu0 %v5172
        %v5479 = vpop.f32.mrb[0].mxu0
        %v5480 = vadd.f32 %v5319, %v5479
        %v5481 = vpop.f32.mrb[0].mxu0
        %v5482 = vpop.f32.mrb[0].mxu0
        %v5483 = vadd.f32 %v5322, %v5482
        %v5484 = vpop.f32.mrb[0].mxu0
        %5485 = vmatprep.mubr.bf16.mxu0 0
        %5486 = vmatmul.mubr.bf16.gmra.mrb[0].mxu0 %v5175
        %v5487 = vpop.f32.mrb[0].mxu0
        %v5488 = vadd.f32 %v5327, %v5487
        %v5489 = vpop.f32.mrb[0].mxu0
        %v5490 = vpop.f32.mrb[0].mxu0
        %v5491 = vadd.f32 %v5330, %v5490
        %v5492 = vpop.f32.mrb[0].mxu0
        %5493 = vmatprep.mubr.bf16.mxu0 0
        %5494 = vmatmul.mubr.bf16.gmra.mrb[0].mxu0 %v5178
        %v5495 = vpop.f32.mrb[0].mxu0
        %v5496 = vadd.f32 %v5335, %v5495
        %v5497 = vpop.f32.mrb[0].mxu0
        %v5498 = vpop.f32.mrb[0].mxu0
        %v5499 = vadd.f32 %v5338, %v5498
        %v5500 = vpop.f32.mrb[0].mxu0
        %5501 = vdwg.mxu0
        %v5502 = vadd.f32 %v5376, %v230
        %v5503 = vadd.f32 %v5379, %v231
        %v5504 = vadd.f32 %v5384, %v232
        %v5505 = vadd.f32 %v5387, %v233
        %v5506 = vadd.f32 %v5392, %v234
        %v5507 = vadd.f32 %v5395, %v235
        %v5508 = vadd.f32 %v5400, %v236
        %v5509 = vadd.f32 %v5403, %v237
        %v5510 = vadd.f32 %v5408, %v238
        %v5511 = vadd.f32 %v5411, %v239
        %v5512 = vadd.f32 %v5416, %v240
        %v5513 = vadd.f32 %v5419, %v241
        %v5514 = vadd.f32 %v5424, %v242
        %v5515 = vadd.f32 %v5427, %v243
        %v5516 = vadd.f32 %v5432, %v244
        %v5517 = vadd.f32 %v5435, %v245
        %v5518 = vadd.f32 %v5440, %v246
        %v5519 = vadd.f32 %v5443, %v247
        %v5520 = vadd.f32 %v5448, %v248
        %v5521 = vadd.f32 %v5451, %v249
        %v5522 = vadd.f32 %v5456, %v250
        %v5523 = vadd.f32 %v5459, %v251
        %v5524 = vadd.f32 %v5464, %v252
        %v5525 = vadd.f32 %v5467, %v253
        %v5526 = vadd.f32 %v5472, %v254
        %v5527 = vadd.f32 %v5475, %v255
        %v5528 = vadd.f32 %v5480, %v256
        %v5529 = vadd.f32 %v5483, %v257
        %v5530 = vadd.f32 %v5488, %v258
        %v5531 = vadd.f32 %v5491, %v259
        %v5532 = vadd.f32 %v5496, %v260
        %v5533 = vadd.f32 %v5499, %v261
        %5534 = vst.msk [vmem:[%s163] sm:$0xff] %vm263, %v5502
        %5535 = vst.msk [vmem:[%s163 + $0x8] sm:$0xff] %vm263, %v5503
        %5536 = vst.msk [vmem:[%s163 + $0x10] sm:$0xff] %vm263, %v5504
        %5537 = vst.msk [vmem:[%s163 + $0x18] sm:$0xff] %vm263, %v5505
        %5538 = vst.msk [vmem:[%s163 + $0x20] sm:$0xff] %vm263, %v5506
        %5539 = vst.msk [vmem:[%s163 + $0x28] sm:$0xff] %vm263, %v5507
        %5540 = vst.msk [vmem:[%s163 + $0x30] sm:$0xff] %vm263, %v5508
        %5541 = vst.msk [vmem:[%s163 + $0x38] sm:$0xff] %vm263, %v5509
        %5542 = vst.msk [vmem:[%s163 + $0x40] sm:$0xff] %vm263, %v5510
        %5543 = vst.msk [vmem:[%s163 + $0x48] sm:$0xff] %vm263, %v5511
        %5544 = vst.msk [vmem:[%s163 + $0x50] sm:$0xff] %vm263, %v5512
        %5545 = vst.msk [vmem:[%s163 + $0x58] sm:$0xff] %vm263, %v5513
        %5546 = vst.msk [vmem:[%s163 + $0x60] sm:$0xff] %vm263, %v5514
        %5547 = vst.msk [vmem:[%s163 + $0x68] sm:$0xff] %vm263, %v5515
        %5548 = vst.msk [vmem:[%s163 + $0x70] sm:$0xff] %vm263, %v5516
        %5549 = vst.msk [vmem:[%s163 + $0x78] sm:$0xff] %vm263, %v5517
        %5550 = vst.msk [vmem:[%s163 + $0x80] sm:$0xff] %vm263, %v5518
        %5551 = vst.msk [vmem:[%s163 + $0x88] sm:$0xff] %vm263, %v5519
        %5552 = vst.msk [vmem:[%s163 + $0x90] sm:$0xff] %vm263, %v5520
        %5553 = vst.msk [vmem:[%s163 + $0x98] sm:$0xff] %vm263, %v5521
        %5554 = vst.msk [vmem:[%s163 + $0xa0] sm:$0xff] %vm263, %v5522
        %5555 = vst.msk [vmem:[%s163 + $0xa8] sm:$0xff] %vm263, %v5523
        %5556 = vst.msk [vmem:[%s163 + $0xb0] sm:$0xff] %vm263, %v5524
        %5557 = vst.msk [vmem:[%s163 + $0xb8] sm:$0xff] %vm263, %v5525
        %5558 = vst.msk [vmem:[%s163 + $0xc0] sm:$0xff] %vm263, %v5526
        %5559 = vst.msk [vmem:[%s163 + $0xc8] sm:$0xff] %vm263, %v5527
        %5560 = vst.msk [vmem:[%s163 + $0xd0] sm:$0xff] %vm263, %v5528
        %5561 = vst.msk [vmem:[%s163 + $0xd8] sm:$0xff] %vm263, %v5529
        %5562 = vst.msk [vmem:[%s163 + $0xe0] sm:$0xff] %vm263, %v5530
        %5563 = vst.msk [vmem:[%s163 + $0xe8] sm:$0xff] %vm263, %v5531
        %5564 = vst.msk [vmem:[%s163 + $0xf0] sm:$0xff] %vm263, %v5532
        %5565 = vst.msk [vmem:[%s163 + $0xf8] sm:$0xff] %vm263, %v5533
        %s5566 = sand.u32 %s93, 1
        %s5567 = scalar_lea.sflag [#allocation5], %s5566
        %s5568 = sand.u32 %s93, 1
        %s5569 = smul.addr %s5568, 256
        %s5570 = scalar_lea.vmem [#allocation4], %s5569
        // Predicated region
        $region37: #{snow_mask_block_forward.1} parent=31 // pred_check
          %p5571 = pneg %p103
        $region38: #{snow_mask_block_forward.1} parent=31 // pred_check_branch
          %5573 = sbr.rel (%p5571) target = $region40
        $region39: #{snow_mask_block_forward.1} parent=31 // pred_region
          %s5575 = ssub.s32 4096, 4096
          %5576 = vsyncadd %s5567, %s5575
          %s5577 = smul.addr %s17, 32
          %s5578 = smul.addr %s5577, 128
          %s5579 = scalar_lea.hbm %s3, %s5578
          %s5580 = sshll.u32 %s5570, 4
          %s5581 = int_to_ptr.vmem [resolvable:$true] %s5580
          %5586 = dma.vmem_to_hbm [thread:$0]  %s5581, 4096, %s5579, %s5567, 128, 128, 8
        $region40: #{snow_mask_block_forward.1} parent=31 // pred_fallthru
          _
      $region32: #{snow_mask_block_forward.1} parent=5 // pred_fallthru
        _
      %p5587 = scmp.le.s32.totalorder 2, %s12
      // Predicated region
      $region41: #{snow_mask_block_forward.1} parent=5 // pred_check
        %p5588 = pneg %p5587
      $region42: #{snow_mask_block_forward.1} parent=5 // pred_check_branch
        %5590 = sbr.rel (%p5588) target = $region44
      $region43: #{snow_mask_block_forward.1} parent=5 // pred_region
        %s5591 = ssub.s32 %s12, 2
        // Predicated region
        $region45: #{snow_mask_block_forward.1} parent=43 // pred_check
          %p5592 = pneg %p109
        $region46: #{snow_mask_block_forward.1} parent=43 // pred_check_branch
          %5594 = sbr.rel (%p5592) target = $region48
        $region47: #{snow_mask_block_forward.1} parent=43 // pred_region
          %s5595 = sand.u32 %s94, 1
          %s5596 = scalar_lea.sflag [#allocation5], %s5595
          %s5597 = sand.u32 %s94, 1
          %s5598 = smul.addr %s5597, 256
          %s5599 = scalar_lea.vmem [#allocation4], %s5598
          %5600 = dma.done %s5596, 4096
        $region48: #{snow_mask_block_forward.1} parent=43 // pred_fallthru
          _
      $region44: #{snow_mask_block_forward.1} parent=5 // pred_fallthru
        _
    $region6: #{snow_mask_block_forward.1} parent=1 // loop_footer
      %s16 = sadd.s32 1, %s12
    $region7: #{snow_mask_block_forward.1} parent=1 // loop_footer_branch
      %11 = sbr.rel target = $region3
    $region8: #{snow_mask_block_forward.1} parent=1 // loop_exit
      _
    %5601 = vsyncpa [#allocation5], 1
    %s5602 = scalar_lea.sflag [#allocation5], 1
    %5603 = vsyncpa %s5602, 1

</llo_original>
